<compile_context>
chip_gen: v6e
topology: v6e:2x2x1
jax: 0.10.0
libtpu: 0.0.40
codegen_flags: <defaults>
</compile_context>

<pallas_src>
import functools

import jax
import jax.numpy as jnp
from jax import lax
from jax.experimental import pallas as pl
from jax.experimental.pallas import tpu as pltpu


def _bottleneck_kernel(x_ref, w1_ref, b1_ref, w2_ref, b2_ref, o_ref,
                       x1p_ref, y1p_ref, acc1_ref, acc2_ref,
                       *, H, W, th, C1, Cm, C2, add):
    """Fused Bottleneck for one (batch, H-tile) grid step.

    x_ref  : (H+4, W, C1) bf16  NHWC input, zero-padded by 2 rows top/bottom
    w1_ref : (3, 3*C1, Cm) bf16 cv1 weights, BN-folded, kw packed along K
    b1_ref : (1, Cm) f32        cv1 folded BN bias
    w2_ref : (3, 3*Cm, C2) bf16 cv2 weights, BN-folded, kw packed along K
    b2_ref : (1, C2) f32        cv2 folded BN bias
    o_ref  : (th, W, C2) bf16   output tile (rows r0 .. r0+th-1)
    x1p_ref: (th+4, W, 3*C1) bf16  kw-packed cv1 operand scratch
    y1p_ref: (th+2, W, 3*Cm) bf16  kw-packed cv2 operand scratch
    acc1/acc2: f32 VMEM accumulators
    """
    h = pl.program_id(1)
    r0 = pl.multiple_of(h * th, th)          # first output row of this tile

    # ---- build kw-packed cv1 operand (input rows r0-2 .. r0+th+1) -----------
    # x_ref is H-padded by 2, so those rows are padded rows r0 .. r0+th+3.
    xw = x_ref[pl.ds(r0, th + 4)]                                   # (th+4, W, C1)
    col = lax.broadcasted_iota(jnp.int32, (th + 4, W, C1), 1)
    # channel block kw holds in[row, j + kw - 1]  (zero outside the image)
    x1p_ref[:, :, 0:C1] = jnp.where(col >= 1, jnp.roll(xw, 1, axis=1), 0)
    x1p_ref[:, :, C1:2 * C1] = xw
    x1p_ref[:, :, 2 * C1:3 * C1] = jnp.where(col <= W - 2, jnp.roll(xw, -1, axis=1), 0)

    # ---- cv1: 3 dots (one per kh), K = 3*C1, f32 accumulation in VMEM -------
    acc1_ref[...] = jnp.broadcast_to(b1_ref[...], acc1_ref.shape)   # bias init
    for kh in range(3):
        tap = x1p_ref[kh:kh + th + 2].reshape((th + 2) * W, 3 * C1)
        acc1_ref[...] += jnp.dot(tap, w1_ref[kh],
                                 preferred_element_type=jnp.float32)

    y1 = acc1_ref[...]
    y1 = (y1 * jax.nn.sigmoid(y1)).reshape(th + 2, W, Cm)           # SiLU
    # rows of y1 are image rows r0-1 .. r0+th; zero the out-of-image halo rows
    row = lax.broadcasted_iota(jnp.int32, (th + 2, W, Cm), 0) + (r0 - 1)
    y1 = jnp.where((row >= 0) & (row < H), y1, 0.0).astype(jnp.bfloat16)

    # ---- build kw-packed cv2 operand ----------------------------------------
    colm = lax.broadcasted_iota(jnp.int32, (th + 2, W, Cm), 1)
    y1p_ref[:, :, 0:Cm] = jnp.where(colm >= 1, jnp.roll(y1, 1, axis=1), 0)
    y1p_ref[:, :, Cm:2 * Cm] = y1
    y1p_ref[:, :, 2 * Cm:3 * Cm] = jnp.where(colm <= W - 2, jnp.roll(y1, -1, axis=1), 0)

    # ---- cv2: 3 dots (one per kh), K = 3*Cm ----------------------------------
    acc2_ref[...] = jnp.broadcast_to(b2_ref[...], acc2_ref.shape)   # bias init
    for kh in range(3):
        tap = y1p_ref[kh:kh + th].reshape(th * W, 3 * Cm)
        acc2_ref[...] += jnp.dot(tap, w2_ref[kh],
                                 preferred_element_type=jnp.float32)

    y2 = acc2_ref[...]
    y2 = y2 * jax.nn.sigmoid(y2)                                    # SiLU

    # ---- residual (shortcut and c1 == c2) ------------------------------------
    if add:
        xres = x_ref[pl.ds(r0 + 2, th)].reshape(th * W, C1).astype(jnp.float32)
        y2 = y2 + xres

    o_ref[...] = y2.reshape(th, W, C2).astype(o_ref.dtype)


def bottleneck_forward(x_nhwc, params, *, shortcut=True, th=4):
    """x_nhwc: (B, H, W, C1) bf16/f32 NHWC -> (B, H, W, C2) bf16 NHWC."""
    B, H, W, C1 = x_nhwc.shape
    w1, b1 = params["cv1"]["w"], params["cv1"]["b"]
    w2, b2 = params["cv2"]["w"], params["cv2"]["b"]
    Cm, C2 = w1.shape[-1], w2.shape[-1]
    add = bool(shortcut) and (C1 == C2)
    assert H % th == 0, "H must be divisible by the H-tile"
    n_th = H // th
    Hp = H + 4

    # Only a 2-row H pad (leading spatial dim) remains outside the kernel; the
    # W axis (sublanes) and channel axis (lanes) are untouched.
    xh = jnp.pad(x_nhwc.astype(jnp.bfloat16), ((0, 0), (2, 2), (0, 0), (0, 0)))

    kernel = functools.partial(_bottleneck_kernel,
                               H=H, W=W, th=th, C1=C1, Cm=Cm, C2=C2, add=add)

    return pl.pallas_call(
        kernel,
        out_shape=jax.ShapeDtypeStruct((B, H, W, C2), jnp.bfloat16),
        grid=(B, n_th),
        in_specs=[
            # Full padded plane per batch; index constant across the H axis so
            # it is DMA'd once per batch element.
            pl.BlockSpec((None, Hp, W, C1), lambda b, h: (b, 0, 0, 0)),
            pl.BlockSpec((3, 3 * C1, Cm), lambda b, h: (0, 0, 0)),   # w1 packed
            pl.BlockSpec((1, Cm), lambda b, h: (0, 0)),              # b1
            pl.BlockSpec((3, 3 * Cm, C2), lambda b, h: (0, 0, 0)),   # w2 packed
            pl.BlockSpec((1, C2), lambda b, h: (0, 0)),              # b2
        ],
        out_specs=pl.BlockSpec((None, th, W, C2), lambda b, h: (b, h, 0, 0)),
        scratch_shapes=[
            pltpu.VMEM((th + 4, W, 3 * C1), jnp.bfloat16),   # packed cv1 operand
            pltpu.VMEM((th + 2, W, 3 * Cm), jnp.bfloat16),   # packed cv2 operand
            pltpu.VMEM(((th + 2) * W, Cm), jnp.float32),     # cv1 accumulator
            pltpu.VMEM((th * W, C2), jnp.float32),           # cv2 accumulator
        ],
        compiler_params=pltpu.CompilerParams(
            dimension_semantics=("parallel", "parallel")),
    )(xh, w1, b1, w2, b2)


# ----------------------------- parameter init -------------------------------

def _conv_bn_silu_params(key, cin, cout, k=3, eps=1e-5):
    """Conv2d(no bias) + eval-mode BN: scale folded into W, kw packed along K."""
    kw_, kg, kb, km, kv = jax.random.split(key, 5)
    w = 0.1 * jax.random.normal(kw_, (k, k, cin, cout), jnp.float32)   # HWIO
    gamma = 1.0 + 0.1 * jax.random.normal(kg, (cout,), jnp.float32)
    beta = 0.05 * jax.random.normal(kb, (cout,), jnp.float32)
    mean = 0.05 * jax.random.normal(km, (cout,), jnp.float32)
    var = 1.0 + 0.1 * jax.random.uniform(kv, (cout,), jnp.float32)
    scale = gamma / jnp.sqrt(var + eps)
    w_folded = w * scale[None, None, None, :]
    # pack kw along the contraction axis: (kh, kw*cin + ci, cout)
    w_packed = w_folded.reshape(k, k * cin, cout).astype(jnp.bfloat16)
    bias = (beta - mean * scale).reshape(1, cout).astype(jnp.float32)
    return {"w": w_packed, "b": bias}


def init_params(key, c1, c2, *, k=3, e=0.5):
    c_ = int(c2 * e)
    k1, k2 = jax.random.split(key)
    return {"cv1": _conv_bn_silu_params(k1, c1, c_, k),
            "cv2": _conv_bn_silu_params(k2, c_, c2, k)}


# ----------------------------- pure-JAX reference ---------------------------

def _reference(x_nhwc, params, *, shortcut=True, k=3):
    def conv_bn_silu(x, w_packed, b):
        cout = w_packed.shape[-1]
        cin = w_packed.shape[1] // k
        w = w_packed.reshape(k, k, cin, cout).astype(jnp.float32)
        y = lax.conv_general_dilated(
            x, w, window_strides=(1, 1), padding="SAME",
            dimension_numbers=("NHWC", "HWIO", "NHWC"))
        y = y + b.reshape(1, 1, 1, cout)
        return y * jax.nn.sigmoid(y)

    xb = x_nhwc.astype(jnp.bfloat16).astype(jnp.float32)
    y1 = conv_bn_silu(xb, params["cv1"]["w"], params["cv1"]["b"])
    y1 = y1.astype(jnp.bfloat16).astype(jnp.float32)       # kernel keeps y1 in bf16
    y2 = conv_bn_silu(y1, params["cv2"]["w"], params["cv2"]["b"])
    if shortcut and x_nhwc.shape[-1] == y2.shape[-1]:
        y2 = y2 + xb
    return y2


# ----------------------------- driver ----------------------------------------

if __name__ == "__main__":
    key = jax.random.PRNGKey(0)
    kx, kp = jax.random.split(key)

    # Lane-friendly small shapes: B=2, 16x16 spatial, c1=c2=128 (residual active),
    # e=0.5 -> c_=64.  Grid is (B=2) x (H/th=4) = 8 steps.
    B, C1, C2, H, W = 2, 128, 128, 16, 16
    x_nchw = jax.random.normal(kx, (B, C1, H, W), jnp.float32)     # PyTorch layout
    params = init_params(kp, C1, C2, k=3, e=0.5)

    # One-time layout conversion at the model boundary (not per-layer work).
    x_nhwc = jnp.transpose(x_nchw, (0, 2, 3, 1)).astype(jnp.bfloat16)

    fwd = jax.jit(functools.partial(bottleneck_forward, shortcut=True, th=4))
    out = fwd(x_nhwc, params)
    jax.block_until_ready(out)

    assert out.shape == (B, H, W, C2)
    assert bool(jnp.all(jnp.isfinite(out)))

    ref = _reference(x_nhwc, params, shortcut=True)
    err = float(jnp.max(jnp.abs(out.astype(jnp.float32) - ref)))
    tol = 1e-2 * (1.0 + float(jnp.max(jnp.abs(ref))))
    assert err < tol, f"max abs err {err} exceeds tol {tol}"

    print("KERNEL_OK")
</pallas_src>

<mosaic_0001>
module attributes {stable_mosaic.version = 11 : i64} {
  func.func @_bottleneck_kernel(%arg0: i32, %arg1: i32, %arg2: memref<1x20x16x128xbf16, #tpu.memory_space<vmem>>, %arg3: memref<3x384x64xbf16, #tpu.memory_space<vmem>>, %arg4: memref<1x64xf32, #tpu.memory_space<vmem>>, %arg5: memref<3x192x128xbf16, #tpu.memory_space<vmem>>, %arg6: memref<1x128xf32, #tpu.memory_space<vmem>>, %arg7: memref<1x4x16x128xbf16, #tpu.memory_space<vmem>>, %arg8: memref<8x16x384xbf16, #tpu.memory_space<vmem>>, %arg9: memref<6x16x192xbf16, #tpu.memory_space<vmem>>, %arg10: memref<96x64xf32, #tpu.memory_space<vmem>>, %arg11: memref<64x128xf32, #tpu.memory_space<vmem>>) attributes {dimension_semantics = [#tpu.dimension_semantics<parallel>, #tpu.dimension_semantics<parallel>], iteration_bounds = array<i64: 2, 4>, scalar_prefetch = 0 : i64, scratch_operands = 4 : i64, tpu.core_type = #tpu.core_type<tc>, window_params = [{transform_indices = @transform_0, window_bounds = array<i64: 1, 20, 16, 128>}, {pipeline_mode = #tpu.pipeline_mode<synchronous>, transform_indices = @transform_1, window_bounds = array<i64: 3, 384, 64>}, {pipeline_mode = #tpu.pipeline_mode<synchronous>, transform_indices = @transform_2, window_bounds = array<i64: 1, 64>}, {pipeline_mode = #tpu.pipeline_mode<synchronous>, transform_indices = @transform_3, window_bounds = array<i64: 3, 192, 128>}, {pipeline_mode = #tpu.pipeline_mode<synchronous>, transform_indices = @transform_4, window_bounds = array<i64: 1, 128>}, {transform_indices = @transform_5, window_bounds = array<i64: 1, 4, 16, 128>}]} {
    %c4_i32 = arith.constant 4 : i32
    %0 = arith.muli %arg1, %c4_i32 : i32
    %1 = tpu.assume_multiple %0, 4 : i32
    %c0 = arith.constant 0 : index
    %2 = arith.index_cast %1 : i32 to index
    %c0_0 = arith.constant 0 : index
    %c0_1 = arith.constant 0 : index
    %3 = vector.load %arg2[%c0, %2, %c0_0, %c0_1] : memref<1x20x16x128xbf16, #tpu.memory_space<vmem>>, vector<1x8x16x128xbf16>
    %4 = vector.shape_cast %3 : vector<1x8x16x128xbf16> to vector<8x16x128xbf16>
    %5 = tpu.iota {dimensions = array<i32: 1>} : vector<8x16x128xi32>
    %c1_i32 = arith.constant 1 : i32
    %6 = vector.broadcast %c1_i32 : i32 to vector<8x16x128xi32>
    %7 = arith.cmpi sge, %5, %6 : vector<8x16x128xi32>
    %8 = vector.extract_strided_slice %4 {offsets = [0, 15, 0], sizes = [8, 1, 128], strides = [1, 1, 1]} : vector<8x16x128xbf16> to vector<8x1x128xbf16>
    %9 = vector.extract_strided_slice %4 {offsets = [0, 0, 0], sizes = [8, 15, 128], strides = [1, 1, 1]} : vector<8x16x128xbf16> to vector<8x15x128xbf16>
    %10 = tpu.concatenate %8, %9 in 1 : vector<8x1x128xbf16>, vector<8x15x128xbf16> -> vector<8x16x128xbf16>
    %c0_i32 = arith.constant 0 : i32
    %11 = arith.sitofp %c0_i32 : i32 to bf16
    %12 = vector.broadcast %11 : bf16 to vector<8x16x128xbf16>
    %13 = arith.select %7, %10, %12 : vector<8x16x128xi1>, vector<8x16x128xbf16>
    %c0_2 = arith.constant 0 : index
    %c0_3 = arith.constant 0 : index
    %c0_4 = arith.constant 0 : index
    %14 = vector.load %arg8[%c0_2, %c0_3, %c0_4] : memref<8x16x384xbf16, #tpu.memory_space<vmem>>, vector<8x16x128xbf16>
    tpu.vector_store %arg8[%c0_2, %c0_3, %c0_4], %13 {strides = array<i32>} : memref<8x16x384xbf16, #tpu.memory_space<vmem>>, vector<8x16x128xbf16>,
    %c0_5 = arith.constant 0 : index
    %c0_6 = arith.constant 0 : index
    %c128 = arith.constant 128 : index
    %15 = vector.load %arg8[%c0_5, %c0_6, %c128] : memref<8x16x384xbf16, #tpu.memory_space<vmem>>, vector<8x16x128xbf16>
    tpu.vector_store %arg8[%c0_5, %c0_6, %c128], %4 {strides = array<i32>} : memref<8x16x384xbf16, #tpu.memory_space<vmem>>, vector<8x16x128xbf16>,
    %c14_i32 = arith.constant 14 : i32
    %16 = vector.broadcast %c14_i32 : i32 to vector<8x16x128xi32>
    %17 = arith.cmpi sle, %5, %16 : vector<8x16x128xi32>
    %18 = vector.extract_strided_slice %4 {offsets = [0, 1, 0], sizes = [8, 15, 128], strides = [1, 1, 1]} : vector<8x16x128xbf16> to vector<8x15x128xbf16>
    %19 = vector.extract_strided_slice %4 {offsets = [0, 0, 0], sizes = [8, 1, 128], strides = [1, 1, 1]} : vector<8x16x128xbf16> to vector<8x1x128xbf16>
    %20 = tpu.concatenate %18, %19 in 1 : vector<8x15x128xbf16>, vector<8x1x128xbf16> -> vector<8x16x128xbf16>
    %c0_i32_7 = arith.constant 0 : i32
    %21 = arith.sitofp %c0_i32_7 : i32 to bf16
    %22 = vector.broadcast %21 : bf16 to vector<8x16x128xbf16>
    %23 = arith.select %17, %20, %22 : vector<8x16x128xi1>, vector<8x16x128xbf16>
    %c0_8 = arith.constant 0 : index
    %c0_9 = arith.constant 0 : index
    %c256 = arith.constant 256 : index
    %24 = vector.load %arg8[%c0_8, %c0_9, %c256] : memref<8x16x384xbf16, #tpu.memory_space<vmem>>, vector<8x16x128xbf16>
    tpu.vector_store %arg8[%c0_8, %c0_9, %c256], %23 {strides = array<i32>} : memref<8x16x384xbf16, #tpu.memory_space<vmem>>, vector<8x16x128xbf16>,
    %c0_10 = arith.constant 0 : index
    %c0_11 = arith.constant 0 : index
    %25 = vector.load %arg4[%c0_10, %c0_11] : memref<1x64xf32, #tpu.memory_space<vmem>>, vector<1x64xf32>
    %26 = vector.shape_cast %25 : vector<1x64xf32> to vector<1x64xf32>
    %27 = vector.broadcast %26 : vector<1x64xf32> to vector<96x64xf32>
    %c0_12 = arith.constant 0 : index
    %c0_13 = arith.constant 0 : index
    %28 = vector.load %arg10[%c0_12, %c0_13] : memref<96x64xf32, #tpu.memory_space<vmem>>, vector<96x64xf32>
    tpu.vector_store %arg10[%c0_12, %c0_13], %27 {strides = array<i32>} : memref<96x64xf32, #tpu.memory_space<vmem>>, vector<96x64xf32>,
    %c0_14 = arith.constant 0 : index
    %c0_15 = arith.constant 0 : index
    %c0_16 = arith.constant 0 : index
    %29 = vector.load %arg8[%c0_14, %c0_15, %c0_16] : memref<8x16x384xbf16, #tpu.memory_space<vmem>>, vector<6x16x384xbf16>
    %30 = vector.shape_cast %29 : vector<6x16x384xbf16> to vector<96x384xbf16>
    %c0_17 = arith.constant 0 : index
    %c0_18 = arith.constant 0 : index
    %31 = vector.load %arg10[%c0_17, %c0_18] : memref<96x64xf32, #tpu.memory_space<vmem>>, vector<96x64xf32>
    %c0_19 = arith.constant 0 : index
    %c0_20 = arith.constant 0 : index
    %c0_21 = arith.constant 0 : index
    %32 = vector.load %arg3[%c0_19, %c0_20, %c0_21] : memref<3x384x64xbf16, #tpu.memory_space<vmem>>, vector<1x384x64xbf16>
    %33 = vector.shape_cast %32 : vector<1x384x64xbf16> to vector<384x64xbf16>
    %cst = arith.constant dense<0.000000e+00> : vector<96x64xf32>
    %34 = tpu.matmul %30, %33, %cst {dimension_numbers = #tpu.dot_dimension_numbers<[1], [0], [0], [1], [0, 0, 1, 1], [], []>} : vector<96x384xbf16>, vector<384x64xbf16>, vector<96x64xf32> -> vector<96x64xf32>
    %35 = arith.addf %31, %34 : vector<96x64xf32>
    %c0_22 = arith.constant 0 : index
    %c0_23 = arith.constant 0 : index
    %36 = vector.load %arg10[%c0_22, %c0_23] : memref<96x64xf32, #tpu.memory_space<vmem>>, vector<96x64xf32>
    tpu.vector_store %arg10[%c0_22, %c0_23], %35 {strides = array<i32>} : memref<96x64xf32, #tpu.memory_space<vmem>>, vector<96x64xf32>,
    %c1 = arith.constant 1 : index
    %c0_24 = arith.constant 0 : index
    %c0_25 = arith.constant 0 : index
    %37 = vector.load %arg8[%c1, %c0_24, %c0_25] : memref<8x16x384xbf16, #tpu.memory_space<vmem>>, vector<6x16x384xbf16>
    %38 = vector.shape_cast %37 : vector<6x16x384xbf16> to vector<96x384xbf16>
    %c0_26 = arith.constant 0 : index
    %c0_27 = arith.constant 0 : index
    %39 = vector.load %arg10[%c0_26, %c0_27] : memref<96x64xf32, #tpu.memory_space<vmem>>, vector<96x64xf32>
    %c1_28 = arith.constant 1 : index
    %c0_29 = arith.constant 0 : index
    %c0_30 = arith.constant 0 : index
    %40 = vector.load %arg3[%c1_28, %c0_29, %c0_30] : memref<3x384x64xbf16, #tpu.memory_space<vmem>>, vector<1x384x64xbf16>
    %41 = vector.shape_cast %40 : vector<1x384x64xbf16> to vector<384x64xbf16>
    %cst_31 = arith.constant dense<0.000000e+00> : vector<96x64xf32>
    %42 = tpu.matmul %38, %41, %cst_31 {dimension_numbers = #tpu.dot_dimension_numbers<[1], [0], [0], [1], [0, 0, 1, 1], [], []>} : vector<96x384xbf16>, vector<384x64xbf16>, vector<96x64xf32> -> vector<96x64xf32>
    %43 = arith.addf %39, %42 : vector<96x64xf32>
    %c0_32 = arith.constant 0 : index
    %c0_33 = arith.constant 0 : index
    %44 = vector.load %arg10[%c0_32, %c0_33] : memref<96x64xf32, #tpu.memory_space<vmem>>, vector<96x64xf32>
    tpu.vector_store %arg10[%c0_32, %c0_33], %43 {strides = array<i32>} : memref<96x64xf32, #tpu.memory_space<vmem>>, vector<96x64xf32>,
    %c2 = arith.constant 2 : index
    %c0_34 = arith.constant 0 : index
    %c0_35 = arith.constant 0 : index
    %45 = vector.load %arg8[%c2, %c0_34, %c0_35] : memref<8x16x384xbf16, #tpu.memory_space<vmem>>, vector<6x16x384xbf16>
    %46 = vector.shape_cast %45 : vector<6x16x384xbf16> to vector<96x384xbf16>
    %c0_36 = arith.constant 0 : index
    %c0_37 = arith.constant 0 : index
    %47 = vector.load %arg10[%c0_36, %c0_37] : memref<96x64xf32, #tpu.memory_space<vmem>>, vector<96x64xf32>
    %c2_38 = arith.constant 2 : index
    %c0_39 = arith.constant 0 : index
    %c0_40 = arith.constant 0 : index
    %48 = vector.load %arg3[%c2_38, %c0_39, %c0_40] : memref<3x384x64xbf16, #tpu.memory_space<vmem>>, vector<1x384x64xbf16>
    %49 = vector.shape_cast %48 : vector<1x384x64xbf16> to vector<384x64xbf16>
    %cst_41 = arith.constant dense<0.000000e+00> : vector<96x64xf32>
    %50 = tpu.matmul %46, %49, %cst_41 {dimension_numbers = #tpu.dot_dimension_numbers<[1], [0], [0], [1], [0, 0, 1, 1], [], []>} : vector<96x384xbf16>, vector<384x64xbf16>, vector<96x64xf32> -> vector<96x64xf32>
    %51 = arith.addf %47, %50 : vector<96x64xf32>
    %c0_42 = arith.constant 0 : index
    %c0_43 = arith.constant 0 : index
    %52 = vector.load %arg10[%c0_42, %c0_43] : memref<96x64xf32, #tpu.memory_space<vmem>>, vector<96x64xf32>
    tpu.vector_store %arg10[%c0_42, %c0_43], %51 {strides = array<i32>} : memref<96x64xf32, #tpu.memory_space<vmem>>, vector<96x64xf32>,
    %c0_44 = arith.constant 0 : index
    %c0_45 = arith.constant 0 : index
    %53 = vector.load %arg10[%c0_44, %c0_45] : memref<96x64xf32, #tpu.memory_space<vmem>>, vector<96x64xf32>
    %54 = arith.negf %53 : vector<96x64xf32>
    %55 = math.exp %54 : vector<96x64xf32>
    %cst_46 = arith.constant 1.000000e+00 : f32
    %56 = vector.broadcast %cst_46 : f32 to vector<96x64xf32>
    %57 = arith.addf %56, %55 : vector<96x64xf32>
    %58 = arith.divf %56, %57 : vector<96x64xf32>
    %59 = arith.mulf %53, %58 : vector<96x64xf32>
    %60 = vector.shape_cast %59 : vector<96x64xf32> to vector<6x16x64xf32>
    %61 = tpu.iota {dimensions = array<i32: 0>} : vector<6x16x64xi32>
    %c1_i32_47 = arith.constant 1 : i32
    %62 = arith.subi %1, %c1_i32_47 : i32
    %63 = vector.broadcast %62 : i32 to vector<6x16x64xi32>
    %64 = arith.addi %61, %63 : vector<6x16x64xi32>
    %c0_i32_48 = arith.constant 0 : i32
    %65 = vector.broadcast %c0_i32_48 : i32 to vector<6x16x64xi32>
    %66 = arith.cmpi sge, %64, %65 : vector<6x16x64xi32>
    %c16_i32 = arith.constant 16 : i32
    %67 = vector.broadcast %c16_i32 : i32 to vector<6x16x64xi32>
    %68 = arith.cmpi slt, %64, %67 : vector<6x16x64xi32>
    %69 = arith.andi %66, %68 : vector<6x16x64xi1>
    %cst_49 = arith.constant 0.000000e+00 : f32
    %70 = vector.broadcast %cst_49 : f32 to vector<6x16x64xf32>
    %71 = arith.select %69, %60, %70 : vector<6x16x64xi1>, vector<6x16x64xf32>
    %72 = arith.truncf %71 : vector<6x16x64xf32> to vector<6x16x64xbf16>
    %73 = tpu.iota {dimensions = array<i32: 1>} : vector<6x16x64xi32>
    %c1_i32_50 = arith.constant 1 : i32
    %74 = vector.broadcast %c1_i32_50 : i32 to vector<6x16x64xi32>
    %75 = arith.cmpi sge, %73, %74 : vector<6x16x64xi32>
    %76 = vector.extract_strided_slice %72 {offsets = [0, 15, 0], sizes = [6, 1, 64], strides = [1, 1, 1]} : vector<6x16x64xbf16> to vector<6x1x64xbf16>
    %77 = vector.extract_strided_slice %72 {offsets = [0, 0, 0], sizes = [6, 15, 64], strides = [1, 1, 1]} : vector<6x16x64xbf16> to vector<6x15x64xbf16>
    %78 = tpu.concatenate %76, %77 in 1 : vector<6x1x64xbf16>, vector<6x15x64xbf16> -> vector<6x16x64xbf16>
    %c0_i32_51 = arith.constant 0 : i32
    %79 = arith.sitofp %c0_i32_51 : i32 to bf16
    %80 = vector.broadcast %79 : bf16 to vector<6x16x64xbf16>
    %81 = arith.select %75, %78, %80 : vector<6x16x64xi1>, vector<6x16x64xbf16>
    %c0_52 = arith.constant 0 : index
    %c0_53 = arith.constant 0 : index
    %c0_54 = arith.constant 0 : index
    %82 = vector.load %arg9[%c0_52, %c0_53, %c0_54] : memref<6x16x192xbf16, #tpu.memory_space<vmem>>, vector<6x16x64xbf16>
    tpu.vector_store %arg9[%c0_52, %c0_53, %c0_54], %81 {strides = array<i32>} : memref<6x16x192xbf16, #tpu.memory_space<vmem>>, vector<6x16x64xbf16>,
    %c0_55 = arith.constant 0 : index
    %c0_56 = arith.constant 0 : index
    %c64 = arith.constant 64 : index
    %83 = vector.load %arg9[%c0_55, %c0_56, %c64] : memref<6x16x192xbf16, #tpu.memory_space<vmem>>, vector<6x16x64xbf16>
    tpu.vector_store %arg9[%c0_55, %c0_56, %c64], %72 {strides = array<i32>} : memref<6x16x192xbf16, #tpu.memory_space<vmem>>, vector<6x16x64xbf16>,
    %c14_i32_57 = arith.constant 14 : i32
    %84 = vector.broadcast %c14_i32_57 : i32 to vector<6x16x64xi32>
    %85 = arith.cmpi sle, %73, %84 : vector<6x16x64xi32>
    %86 = vector.extract_strided_slice %72 {offsets = [0, 1, 0], sizes = [6, 15, 64], strides = [1, 1, 1]} : vector<6x16x64xbf16> to vector<6x15x64xbf16>
    %87 = vector.extract_strided_slice %72 {offsets = [0, 0, 0], sizes = [6, 1, 64], strides = [1, 1, 1]} : vector<6x16x64xbf16> to vector<6x1x64xbf16>
    %88 = tpu.concatenate %86, %87 in 1 : vector<6x15x64xbf16>, vector<6x1x64xbf16> -> vector<6x16x64xbf16>
    %c0_i32_58 = arith.constant 0 : i32
    %89 = arith.sitofp %c0_i32_58 : i32 to bf16
    %90 = vector.broadcast %89 : bf16 to vector<6x16x64xbf16>
    %91 = arith.select %85, %88, %90 : vector<6x16x64xi1>, vector<6x16x64xbf16>
    %c0_59 = arith.constant 0 : index
    %c0_60 = arith.constant 0 : index
    %c128_61 = arith.constant 128 : index
    %92 = vector.load %arg9[%c0_59, %c0_60, %c128_61] : memref<6x16x192xbf16, #tpu.memory_space<vmem>>, vector<6x16x64xbf16>
    tpu.vector_store %arg9[%c0_59, %c0_60, %c128_61], %91 {strides = array<i32>} : memref<6x16x192xbf16, #tpu.memory_space<vmem>>, vector<6x16x64xbf16>,
    %c0_62 = arith.constant 0 : index
    %c0_63 = arith.constant 0 : index
    %93 = vector.load %arg6[%c0_62, %c0_63] : memref<1x128xf32, #tpu.memory_space<vmem>>, vector<1x128xf32>
    %94 = vector.shape_cast %93 : vector<1x128xf32> to vector<1x128xf32>
    %95 = vector.broadcast %94 : vector<1x128xf32> to vector<64x128xf32>
    %c0_64 = arith.constant 0 : index
    %c0_65 = arith.constant 0 : index
    %96 = vector.load %arg11[%c0_64, %c0_65] : memref<64x128xf32, #tpu.memory_space<vmem>>, vector<64x128xf32>
    tpu.vector_store %arg11[%c0_64, %c0_65], %95 {strides = array<i32>} : memref<64x128xf32, #tpu.memory_space<vmem>>, vector<64x128xf32>,
    %c0_66 = arith.constant 0 : index
    %c0_67 = arith.constant 0 : index
    %c0_68 = arith.constant 0 : index
    %97 = vector.load %arg9[%c0_66, %c0_67, %c0_68] : memref<6x16x192xbf16, #tpu.memory_space<vmem>>, vector<4x16x192xbf16>
    %98 = vector.shape_cast %97 : vector<4x16x192xbf16> to vector<64x192xbf16>
    %c0_69 = arith.constant 0 : index
    %c0_70 = arith.constant 0 : index
    %99 = vector.load %arg11[%c0_69, %c0_70] : memref<64x128xf32, #tpu.memory_space<vmem>>, vector<64x128xf32>
    %c0_71 = arith.constant 0 : index
    %c0_72 = arith.constant 0 : index
    %c0_73 = arith.constant 0 : index
    %100 = vector.load %arg5[%c0_71, %c0_72, %c0_73] : memref<3x192x128xbf16, #tpu.memory_space<vmem>>, vector<1x192x128xbf16>
    %101 = vector.shape_cast %100 : vector<1x192x128xbf16> to vector<192x128xbf16>
    %cst_74 = arith.constant dense<0.000000e+00> : vector<64x128xf32>
    %102 = tpu.matmul %98, %101, %cst_74 {dimension_numbers = #tpu.dot_dimension_numbers<[1], [0], [0], [1], [0, 0, 1, 1], [], []>} : vector<64x192xbf16>, vector<192x128xbf16>, vector<64x128xf32> -> vector<64x128xf32>
    %103 = arith.addf %99, %102 : vector<64x128xf32>
    %c0_75 = arith.constant 0 : index
    %c0_76 = arith.constant 0 : index
    %104 = vector.load %arg11[%c0_75, %c0_76] : memref<64x128xf32, #tpu.memory_space<vmem>>, vector<64x128xf32>
    tpu.vector_store %arg11[%c0_75, %c0_76], %103 {strides = array<i32>} : memref<64x128xf32, #tpu.memory_space<vmem>>, vector<64x128xf32>,
    %c1_77 = arith.constant 1 : index
    %c0_78 = arith.constant 0 : index
    %c0_79 = arith.constant 0 : index
    %105 = vector.load %arg9[%c1_77, %c0_78, %c0_79] : memref<6x16x192xbf16, #tpu.memory_space<vmem>>, vector<4x16x192xbf16>
    %106 = vector.shape_cast %105 : vector<4x16x192xbf16> to vector<64x192xbf16>
    %c0_80 = arith.constant 0 : index
    %c0_81 = arith.constant 0 : index
    %107 = vector.load %arg11[%c0_80, %c0_81] : memref<64x128xf32, #tpu.memory_space<vmem>>, vector<64x128xf32>
    %c1_82 = arith.constant 1 : index
    %c0_83 = arith.constant 0 : index
    %c0_84 = arith.constant 0 : index
    %108 = vector.load %arg5[%c1_82, %c0_83, %c0_84] : memref<3x192x128xbf16, #tpu.memory_space<vmem>>, vector<1x192x128xbf16>
    %109 = vector.shape_cast %108 : vector<1x192x128xbf16> to vector<192x128xbf16>
    %cst_85 = arith.constant dense<0.000000e+00> : vector<64x128xf32>
    %110 = tpu.matmul %106, %109, %cst_85 {dimension_numbers = #tpu.dot_dimension_numbers<[1], [0], [0], [1], [0, 0, 1, 1], [], []>} : vector<64x192xbf16>, vector<192x128xbf16>, vector<64x128xf32> -> vector<64x128xf32>
    %111 = arith.addf %107, %110 : vector<64x128xf32>
    %c0_86 = arith.constant 0 : index
    %c0_87 = arith.constant 0 : index
    %112 = vector.load %arg11[%c0_86, %c0_87] : memref<64x128xf32, #tpu.memory_space<vmem>>, vector<64x128xf32>
    tpu.vector_store %arg11[%c0_86, %c0_87], %111 {strides = array<i32>} : memref<64x128xf32, #tpu.memory_space<vmem>>, vector<64x128xf32>,
    %c2_88 = arith.constant 2 : index
    %c0_89 = arith.constant 0 : index
    %c0_90 = arith.constant 0 : index
    %113 = vector.load %arg9[%c2_88, %c0_89, %c0_90] : memref<6x16x192xbf16, #tpu.memory_space<vmem>>, vector<4x16x192xbf16>
    %114 = vector.shape_cast %113 : vector<4x16x192xbf16> to vector<64x192xbf16>
    %c0_91 = arith.constant 0 : index
    %c0_92 = arith.constant 0 : index
    %115 = vector.load %arg11[%c0_91, %c0_92] : memref<64x128xf32, #tpu.memory_space<vmem>>, vector<64x128xf32>
    %c2_93 = arith.constant 2 : index
    %c0_94 = arith.constant 0 : index
    %c0_95 = arith.constant 0 : index
    %116 = vector.load %arg5[%c2_93, %c0_94, %c0_95] : memref<3x192x128xbf16, #tpu.memory_space<vmem>>, vector<1x192x128xbf16>
    %117 = vector.shape_cast %116 : vector<1x192x128xbf16> to vector<192x128xbf16>
    %cst_96 = arith.constant dense<0.000000e+00> : vector<64x128xf32>
    %118 = tpu.matmul %114, %117, %cst_96 {dimension_numbers = #tpu.dot_dimension_numbers<[1], [0], [0], [1], [0, 0, 1, 1], [], []>} : vector<64x192xbf16>, vector<192x128xbf16>, vector<64x128xf32> -> vector<64x128xf32>
    %119 = arith.addf %115, %118 : vector<64x128xf32>
    %c0_97 = arith.constant 0 : index
    %c0_98 = arith.constant 0 : index
    %120 = vector.load %arg11[%c0_97, %c0_98] : memref<64x128xf32, #tpu.memory_space<vmem>>, vector<64x128xf32>
    tpu.vector_store %arg11[%c0_97, %c0_98], %119 {strides = array<i32>} : memref<64x128xf32, #tpu.memory_space<vmem>>, vector<64x128xf32>,
    %c0_99 = arith.constant 0 : index
    %c0_100 = arith.constant 0 : index
    %121 = vector.load %arg11[%c0_99, %c0_100] : memref<64x128xf32, #tpu.memory_space<vmem>>, vector<64x128xf32>
    %122 = arith.negf %121 : vector<64x128xf32>
    %123 = math.exp %122 : vector<64x128xf32>
    %cst_101 = arith.constant 1.000000e+00 : f32
    %124 = vector.broadcast %cst_101 : f32 to vector<64x128xf32>
    %125 = arith.addf %124, %123 : vector<64x128xf32>
    %126 = arith.divf %124, %125 : vector<64x128xf32>
    %127 = arith.mulf %121, %126 : vector<64x128xf32>
    %c2_i32 = arith.constant 2 : i32
    %128 = arith.addi %1, %c2_i32 : i32
    %c0_102 = arith.constant 0 : index
    %129 = arith.index_cast %128 : i32 to index
    %c0_103 = arith.constant 0 : index
    %c0_104 = arith.constant 0 : index
    %130 = vector.load %arg2[%c0_102, %129, %c0_103, %c0_104] : memref<1x20x16x128xbf16, #tpu.memory_space<vmem>>, vector<1x4x16x128xbf16>
    %131 = vector.shape_cast %130 : vector<1x4x16x128xbf16> to vector<4x16x128xbf16>
    %132 = vector.shape_cast %131 : vector<4x16x128xbf16> to vector<64x128xbf16>
    %133 = arith.extf %132 : vector<64x128xbf16> to vector<64x128xf32>
    %134 = arith.addf %127, %133 : vector<64x128xf32>
    %135 = vector.shape_cast %134 : vector<64x128xf32> to vector<4x16x128xf32>
    %136 = arith.truncf %135 : vector<4x16x128xf32> to vector<4x16x128xbf16>
    %c0_105 = arith.constant 0 : index
    %c0_106 = arith.constant 0 : index
    %c0_107 = arith.constant 0 : index
    %c0_108 = arith.constant 0 : index
    %137 = vector.load %arg7[%c0_105, %c0_106, %c0_107, %c0_108] : memref<1x4x16x128xbf16, #tpu.memory_space<vmem>>, vector<1x4x16x128xbf16>
    %138 = vector.shape_cast %137 : vector<1x4x16x128xbf16> to vector<4x16x128xbf16>
    %139 = vector.shape_cast %136 : vector<4x16x128xbf16> to vector<1x4x16x128xbf16>
    tpu.vector_store %arg7[%c0_105, %c0_106, %c0_107, %c0_108], %139 {strides = array<i32>} : memref<1x4x16x128xbf16, #tpu.memory_space<vmem>>, vector<1x4x16x128xbf16>,
    return
  }
  func.func @transform_0(%arg0: i32, %arg1: i32) -> (i32, i32, i32, i32) {
    %c0_i32 = arith.constant 0 : i32
    %c0_i32_0 = arith.constant 0 : i32
    %c0_i32_1 = arith.constant 0 : i32
    %c0_i32_2 = arith.constant 0 : i32
    return %arg0, %c0_i32, %c0_i32_0, %c0_i32_1 : i32, i32, i32, i32
  }
  func.func @transform_1(%arg0: i32, %arg1: i32) -> (i32, i32, i32) {
    %c0_i32 = arith.constant 0 : i32
    %c0_i32_0 = arith.constant 0 : i32
    %c0_i32_1 = arith.constant 0 : i32
    %c0_i32_2 = arith.constant 0 : i32
    return %c0_i32, %c0_i32_0, %c0_i32_1 : i32, i32, i32
  }
  func.func @transform_2(%arg0: i32, %arg1: i32) -> (i32, i32) {
    %c0_i32 = arith.constant 0 : i32
    %c0_i32_0 = arith.constant 0 : i32
    %c0_i32_1 = arith.constant 0 : i32
    return %c0_i32, %c0_i32_0 : i32, i32
  }
  func.func @transform_3(%arg0: i32, %arg1: i32) -> (i32, i32, i32) {
    %c0_i32 = arith.constant 0 : i32
    %c0_i32_0 = arith.constant 0 : i32
    %c0_i32_1 = arith.constant 0 : i32
    %c0_i32_2 = arith.constant 0 : i32
    return %c0_i32, %c0_i32_0, %c0_i32_1 : i32, i32, i32
  }
  func.func @transform_4(%arg0: i32, %arg1: i32) -> (i32, i32) {
    %c0_i32 = arith.constant 0 : i32
    %c0_i32_0 = arith.constant 0 : i32
    %c0_i32_1 = arith.constant 0 : i32
    return %c0_i32, %c0_i32_0 : i32, i32
  }
  func.func @transform_5(%arg0: i32, %arg1: i32) -> (i32, i32, i32, i32) {
    %c0_i32 = arith.constant 0 : i32
    %c0_i32_0 = arith.constant 0 : i32
    %c0_i32_1 = arith.constant 0 : i32
    return %arg0, %arg1, %c0_i32, %c0_i32_0 : i32, i32, i32, i32
  }
}

</mosaic_0001>

<llo_original>
// kernel: bottleneck_forward.1
$region0: #{bottleneck_forward.1}
  #allocation0 [shape = 'u32[]', space=smem, size = 0x4, offset = 0x4, fixed_abs, tag = 'smem constant byte address 0x4 - core index']
  #allocation1 [shape = 'u32[144,128]{1,0:T(1,128)}', space=vmem, size = 0x12000, scoped, tag = 'internal scratch']
  #allocation2 [shape = 'bf16[8,16,384]{2,1,0:T(8,128)(2,1)}', space=vmem, size = 0x18000, scoped, tag = 'scratch operand']
  #allocation3 [shape = 'bf16[6,16,192]{2,1,0:T(8,128)(2,1)}', space=vmem, size = 0xc000, scoped, tag = 'scratch operand']
  #allocation4 [shape = 'f32[96,64]{1,0:T(8,128)}', space=vmem, size = 0xc000, scoped, tag = 'scratch operand']
  #allocation5 [shape = 'f32[64,128]{1,0:T(8,128)}', space=vmem, size = 0x8000, scoped, tag = 'scratch operand']
  %s0 = inlined_call_operand.vmem [shape: bf16[2,20,16,128], index: 0, kind: input, shape index: {}]
  %s1 = inlined_call_operand.vmem [shape: bf16[3,384,64], index: 1, kind: input, shape index: {}]
  %s2 = inlined_call_operand.vmem [shape: f32[1,64], index: 2, kind: input, shape index: {}]
  %s3 = inlined_call_operand.vmem [shape: bf16[3,192,128], index: 3, kind: input, shape index: {}]
  %s4 = inlined_call_operand.vmem [shape: f32[1,128], index: 4, kind: input, shape index: {}]
  %s5 = inlined_call_operand.hbm [shape: bf16[2,16,16,128], index: 5, kind: output, shape index: {}]
  %s6 = sld [smem:[#allocation0]]
  $region53: #{bottleneck_forward.1} parent=0
    _
  %s8 = ssub.s32 1, %s6
  %s9 = scalar_select 0, %s8, %s6
  $region1: #{bottleneck_forward.1} parent=0
    #allocation6 [shape = 'u8[32768]{0}', space=vmem, size = 0x8000, scoped, tag = 'output window, operand 0']
    #allocation7 [shape = 's32[2]{0}', space=sflag, size = 0x8, scoped, tag = 'scoped memory for bottleneck_forward.1']
    %10 = vsyncpa [#allocation7], 0
    %s11 = scalar_lea.sflag [#allocation7], 1
    %12 = vsyncpa %s11, 0
    loop: start=0, step=1, limit=10
    $region2: #{bottleneck_forward.1} parent=1 // loop_pre_header
      _
    $region3: #{bottleneck_forward.1} parent=1 // loop_header
      %s14 = sphi 0, %s18
      %p15 = scmp.ge.s32.totalorder %s14, 10
      %s21 = sphi 0, %s33
      %s22 = sphi 0, %s29
      %s23 = sphi 0, %s21
      %s24 = sphi 0, %s22
      %s25 = sphi 0, %s23
      %s26 = sphi 0, %s24
      %s36 = sphi 0, %s38
      %s39 = sphi 0, %s36
      %s40 = sphi 0, %s39
      %s56 = sphi 0, %s40
      %s60 = sphi 0, %s60
      %s62 = sphi 0, %s60
      %s63 = sphi 0, %s62
      %s77 = sphi 0, %s63
      %s81 = sphi 0, %s81
      %s83 = sphi 0, %s81
      %s84 = sphi 0, %s83
      %s98 = sphi 0, %s84
      %s102 = sphi 0, %s102
      %s104 = sphi 0, %s102
      %s105 = sphi 0, %s104
      %s119 = sphi 0, %s105
      %s123 = sphi 0, %s123
      %s125 = sphi 0, %s123
      %s126 = sphi 0, %s125
      %s140 = sphi 0, %s126
      %s148 = sphi 0, %s150
      %s151 = sphi 0, %s148
      %s152 = sphi 0, %s151
      %s168 = sphi 0, %s152
    $region4: #{bottleneck_forward.1} parent=1 // loop_header_branch
      %17 = sbr.rel (%p15) target = $region8
    $region5: #{bottleneck_forward.1} parent=1 // loop_body
      %s19 = ssub.s32 %s14, 1
      %s20 = ssub.s32 %s14, 2
      %s27 = sadd.s32 1, %s22
      %p28 = scmp.ge.s32.totalorder %s27, 4
      %s29 = scalar_select %p28, 0, %s27
      %s30 = sadd.s32 1, %s21
      %s31 = scalar_select %p28, %s30, %s21
      %p32 = scmp.ge.s32.totalorder %s31, 2
      %s33 = scalar_select %p32, 0, %s31
      %s34 = ssub.s32 %s21, %s33
      %p35 = scmp.eq.s32.totalorder %s34, 0
      %s37 = sadd.s32 %s36, 1
      %s38 = scalar_select %p35, %s36, %s37
      %p41 = pneg %p35
      %p42 = scmp.eq.s32.totalorder %s14, 7
      %p43 = por %p41, %p42
      %p44 = scmp.ne.s32.totalorder %s36, %s39
      %p45 = scmp.eq.s32.totalorder %s14, 0
      %p46 = por %p44, %p45
      %p47 = scmp.ne.s32.totalorder %s36, %s39
      %p48 = scmp.eq.s32.totalorder %s19, 7
      %p49 = por %p47, %p48
      %p50 = scmp.ne.s32.totalorder %s39, %s40
      %p51 = scmp.eq.s32.totalorder %s19, 0
      %p52 = por %p50, %p51
      %p53 = scmp.ne.s32.totalorder %s39, %s40
      %p54 = scmp.eq.s32.totalorder %s20, 7
      %p55 = por %p53, %p54
      %p57 = scmp.ne.s32.totalorder %s40, %s56
      %p58 = scmp.eq.s32.totalorder %s20, 0
      %p59 = por %p57, %p58
      %s61 = sadd.s32 %s60, 1
      %p64 = scmp.eq.s32.totalorder %s14, 7
      %p65 = scmp.ne.s32.totalorder %s60, %s62
      %p66 = scmp.eq.s32.totalorder %s14, 0
      %p67 = por %p65, %p66
      %p68 = scmp.ne.s32.totalorder %s60, %s62
      %p69 = scmp.eq.s32.totalorder %s19, 7
      %p70 = por %p68, %p69
      %p71 = scmp.ne.s32.totalorder %s62, %s63
      %p72 = scmp.eq.s32.totalorder %s19, 0
      %p73 = por %p71, %p72
      %p74 = scmp.ne.s32.totalorder %s62, %s63
      %p75 = scmp.eq.s32.totalorder %s20, 7
      %p76 = por %p74, %p75
      %p78 = scmp.ne.s32.totalorder %s63, %s77
      %p79 = scmp.eq.s32.totalorder %s20, 0
      %p80 = por %p78, %p79
      %s82 = sadd.s32 %s81, 1
      %p85 = scmp.eq.s32.totalorder %s14, 7
      %p86 = scmp.ne.s32.totalorder %s81, %s83
      %p87 = scmp.eq.s32.totalorder %s14, 0
      %p88 = por %p86, %p87
      %p89 = scmp.ne.s32.totalorder %s81, %s83
      %p90 = scmp.eq.s32.totalorder %s19, 7
      %p91 = por %p89, %p90
      %p92 = scmp.ne.s32.totalorder %s83, %s84
      %p93 = scmp.eq.s32.totalorder %s19, 0
      %p94 = por %p92, %p93
      %p95 = scmp.ne.s32.totalorder %s83, %s84
      %p96 = scmp.eq.s32.totalorder %s20, 7
      %p97 = por %p95, %p96
      %p99 = scmp.ne.s32.totalorder %s84, %s98
      %p100 = scmp.eq.s32.totalorder %s20, 0
      %p101 = por %p99, %p100
      %s103 = sadd.s32 %s102, 1
      %p106 = scmp.eq.s32.totalorder %s14, 7
      %p107 = scmp.ne.s32.totalorder %s102, %s104
      %p108 = scmp.eq.s32.totalorder %s14, 0
      %p109 = por %p107, %p108
      %p110 = scmp.ne.s32.totalorder %s102, %s104
      %p111 = scmp.eq.s32.totalorder %s19, 7
      %p112 = por %p110, %p111
      %p113 = scmp.ne.s32.totalorder %s104, %s105
      %p114 = scmp.eq.s32.totalorder %s19, 0
      %p115 = por %p113, %p114
      %p116 = scmp.ne.s32.totalorder %s104, %s105
      %p117 = scmp.eq.s32.totalorder %s20, 7
      %p118 = por %p116, %p117
      %p120 = scmp.ne.s32.totalorder %s105, %s119
      %p121 = scmp.eq.s32.totalorder %s20, 0
      %p122 = por %p120, %p121
      %s124 = sadd.s32 %s123, 1
      %p127 = scmp.eq.s32.totalorder %s14, 7
      %p128 = scmp.ne.s32.totalorder %s123, %s125
      %p129 = scmp.eq.s32.totalorder %s14, 0
      %p130 = por %p128, %p129
      %p131 = scmp.ne.s32.totalorder %s123, %s125
      %p132 = scmp.eq.s32.totalorder %s19, 7
      %p133 = por %p131, %p132
      %p134 = scmp.ne.s32.totalorder %s125, %s126
      %p135 = scmp.eq.s32.totalorder %s19, 0
      %p136 = por %p134, %p135
      %p137 = scmp.ne.s32.totalorder %s125, %s126
      %p138 = scmp.eq.s32.totalorder %s20, 7
      %p139 = por %p137, %p138
      %p141 = scmp.ne.s32.totalorder %s126, %s140
      %p142 = scmp.eq.s32.totalorder %s20, 0
      %p143 = por %p141, %p142
      %s144 = ssub.s32 %s21, %s33
      %s145 = ssub.s32 %s22, %s29
      %s146 = sor.u32 %s144, %s145
      %p147 = scmp.eq.s32.totalorder %s146, 0
      %s149 = sadd.s32 %s148, 1
      %s150 = scalar_select %p147, %s148, %s149
      %p153 = pneg %p147
      %p154 = scmp.eq.s32.totalorder %s14, 7
      %p155 = por %p153, %p154
      %p156 = scmp.ne.s32.totalorder %s148, %s151
      %p157 = scmp.eq.s32.totalorder %s14, 0
      %p158 = por %p156, %p157
      %p159 = scmp.ne.s32.totalorder %s148, %s151
      %p160 = scmp.eq.s32.totalorder %s19, 7
      %p161 = por %p159, %p160
      %p162 = scmp.ne.s32.totalorder %s151, %s152
      %p163 = scmp.eq.s32.totalorder %s19, 0
      %p164 = por %p162, %p163
      %p165 = scmp.ne.s32.totalorder %s151, %s152
      %p166 = scmp.eq.s32.totalorder %s20, 7
      %p167 = por %p165, %p166
      %p169 = scmp.ne.s32.totalorder %s152, %s168
      %p170 = scmp.eq.s32.totalorder %s20, 0
      %p171 = por %p169, %p170
      %p172 = scmp.le.s32.totalorder 1, %s14
      %p173 = scmp.lt.s32.totalorder %s14, 9
      %p174 = pnand %p172, %p173
      %p175 = pneg %p174
      // Predicated region
      $region9: #{bottleneck_forward.1} parent=5 // pred_check
        _
      $region10: #{bottleneck_forward.1} parent=5 // pred_check_branch
        %177 = sbr.rel (%p174) target = $region12
      $region11: #{bottleneck_forward.1} parent=5 // pred_region
        %s178 = ssub.s32 %s14, 1
        // Predicated region
        $region13: #{bottleneck_forward.1} parent=11 // pred_check
          %p179 = pneg %p73
        $region14: #{bottleneck_forward.1} parent=11 // pred_check_branch
          %181 = sbr.rel (%p179) target = $region16
        $region15: #{bottleneck_forward.1} parent=11 // pred_region
          _
        $region16: #{bottleneck_forward.1} parent=11 // pred_fallthru
          _
        // Predicated region
        $region17: #{bottleneck_forward.1} parent=11 // pred_check
          %p182 = pneg %p94
        $region18: #{bottleneck_forward.1} parent=11 // pred_check_branch
          %184 = sbr.rel (%p182) target = $region20
        $region19: #{bottleneck_forward.1} parent=11 // pred_region
          _
        $region20: #{bottleneck_forward.1} parent=11 // pred_fallthru
          _
        // Predicated region
        $region21: #{bottleneck_forward.1} parent=11 // pred_check
          %p185 = pneg %p115
        $region22: #{bottleneck_forward.1} parent=11 // pred_check_branch
          %187 = sbr.rel (%p185) target = $region24
        $region23: #{bottleneck_forward.1} parent=11 // pred_region
          _
        $region24: #{bottleneck_forward.1} parent=11 // pred_fallthru
          _
        // Predicated region
        $region25: #{bottleneck_forward.1} parent=11 // pred_check
          %p188 = pneg %p136
        $region26: #{bottleneck_forward.1} parent=11 // pred_check_branch
          %190 = sbr.rel (%p188) target = $region28
        $region27: #{bottleneck_forward.1} parent=11 // pred_region
          _
        $region28: #{bottleneck_forward.1} parent=11 // pred_fallthru
          _
      $region12: #{bottleneck_forward.1} parent=5 // pred_fallthru
        _
      %p191 = scmp.lt.s32.totalorder %s14, 8
      // Predicated region
      $region29: #{bottleneck_forward.1} parent=5 // pred_check
        %p192 = pneg %p191
      $region30: #{bottleneck_forward.1} parent=5 // pred_check_branch
        %194 = sbr.rel (%p192) target = $region32
      $region31: #{bottleneck_forward.1} parent=5 // pred_region
        // Predicated region
        $region33: #{bottleneck_forward.1} parent=31 // pred_check
          %p195 = pneg %p46
        $region34: #{bottleneck_forward.1} parent=31 // pred_check_branch
          %197 = sbr.rel (%p195) target = $region36
        $region35: #{bottleneck_forward.1} parent=31 // pred_region
          %p198 = scmp.lt.s32.totalorder %s21, 1
          %s199 = scalar_select %p198, %s21, 1
          %s200 = smul.addr %s199, 40
          %s201 = smul.addr %s200, 4
          %s202 = scalar_lea.vmem %s0, %s201
        $region36: #{bottleneck_forward.1} parent=31 // pred_fallthru
          _
      $region32: #{bottleneck_forward.1} parent=5 // pred_fallthru
        _
      %p203 = scmp.le.s32.totalorder 1, %s14
      %p204 = scmp.lt.s32.totalorder %s14, 9
      %p205 = pnand %p203, %p204
      %p206 = pneg %p205
      // Predicated region
      $region37: #{bottleneck_forward.1} parent=5 // pred_check
        _
      $region38: #{bottleneck_forward.1} parent=5 // pred_check_branch
        %208 = sbr.rel (%p205) target = $region40
      $region39: #{bottleneck_forward.1} parent=5 // pred_region
        %s209 = ssub.s32 %s14, 1
        %p210 = scmp.lt.s32.totalorder %s23, 1
        %s211 = scalar_select %p210, %s23, 1
        %s212 = smul.addr %s211, 40
        %s213 = smul.addr %s212, 4
        %s214 = scalar_lea.vmem %s0, %s213
        %p215 = pneg %p52
        %p216 = pneg %p49
        %p217 = pneg %p73
        %p218 = pneg %p70
        %p219 = pneg %p94
        %p220 = pneg %p91
        %p221 = pneg %p115
        %p222 = pneg %p112
        %p223 = pneg %p136
        %p224 = pneg %p133
        %p225 = pneg %p164
        %p226 = pneg %p161
        %s227 = sand.u32 %s151, 1
        %s228 = scalar_lea.sflag [#allocation7], %s227
        %s229 = sand.u32 %s151, 1
        %s230 = smul.addr %s229, 32
        %s231 = scalar_lea.vmem [#allocation6], %s230
        %p232 = scmp.lt.s32.totalorder %s23, 1
        %s233 = scalar_select %p232, %s23, 1
        %s234 = smul.addr %s233, 40
        %s235 = smul.addr %s234, 4
        %s236 = scalar_lea.vmem %s0, %s235
        %s237 = smul.u32 4, %s24
        %s241 = smul.u32 %s24, 4
        %s242 = smul.u32 %s241, 2
        %s243 = smul.addr %s242, 4
        %s244 = scalar_lea.vmem %s236, %s243
        %v245 = vld [vmem:[%s244] sm:$0xf]
        %v246 = vld [vmem:[%s244 + $0x4] sm:$0xf]
        %v247 = vld [vmem:[%s244 + $0x8] sm:$0xf]
        %v248 = vld [vmem:[%s244 + $0xc] sm:$0xf]
        %v249 = vld [vmem:[%s244 + $0x10] sm:$0xf]
        %v250 = vld [vmem:[%s244 + $0x14] sm:$0xf]
        %v251 = vld [vmem:[%s244 + $0x18] sm:$0xf]
        %v252 = vld [vmem:[%s244 + $0x1c] sm:$0xf]
        %v253 = vld [vmem:[%s244 + $0x20] sm:$0xf]
        %v254 = vld [vmem:[%s244 + $0x24] sm:$0xf]
        %v255 = vld [vmem:[%s244 + $0x28] sm:$0xf]
        %v256 = vld [vmem:[%s244 + $0x2c] sm:$0xf]
        %v257 = vld [vmem:[%s244 + $0x30] sm:$0xf]
        %v258 = vld [vmem:[%s244 + $0x34] sm:$0xf]
        %v259 = vld [vmem:[%s244 + $0x38] sm:$0xf]
        %v260 = vld [vmem:[%s244 + $0x3c] sm:$0xf]
        %v261 = vlaneseq
        %v262 = vshrl.u32 %v261, 7
        %v263 = vadd.s32 %v262, 8
        %vm264 = vcmp.ge.s32.totalorder %v262, 1
        %vm265 = vcmp.ge.s32.totalorder %v263, 1
        %v274 = vunpack.c.l.b16 %v246
        %v275 = vunpack.c.l.b16 %v248
        %v276 = vunpack.c.l.b16 %v250
        %v277 = vunpack.c.l.b16 %v252
        %v278 = vunpack.c.l.b16 %v254
        %v279 = vunpack.c.l.b16 %v256
        %v280 = vunpack.c.l.b16 %v258
        %v281 = vunpack.c.l.b16 %v260
        %v282 = vpack.c.b16 %v274, %v274
        %v283 = vpack.c.b16 %v275, %v275
        %v284 = vpack.c.b16 %v276, %v276
        %v285 = vpack.c.b16 %v277, %v277
        %v286 = vpack.c.b16 %v278, %v278
        %v287 = vpack.c.b16 %v279, %v279
        %v288 = vpack.c.b16 %v280, %v280
        %v289 = vpack.c.b16 %v281, %v281
        %v291 = vshrl.u32 %v282, 16
        %v293 = vrot.slane %v291, 3
        %v295 = vshrl.u32 %v283, 16
        %v297 = vrot.slane %v295, 3
        %v299 = vshrl.u32 %v284, 16
        %v301 = vrot.slane %v299, 3
        %v303 = vshrl.u32 %v285, 16
        %v305 = vrot.slane %v303, 3
        %v307 = vshrl.u32 %v286, 16
        %v309 = vrot.slane %v307, 3
        %v311 = vshrl.u32 %v287, 16
        %v313 = vrot.slane %v311, 3
        %v315 = vshrl.u32 %v288, 16
        %v317 = vrot.slane %v315, 3
        %v319 = vshrl.u32 %v289, 16
        %v321 = vrot.slane %v319, 3
        %v338 = vunpack.c.l.b16 %v245
        %v339 = vunpack.c.l.b16 %v247
        %v340 = vunpack.c.l.b16 %v249
        %v341 = vunpack.c.l.b16 %v251
        %v342 = vunpack.c.l.b16 %v253
        %v343 = vunpack.c.l.b16 %v255
        %v344 = vunpack.c.l.b16 %v257
        %v345 = vunpack.c.l.b16 %v259
        %v346 = vpack.c.b16 %v274, %v338
        %v347 = vpack.c.b16 %v275, %v339
        %v348 = vpack.c.b16 %v276, %v340
        %v349 = vpack.c.b16 %v277, %v341
        %v350 = vpack.c.b16 %v278, %v342
        %v351 = vpack.c.b16 %v279, %v343
        %v352 = vpack.c.b16 %v280, %v344
        %v353 = vpack.c.b16 %v281, %v345
        %v355 = vshrl.u32 %v346, 16
        %v357 = vrot.slane %v355, 7
        %v358 = vshll.u32 %v346, 16
        %v360 = vor.u32 %v357, %v358
        %v362 = vshrl.u32 %v347, 16
        %v364 = vrot.slane %v362, 7
        %v365 = vshll.u32 %v347, 16
        %v367 = vor.u32 %v364, %v365
        %v369 = vshrl.u32 %v348, 16
        %v371 = vrot.slane %v369, 7
        %v372 = vshll.u32 %v348, 16
        %v374 = vor.u32 %v371, %v372
        %v376 = vshrl.u32 %v349, 16
        %v378 = vrot.slane %v376, 7
        %v379 = vshll.u32 %v349, 16
        %v381 = vor.u32 %v378, %v379
        %v383 = vshrl.u32 %v350, 16
        %v385 = vrot.slane %v383, 7
        %v386 = vshll.u32 %v350, 16
        %v388 = vor.u32 %v385, %v386
        %v390 = vshrl.u32 %v351, 16
        %v392 = vrot.slane %v390, 7
        %v393 = vshll.u32 %v351, 16
        %v395 = vor.u32 %v392, %v393
        %v397 = vshrl.u32 %v352, 16
        %v399 = vrot.slane %v397, 7
        %v400 = vshll.u32 %v352, 16
        %v402 = vor.u32 %v399, %v400
        %v404 = vshrl.u32 %v353, 16
        %v406 = vrot.slane %v404, 7
        %v407 = vshll.u32 %v353, 16
        %v409 = vor.u32 %v406, %v407
        %vm418 = vcmask 1040384
        %vm419 = vsmask.f32 256
        %vm420 = vmand %vm418, %vm419
        %v421 = vsel %vm420, %v293, %v360
        %v422 = vsel %vm420, %v297, %v367
        %v423 = vsel %vm420, %v301, %v374
        %v424 = vsel %vm420, %v305, %v381
        %v425 = vsel %vm420, %v309, %v388
        %v426 = vsel %vm420, %v313, %v395
        %v427 = vsel %vm420, %v317, %v402
        %v428 = vsel %vm420, %v321, %v409
        %vm429 = vmpackc.low %vm264, %vm264
        %vm430 = vmpackc.low %vm265, %vm265
        %v431 = vsel %vm429, 65537, 0
        %v432 = vsel %vm430, 65537, 0
        %v433 = vunpack.c.l.b16 %v431
        %v434 = vunpack.c.l.b16 %v432
        %v435 = vpack.c.b16 %v434, %v433
        %vm436 = vcmp.ne.s16.totalorder %v435, 0
        %v437 = vsel %vm436, %v421, 0
        %v438 = vsel %vm436, %v422, 0
        %v439 = vsel %vm436, %v423, 0
        %v440 = vsel %vm436, %v424, 0
        %v441 = vsel %vm436, %v425, 0
        %v442 = vsel %vm436, %v426, 0
        %v443 = vsel %vm436, %v427, 0
        %v444 = vsel %vm436, %v428, 0
        %v453 = vunpack.c.l.b16 %v437
        %v454 = vunpack.c.h.b16 %v437
        %v455 = vunpack.c.l.b16 %v438
        %v456 = vunpack.c.h.b16 %v438
        %v457 = vunpack.c.l.b16 %v439
        %v458 = vunpack.c.h.b16 %v439
        %v459 = vunpack.c.l.b16 %v440
        %v460 = vunpack.c.h.b16 %v440
        %v461 = vunpack.c.l.b16 %v441
        %v462 = vunpack.c.h.b16 %v441
        %v463 = vunpack.c.l.b16 %v442
        %v464 = vunpack.c.h.b16 %v442
        %v465 = vunpack.c.l.b16 %v443
        %v466 = vunpack.c.h.b16 %v443
        %v467 = vunpack.c.l.b16 %v444
        %v468 = vunpack.c.h.b16 %v444
        %v469 = vpack.c.b16 %v453, %v453
        %v470 = vpack.c.b16 %v454, %v454
        %v471 = vpack.c.b16 %v455, %v455
        %v472 = vpack.c.b16 %v456, %v456
        %v473 = vpack.c.b16 %v457, %v457
        %v474 = vpack.c.b16 %v458, %v458
        %v475 = vpack.c.b16 %v459, %v459
        %v476 = vpack.c.b16 %v460, %v460
        %v477 = vpack.c.b16 %v461, %v461
        %v478 = vpack.c.b16 %v462, %v462
        %v479 = vpack.c.b16 %v463, %v463
        %v480 = vpack.c.b16 %v464, %v464
        %v481 = vpack.c.b16 %v465, %v465
        %v482 = vpack.c.b16 %v466, %v466
        %v483 = vpack.c.b16 %v467, %v467
        %v484 = vpack.c.b16 %v468, %v468
        %501 = vst [vmem:[#allocation2] sm:$0xf] %v469
        %502 = vst [vmem:[#allocation2 + $0xc] sm:$0xf] %v470
        %503 = vst [vmem:[#allocation2 + $0x18] sm:$0xf] %v471
        %504 = vst [vmem:[#allocation2 + $0x24] sm:$0xf] %v472
        %505 = vst [vmem:[#allocation2 + $0x30] sm:$0xf] %v473
        %506 = vst [vmem:[#allocation2 + $0x3c] sm:$0xf] %v474
        %507 = vst [vmem:[#allocation2 + $0x48] sm:$0xf] %v475
        %508 = vst [vmem:[#allocation2 + $0x54] sm:$0xf] %v476
        %509 = vst [vmem:[#allocation2 + $0x60] sm:$0xf] %v477
        %510 = vst [vmem:[#allocation2 + $0x6c] sm:$0xf] %v478
        %511 = vst [vmem:[#allocation2 + $0x78] sm:$0xf] %v479
        %512 = vst [vmem:[#allocation2 + $0x84] sm:$0xf] %v480
        %513 = vst [vmem:[#allocation2 + $0x90] sm:$0xf] %v481
        %514 = vst [vmem:[#allocation2 + $0x9c] sm:$0xf] %v482
        %515 = vst [vmem:[#allocation2 + $0xa8] sm:$0xf] %v483
        %516 = vst [vmem:[#allocation2 + $0xb4] sm:$0xf] %v484
        %517 = vst [vmem:[#allocation2 + $0x4] sm:$0xf] %v245
        %518 = vst [vmem:[#allocation2 + $0x10] sm:$0xf] %v246
        %519 = vst [vmem:[#allocation2 + $0x1c] sm:$0xf] %v247
        %520 = vst [vmem:[#allocation2 + $0x28] sm:$0xf] %v248
        %521 = vst [vmem:[#allocation2 + $0x34] sm:$0xf] %v249
        %522 = vst [vmem:[#allocation2 + $0x40] sm:$0xf] %v250
        %523 = vst [vmem:[#allocation2 + $0x4c] sm:$0xf] %v251
        %524 = vst [vmem:[#allocation2 + $0x58] sm:$0xf] %v252
        %525 = vst [vmem:[#allocation2 + $0x64] sm:$0xf] %v253
        %526 = vst [vmem:[#allocation2 + $0x70] sm:$0xf] %v254
        %527 = vst [vmem:[#allocation2 + $0x7c] sm:$0xf] %v255
        %528 = vst [vmem:[#allocation2 + $0x88] sm:$0xf] %v256
        %529 = vst [vmem:[#allocation2 + $0x94] sm:$0xf] %v257
        %530 = vst [vmem:[#allocation2 + $0xa0] sm:$0xf] %v258
        %531 = vst [vmem:[#allocation2 + $0xac] sm:$0xf] %v259
        %532 = vst [vmem:[#allocation2 + $0xb8] sm:$0xf] %v260
        %vm533 = vcmp.le.s32.totalorder %v262, 14
        %vm534 = vcmp.le.s32.totalorder %v263, 14
        %v535 = vrot.slane %v358, 1
        %v536 = vor.u32 %v355, %v535
        %v537 = vrot.slane %v365, 1
        %v538 = vor.u32 %v362, %v537
        %v539 = vrot.slane %v372, 1
        %v540 = vor.u32 %v369, %v539
        %v541 = vrot.slane %v379, 1
        %v542 = vor.u32 %v376, %v541
        %v543 = vrot.slane %v386, 1
        %v544 = vor.u32 %v383, %v543
        %v545 = vrot.slane %v393, 1
        %v546 = vor.u32 %v390, %v545
        %v547 = vrot.slane %v400, 1
        %v548 = vor.u32 %v397, %v547
        %v549 = vrot.slane %v407, 1
        %v550 = vor.u32 %v404, %v549
        %v559 = vpack.c.b16 %v338, %v338
        %v560 = vpack.c.b16 %v339, %v339
        %v561 = vpack.c.b16 %v340, %v340
        %v562 = vpack.c.b16 %v341, %v341
        %v563 = vpack.c.b16 %v342, %v342
        %v564 = vpack.c.b16 %v343, %v343
        %v565 = vpack.c.b16 %v344, %v344
        %v566 = vpack.c.b16 %v345, %v345
        %v568 = vshll.u32 %v559, 16
        %v570 = vrot.slane %v568, 1
        %v572 = vshll.u32 %v560, 16
        %v574 = vrot.slane %v572, 1
        %v576 = vshll.u32 %v561, 16
        %v578 = vrot.slane %v576, 1
        %v580 = vshll.u32 %v562, 16
        %v582 = vrot.slane %v580, 1
        %v584 = vshll.u32 %v563, 16
        %v586 = vrot.slane %v584, 1
        %v588 = vshll.u32 %v564, 16
        %v590 = vrot.slane %v588, 1
        %v592 = vshll.u32 %v565, 16
        %v594 = vrot.slane %v592, 1
        %v596 = vshll.u32 %v566, 16
        %v598 = vrot.slane %v596, 1
        %vm607 = vcmask 1047552
        %vm608 = vsmask.f32 7424
        %vm609 = vmand %vm607, %vm608
        %v610 = vsel %vm609, %v536, %v570
        %v611 = vsel %vm609, %v538, %v574
        %v612 = vsel %vm609, %v540, %v578
        %v613 = vsel %vm609, %v542, %v582
        %v614 = vsel %vm609, %v544, %v586
        %v615 = vsel %vm609, %v546, %v590
        %v616 = vsel %vm609, %v548, %v594
        %v617 = vsel %vm609, %v550, %v598
        %vm618 = vmpackc.low %vm533, %vm533
        %vm619 = vmpackc.low %vm534, %vm534
        %v620 = vsel %vm618, 65537, 0
        %v621 = vsel %vm619, 65537, 0
        %v622 = vunpack.c.l.b16 %v620
        %v623 = vunpack.c.l.b16 %v621
        %v624 = vpack.c.b16 %v623, %v622
        %vm625 = vcmp.ne.s16.totalorder %v624, 0
        %v626 = vsel %vm625, %v610, 0
        %v627 = vsel %vm625, %v611, 0
        %v628 = vsel %vm625, %v612, 0
        %v629 = vsel %vm625, %v613, 0
        %v630 = vsel %vm625, %v614, 0
        %v631 = vsel %vm625, %v615, 0
        %v632 = vsel %vm625, %v616, 0
        %v633 = vsel %vm625, %v617, 0
        %v642 = vunpack.c.l.b16 %v626
        %v643 = vunpack.c.h.b16 %v626
        %v644 = vunpack.c.l.b16 %v627
        %v645 = vunpack.c.h.b16 %v627
        %v646 = vunpack.c.l.b16 %v628
        %v647 = vunpack.c.h.b16 %v628
        %v648 = vunpack.c.l.b16 %v629
        %v649 = vunpack.c.h.b16 %v629
        %v650 = vunpack.c.l.b16 %v630
        %v651 = vunpack.c.h.b16 %v630
        %v652 = vunpack.c.l.b16 %v631
        %v653 = vunpack.c.h.b16 %v631
        %v654 = vunpack.c.l.b16 %v632
        %v655 = vunpack.c.h.b16 %v632
        %v656 = vunpack.c.l.b16 %v633
        %v657 = vunpack.c.h.b16 %v633
        %v658 = vpack.c.b16 %v642, %v642
        %v659 = vpack.c.b16 %v643, %v643
        %v660 = vpack.c.b16 %v644, %v644
        %v661 = vpack.c.b16 %v645, %v645
        %v662 = vpack.c.b16 %v646, %v646
        %v663 = vpack.c.b16 %v647, %v647
        %v664 = vpack.c.b16 %v648, %v648
        %v665 = vpack.c.b16 %v649, %v649
        %v666 = vpack.c.b16 %v650, %v650
        %v667 = vpack.c.b16 %v651, %v651
        %v668 = vpack.c.b16 %v652, %v652
        %v669 = vpack.c.b16 %v653, %v653
        %v670 = vpack.c.b16 %v654, %v654
        %v671 = vpack.c.b16 %v655, %v655
        %v672 = vpack.c.b16 %v656, %v656
        %v673 = vpack.c.b16 %v657, %v657
        %690 = vst [vmem:[#allocation2 + $0x8] sm:$0xf] %v658
        %691 = vst [vmem:[#allocation2 + $0x14] sm:$0xf] %v659
        %692 = vst [vmem:[#allocation2 + $0x20] sm:$0xf] %v660
        %693 = vst [vmem:[#allocation2 + $0x2c] sm:$0xf] %v661
        %694 = vst [vmem:[#allocation2 + $0x38] sm:$0xf] %v662
        %695 = vst [vmem:[#allocation2 + $0x44] sm:$0xf] %v663
        %696 = vst [vmem:[#allocation2 + $0x50] sm:$0xf] %v664
        %697 = vst [vmem:[#allocation2 + $0x5c] sm:$0xf] %v665
        %698 = vst [vmem:[#allocation2 + $0x68] sm:$0xf] %v666
        %699 = vst [vmem:[#allocation2 + $0x74] sm:$0xf] %v667
        %700 = vst [vmem:[#allocation2 + $0x80] sm:$0xf] %v668
        %701 = vst [vmem:[#allocation2 + $0x8c] sm:$0xf] %v669
        %702 = vst [vmem:[#allocation2 + $0x98] sm:$0xf] %v670
        %703 = vst [vmem:[#allocation2 + $0xa4] sm:$0xf] %v671
        %704 = vst [vmem:[#allocation2 + $0xb0] sm:$0xf] %v672
        %705 = vst [vmem:[#allocation2 + $0xbc] sm:$0xf] %v673
        %v706 = vld [vmem:[%s2] sm:$0x1]
        %v708 = vlaneseq
        %v709 = vshrl.u32 %v708, 7
        %v710 = vsub.s32 0, %v709
        %v711 = vrot.slane %v706, %v710
        %vm713 = vcmask 523264
        %714 = vst.msk [vmem:[#allocation4] sm:$0xff] %vm713, %v711
        %715 = vst.msk [vmem:[#allocation4 + $0x8] sm:$0xff] %vm713, %v711
        %716 = vst.msk [vmem:[#allocation4 + $0x10] sm:$0xff] %vm713, %v711
        %717 = vst.msk [vmem:[#allocation4 + $0x18] sm:$0xff] %vm713, %v711
        %718 = vst.msk [vmem:[#allocation4 + $0x20] sm:$0xff] %vm713, %v711
        %719 = vst.msk [vmem:[#allocation4 + $0x28] sm:$0xff] %vm713, %v711
        %720 = vst.msk [vmem:[#allocation4 + $0x30] sm:$0xff] %vm713, %v711
        %721 = vst.msk [vmem:[#allocation4 + $0x38] sm:$0xff] %vm713, %v711
        %722 = vst.msk [vmem:[#allocation4 + $0x40] sm:$0xff] %vm713, %v711
        %723 = vst.msk [vmem:[#allocation4 + $0x48] sm:$0xff] %vm713, %v711
        %724 = vst.msk [vmem:[#allocation4 + $0x50] sm:$0xff] %vm713, %v711
        %725 = vst.msk [vmem:[#allocation4 + $0x58] sm:$0xff] %vm713, %v711
        %v726 = vld [vmem:[#allocation2] sm:$0xff]
        %v727 = vld [vmem:[#allocation2 + $0x8] sm:$0xf]
        %v728 = vld [vmem:[#allocation2 + $0xc] sm:$0xff]
        %v729 = vld [vmem:[#allocation2 + $0x14] sm:$0xf]
        %v730 = vld [vmem:[#allocation2 + $0x18] sm:$0xff]
        %v731 = vld [vmem:[#allocation2 + $0x20] sm:$0xf]
        %v732 = vld [vmem:[#allocation2 + $0x24] sm:$0xff]
        %v733 = vld [vmem:[#allocation2 + $0x2c] sm:$0xf]
        %v734 = vld [vmem:[#allocation2 + $0x30] sm:$0xff]
        %v735 = vld [vmem:[#allocation2 + $0x38] sm:$0xf]
        %v736 = vld [vmem:[#allocation2 + $0x3c] sm:$0xff]
        %v737 = vld [vmem:[#allocation2 + $0x44] sm:$0xf]
        %v738 = vld [vmem:[#allocation2 + $0x48] sm:$0xff]
        %v739 = vld [vmem:[#allocation2 + $0x50] sm:$0xf]
        %v740 = vld [vmem:[#allocation2 + $0x54] sm:$0xff]
        %v741 = vld [vmem:[#allocation2 + $0x5c] sm:$0xf]
        %v742 = vld [vmem:[#allocation2 + $0x60] sm:$0xff]
        %v743 = vld [vmem:[#allocation2 + $0x68] sm:$0xf]
        %v744 = vld [vmem:[#allocation2 + $0x6c] sm:$0xff]
        %v745 = vld [vmem:[#allocation2 + $0x74] sm:$0xf]
        %v746 = vld [vmem:[#allocation2 + $0x78] sm:$0xff]
        %v747 = vld [vmem:[#allocation2 + $0x80] sm:$0xf]
        %v748 = vld [vmem:[#allocation2 + $0x84] sm:$0xff]
        %v749 = vld [vmem:[#allocation2 + $0x8c] sm:$0xf]
        %v750 = vld [vmem:[#allocation4] sm:$0xff]
        %v751 = vld [vmem:[#allocation4 + $0x8] sm:$0xff]
        %v752 = vld [vmem:[#allocation4 + $0x10] sm:$0xff]
        %v753 = vld [vmem:[#allocation4 + $0x18] sm:$0xff]
        %v754 = vld [vmem:[#allocation4 + $0x20] sm:$0xff]
        %v755 = vld [vmem:[#allocation4 + $0x28] sm:$0xff]
        %v756 = vld [vmem:[#allocation4 + $0x30] sm:$0xff]
        %v757 = vld [vmem:[#allocation4 + $0x38] sm:$0xff]
        %v758 = vld [vmem:[#allocation4 + $0x40] sm:$0xff]
        %v759 = vld [vmem:[#allocation4 + $0x48] sm:$0xff]
        %v760 = vld [vmem:[#allocation4 + $0x50] sm:$0xff]
        %v761 = vld [vmem:[#allocation4 + $0x58] sm:$0xff]
        %v762 = vld [vmem:[%s1] sm:$0xf]
        %v763 = vld [vmem:[%s1 + $0x4] sm:$0xf]
        %v764 = vld [vmem:[%s1 + $0x8] sm:$0xf]
        %v765 = vld [vmem:[%s1 + $0xc] sm:$0xf]
        %v766 = vld [vmem:[%s1 + $0x10] sm:$0xf]
        %v767 = vld [vmem:[%s1 + $0x14] sm:$0xf]
        %v768 = vld [vmem:[%s1 + $0x18] sm:$0xf]
        %v769 = vld [vmem:[%s1 + $0x1c] sm:$0xf]
        %v770 = vld [vmem:[%s1 + $0x20] sm:$0xf]
        %v771 = vld [vmem:[%s1 + $0x24] sm:$0xf]
        %v772 = vld [vmem:[%s1 + $0x28] sm:$0xf]
        %v773 = vld [vmem:[%s1 + $0x2c] sm:$0xf]
        %v774 = vld [vmem:[%s1 + $0x30] sm:$0xf]
        %v775 = vld [vmem:[%s1 + $0x34] sm:$0xf]
        %v776 = vld [vmem:[%s1 + $0x38] sm:$0xf]
        %v777 = vld [vmem:[%s1 + $0x3c] sm:$0xf]
        %v778 = vld [vmem:[%s1 + $0x40] sm:$0xf]
        %v779 = vld [vmem:[%s1 + $0x44] sm:$0xf]
        %v780 = vld [vmem:[%s1 + $0x48] sm:$0xf]
        %v781 = vld [vmem:[%s1 + $0x4c] sm:$0xf]
        %v782 = vld [vmem:[%s1 + $0x50] sm:$0xf]
        %v783 = vld [vmem:[%s1 + $0x54] sm:$0xf]
        %v784 = vld [vmem:[%s1 + $0x58] sm:$0xf]
        %v785 = vld [vmem:[%s1 + $0x5c] sm:$0xf]
        %v786 = vld [vmem:[%s1 + $0x60] sm:$0xf]
        %v787 = vld [vmem:[%s1 + $0x64] sm:$0xf]
        %v788 = vld [vmem:[%s1 + $0x68] sm:$0xf]
        %v789 = vld [vmem:[%s1 + $0x6c] sm:$0xf]
        %v790 = vld [vmem:[%s1 + $0x70] sm:$0xf]
        %v791 = vld [vmem:[%s1 + $0x74] sm:$0xf]
        %v792 = vld [vmem:[%s1 + $0x78] sm:$0xf]
        %v793 = vld [vmem:[%s1 + $0x7c] sm:$0xf]
        %v794 = vld [vmem:[%s1 + $0x80] sm:$0xf]
        %v795 = vld [vmem:[%s1 + $0x84] sm:$0xf]
        %v796 = vld [vmem:[%s1 + $0x88] sm:$0xf]
        %v797 = vld [vmem:[%s1 + $0x8c] sm:$0xf]
        %v798 = vld [vmem:[%s1 + $0x90] sm:$0xf]
        %v799 = vld [vmem:[%s1 + $0x94] sm:$0xf]
        %v800 = vld [vmem:[%s1 + $0x98] sm:$0xf]
        %v801 = vld [vmem:[%s1 + $0x9c] sm:$0xf]
        %v802 = vld [vmem:[%s1 + $0xa0] sm:$0xf]
        %v803 = vld [vmem:[%s1 + $0xa4] sm:$0xf]
        %v804 = vld [vmem:[%s1 + $0xa8] sm:$0xf]
        %v805 = vld [vmem:[%s1 + $0xac] sm:$0xf]
        %v806 = vld [vmem:[%s1 + $0xb0] sm:$0xf]
        %v807 = vld [vmem:[%s1 + $0xb4] sm:$0xf]
        %v808 = vld [vmem:[%s1 + $0xb8] sm:$0xf]
        %v809 = vld [vmem:[%s1 + $0xbc] sm:$0xf]
        %v834 = vunpack.c.l.b16 %v726
        %v835 = vunpack.c.h.b16 %v726
        %v836 = vunpack.c.l.b16 %v727
        %v837 = vunpack.c.l.b16 %v728
        %v838 = vunpack.c.h.b16 %v728
        %v839 = vunpack.c.l.b16 %v729
        %v840 = vunpack.c.l.b16 %v730
        %v841 = vunpack.c.h.b16 %v730
        %v842 = vunpack.c.l.b16 %v731
        %v843 = vunpack.c.l.b16 %v732
        %v844 = vunpack.c.h.b16 %v732
        %v845 = vunpack.c.l.b16 %v733
        %v846 = vunpack.c.l.b16 %v734
        %v847 = vunpack.c.h.b16 %v734
        %v848 = vunpack.c.l.b16 %v735
        %v849 = vunpack.c.l.b16 %v736
        %v850 = vunpack.c.h.b16 %v736
        %v851 = vunpack.c.l.b16 %v737
        %v852 = vunpack.c.l.b16 %v738
        %v853 = vunpack.c.h.b16 %v738
        %v854 = vunpack.c.l.b16 %v739
        %v855 = vunpack.c.l.b16 %v740
        %v856 = vunpack.c.h.b16 %v740
        %v857 = vunpack.c.l.b16 %v741
        %v858 = vunpack.c.l.b16 %v742
        %v859 = vunpack.c.h.b16 %v742
        %v860 = vunpack.c.l.b16 %v743
        %v861 = vunpack.c.l.b16 %v744
        %v862 = vunpack.c.h.b16 %v744
        %v863 = vunpack.c.l.b16 %v745
        %v864 = vunpack.c.l.b16 %v746
        %v865 = vunpack.c.h.b16 %v746
        %v866 = vunpack.c.l.b16 %v747
        %v867 = vunpack.c.l.b16 %v748
        %v868 = vunpack.c.h.b16 %v748
        %v869 = vunpack.c.l.b16 %v749
        %v870 = vpack.c.b16 %v837, %v834
        %v871 = vpack.c.b16 %v838, %v835
        %v872 = vpack.c.b16 %v839, %v836
        %v873 = vpack.c.b16 %v843, %v840
        %v874 = vpack.c.b16 %v844, %v841
        %v875 = vpack.c.b16 %v845, %v842
        %v876 = vpack.c.b16 %v849, %v846
        %v877 = vpack.c.b16 %v850, %v847
        %v878 = vpack.c.b16 %v851, %v848
        %v879 = vpack.c.b16 %v855, %v852
        %v880 = vpack.c.b16 %v856, %v853
        %v881 = vpack.c.b16 %v857, %v854
        %v882 = vpack.c.b16 %v861, %v858
        %v883 = vpack.c.b16 %v862, %v859
        %v884 = vpack.c.b16 %v863, %v860
        %v885 = vpack.c.b16 %v867, %v864
        %v886 = vpack.c.b16 %v868, %v865
        %v887 = vpack.c.b16 %v869, %v866
        %v954 = vunpack.c.l.b16 %v762
        %v955 = vunpack.c.l.b16 %v763
        %v956 = vunpack.c.l.b16 %v764
        %v957 = vunpack.c.l.b16 %v765
        %v958 = vunpack.c.l.b16 %v766
        %v959 = vunpack.c.l.b16 %v767
        %v960 = vunpack.c.l.b16 %v768
        %v961 = vunpack.c.l.b16 %v769
        %v962 = vunpack.c.l.b16 %v770
        %v963 = vunpack.c.l.b16 %v771
        %v964 = vunpack.c.l.b16 %v772
        %v965 = vunpack.c.l.b16 %v773
        %v966 = vunpack.c.l.b16 %v774
        %v967 = vunpack.c.l.b16 %v775
        %v968 = vunpack.c.l.b16 %v776
        %v969 = vunpack.c.l.b16 %v777
        %v970 = vunpack.c.l.b16 %v778
        %v971 = vunpack.c.l.b16 %v779
        %v972 = vunpack.c.l.b16 %v780
        %v973 = vunpack.c.l.b16 %v781
        %v974 = vunpack.c.l.b16 %v782
        %v975 = vunpack.c.l.b16 %v783
        %v976 = vunpack.c.l.b16 %v784
        %v977 = vunpack.c.l.b16 %v785
        %v978 = vunpack.c.l.b16 %v786
        %v979 = vunpack.c.l.b16 %v787
        %v980 = vunpack.c.l.b16 %v788
        %v981 = vunpack.c.l.b16 %v789
        %v982 = vunpack.c.l.b16 %v790
        %v983 = vunpack.c.l.b16 %v791
        %v984 = vunpack.c.l.b16 %v792
        %v985 = vunpack.c.l.b16 %v793
        %v986 = vunpack.c.l.b16 %v794
        %v987 = vunpack.c.l.b16 %v795
        %v988 = vunpack.c.l.b16 %v796
        %v989 = vunpack.c.l.b16 %v797
        %v990 = vunpack.c.l.b16 %v798
        %v991 = vunpack.c.l.b16 %v799
        %v992 = vunpack.c.l.b16 %v800
        %v993 = vunpack.c.l.b16 %v801
        %v994 = vunpack.c.l.b16 %v802
        %v995 = vunpack.c.l.b16 %v803
        %v996 = vunpack.c.l.b16 %v804
        %v997 = vunpack.c.l.b16 %v805
        %v998 = vunpack.c.l.b16 %v806
        %v999 = vunpack.c.l.b16 %v807
        %v1000 = vunpack.c.l.b16 %v808
        %v1001 = vunpack.c.l.b16 %v809
        %v1002 = vpack.c.b16 %v955, %v954
        %v1003 = vpack.c.b16 %v957, %v956
        %v1004 = vpack.c.b16 %v959, %v958
        %v1005 = vpack.c.b16 %v961, %v960
        %v1006 = vpack.c.b16 %v963, %v962
        %v1007 = vpack.c.b16 %v965, %v964
        %v1008 = vpack.c.b16 %v967, %v966
        %v1009 = vpack.c.b16 %v969, %v968
        %v1010 = vpack.c.b16 %v971, %v970
        %v1011 = vpack.c.b16 %v973, %v972
        %v1012 = vpack.c.b16 %v975, %v974
        %v1013 = vpack.c.b16 %v977, %v976
        %v1014 = vpack.c.b16 %v979, %v978
        %v1015 = vpack.c.b16 %v981, %v980
        %v1016 = vpack.c.b16 %v983, %v982
        %v1017 = vpack.c.b16 %v985, %v984
        %v1018 = vpack.c.b16 %v987, %v986
        %v1019 = vpack.c.b16 %v989, %v988
        %v1020 = vpack.c.b16 %v991, %v990
        %v1021 = vpack.c.b16 %v993, %v992
        %v1022 = vpack.c.b16 %v995, %v994
        %v1023 = vpack.c.b16 %v997, %v996
        %v1024 = vpack.c.b16 %v999, %v998
        %v1025 = vpack.c.b16 %v1001, %v1000
        %1050 = vmatprep.subr.bf16.mxu0 0
        %1051 = vmatpush1.bf16.msra.mxu0 %v1009
        %1052 = vmatprep.subr.bf16.mxu0 0
        %1053 = vmatpush1.bf16.msra.mxu0 %v1008
        %1054 = vmatprep.subr.bf16.mxu0 0
        %1055 = vmatpush1.bf16.msra.mxu0 %v1007
        %1056 = vmatprep.subr.bf16.mxu0 0
        %1057 = vmatpush1.bf16.msra.mxu0 %v1006
        %1058 = vmatprep.subr.bf16.mxu0 0
        %1059 = vmatpush1.bf16.msra.mxu0 %v1005
        %1060 = vmatprep.subr.bf16.mxu0 0
        %1061 = vmatpush1.bf16.msra.mxu0 %v1004
        %1062 = vmatprep.subr.bf16.mxu0 0
        %1063 = vmatpush1.bf16.msra.mxu0 %v1003
        %1064 = vmatprep.subr.bf16.mxu0 0
        %1065 = vmatpush1.bf16.msra.mxu0 %v1002
        %1066 = vmatprep.subr.bf16.mxu0 0
        %1067 = vmatpush2.bf16.msra.mxu0 %v1017
        %1068 = vmatprep.subr.bf16.mxu0 0
        %1069 = vmatpush2.bf16.msra.mxu0 %v1016
        %1070 = vmatprep.subr.bf16.mxu0 0
        %1071 = vmatpush2.bf16.msra.mxu0 %v1015
        %1072 = vmatprep.subr.bf16.mxu0 0
        %1073 = vmatpush2.bf16.msra.mxu0 %v1014
        %1074 = vmatprep.subr.bf16.mxu0 0
        %1075 = vmatpush2.bf16.msra.mxu0 %v1013
        %1076 = vmatprep.subr.bf16.mxu0 0
        %1077 = vmatpush2.bf16.msra.mxu0 %v1012
        %1078 = vmatprep.subr.bf16.mxu0 0
        %1079 = vmatpush2.bf16.msra.mxu0 %v1011
        %1080 = vmatprep.subr.bf16.mxu0 0
        %1081 = vmatpush2.bf16.msra.mxu0 %v1010
        %1082 = vmatprep.mubr.bf16.mxu0 %v871
        %1083 = vmatmul.mubr.bf16.gmra.mxu0 %v870
        %v1084 = vpop.f32.mrf.mxu0
        %v1085 = vadd.f32 0.0, %v1084
        %v1086 = vpop.f32.mrf.mxu0
        %v1087 = vpop.f32.mrf.mxu0
        %v1088 = vadd.f32 0.0, %v1087
        %v1089 = vpop.f32.mrf.mxu0
        %1090 = vmatprep.mubr.bf16.mxu0 %v874
        %1091 = vmatmul.mubr.bf16.gmra.mxu0 %v873
        %v1092 = vpop.f32.mrf.mxu0
        %v1093 = vadd.f32 0.0, %v1092
        %v1094 = vpop.f32.mrf.mxu0
        %v1095 = vpop.f32.mrf.mxu0
        %v1096 = vadd.f32 0.0, %v1095
        %v1097 = vpop.f32.mrf.mxu0
        %1098 = vmatprep.mubr.bf16.mxu0 %v877
        %1099 = vmatmul.mubr.bf16.gmra.mxu0 %v876
        %v1100 = vpop.f32.mrf.mxu0
        %v1101 = vadd.f32 0.0, %v1100
        %v1102 = vpop.f32.mrf.mxu0
        %v1103 = vpop.f32.mrf.mxu0
        %v1104 = vadd.f32 0.0, %v1103
        %v1105 = vpop.f32.mrf.mxu0
        %1106 = vmatprep.mubr.bf16.mxu0 %v880
        %1107 = vmatmul.mubr.bf16.gmra.mxu0 %v879
        %v1108 = vpop.f32.mrf.mxu0
        %v1109 = vadd.f32 0.0, %v1108
        %v1110 = vpop.f32.mrf.mxu0
        %v1111 = vpop.f32.mrf.mxu0
        %v1112 = vadd.f32 0.0, %v1111
        %v1113 = vpop.f32.mrf.mxu0
        %1114 = vmatprep.mubr.bf16.mxu0 %v883
        %1115 = vmatmul.mubr.bf16.gmra.mxu0 %v882
        %v1116 = vpop.f32.mrf.mxu0
        %v1117 = vadd.f32 0.0, %v1116
        %v1118 = vpop.f32.mrf.mxu0
        %v1119 = vpop.f32.mrf.mxu0
        %v1120 = vadd.f32 0.0, %v1119
        %v1121 = vpop.f32.mrf.mxu0
        %1122 = vmatprep.mubr.bf16.mxu0 %v886
        %1123 = vmatmul.mubr.bf16.gmra.mxu0 %v885
        %v1124 = vpop.f32.mrf.mxu0
        %v1125 = vadd.f32 0.0, %v1124
        %v1126 = vpop.f32.mrf.mxu0
        %v1127 = vpop.f32.mrf.mxu0
        %v1128 = vadd.f32 0.0, %v1127
        %v1129 = vpop.f32.mrf.mxu0
        %1130 = vdwg.mxu0
        %1131 = vmatprep.subr.bf16.mxu0 0
        %1132 = vmatpush1.bf16.msra.mxu0 %v1025
        %1133 = vmatprep.subr.bf16.mxu0 0
        %1134 = vmatpush1.bf16.msra.mxu0 %v1024
        %1135 = vmatprep.subr.bf16.mxu0 0
        %1136 = vmatpush1.bf16.msra.mxu0 %v1023
        %1137 = vmatprep.subr.bf16.mxu0 0
        %1138 = vmatpush1.bf16.msra.mxu0 %v1022
        %1139 = vmatprep.subr.bf16.mxu0 0
        %1140 = vmatpush1.bf16.msra.mxu0 %v1021
        %1141 = vmatprep.subr.bf16.mxu0 0
        %1142 = vmatpush1.bf16.msra.mxu0 %v1020
        %1143 = vmatprep.subr.bf16.mxu0 0
        %1144 = vmatpush1.bf16.msra.mxu0 %v1019
        %1145 = vmatprep.subr.bf16.mxu0 0
        %1146 = vmatpush1.bf16.msra.mxu0 %v1018
        %1147 = vmatprep.subr.bf16.mxu0 0
        %1148 = vmatpush2.bf16.msra.mxu0 0
        %1149 = vmatprep.subr.bf16.mxu0 0
        %1150 = vmatpush2.bf16.msra.mxu0 0
        %1151 = vmatprep.subr.bf16.mxu0 0
        %1152 = vmatpush2.bf16.msra.mxu0 0
        %1153 = vmatprep.subr.bf16.mxu0 0
        %1154 = vmatpush2.bf16.msra.mxu0 0
        %1155 = vmatprep.subr.bf16.mxu0 0
        %1156 = vmatpush2.bf16.msra.mxu0 0
        %1157 = vmatprep.subr.bf16.mxu0 0
        %1158 = vmatpush2.bf16.msra.mxu0 0
        %1159 = vmatprep.subr.bf16.mxu0 0
        %1160 = vmatpush2.bf16.msra.mxu0 0
        %1161 = vmatprep.subr.bf16.mxu0 0
        %1162 = vmatpush2.bf16.msra.mxu0 0
        %1163 = vmatprep.mubr.bf16.mxu0 0
        %1164 = vmatmul.mubr.bf16.gmra.mxu0 %v872
        %v1165 = vpop.f32.mrf.mxu0
        %v1166 = vadd.f32 %v1085, %v1165
        %v1167 = vpop.f32.mrf.mxu0
        %v1168 = vpop.f32.mrf.mxu0
        %v1169 = vadd.f32 %v1088, %v1168
        %v1170 = vpop.f32.mrf.mxu0
        %1171 = vmatprep.mubr.bf16.mxu0 0
        %1172 = vmatmul.mubr.bf16.gmra.mxu0 %v875
        %v1173 = vpop.f32.mrf.mxu0
        %v1174 = vadd.f32 %v1093, %v1173
        %v1175 = vpop.f32.mrf.mxu0
        %v1176 = vpop.f32.mrf.mxu0
        %v1177 = vadd.f32 %v1096, %v1176
        %v1178 = vpop.f32.mrf.mxu0
        %1179 = vmatprep.mubr.bf16.mxu0 0
        %1180 = vmatmul.mubr.bf16.gmra.mxu0 %v878
        %v1181 = vpop.f32.mrf.mxu0
        %v1182 = vadd.f32 %v1101, %v1181
        %v1183 = vpop.f32.mrf.mxu0
        %v1184 = vpop.f32.mrf.mxu0
        %v1185 = vadd.f32 %v1104, %v1184
        %v1186 = vpop.f32.mrf.mxu0
        %1187 = vmatprep.mubr.bf16.mxu0 0
        %1188 = vmatmul.mubr.bf16.gmra.mxu0 %v881
        %v1189 = vpop.f32.mrf.mxu0
        %v1190 = vadd.f32 %v1109, %v1189
        %v1191 = vpop.f32.mrf.mxu0
        %v1192 = vpop.f32.mrf.mxu0
        %v1193 = vadd.f32 %v1112, %v1192
        %v1194 = vpop.f32.mrf.mxu0
        %1195 = vmatprep.mubr.bf16.mxu0 0
        %1196 = vmatmul.mubr.bf16.gmra.mxu0 %v884
        %v1197 = vpop.f32.mrf.mxu0
        %v1198 = vadd.f32 %v1117, %v1197
        %v1199 = vpop.f32.mrf.mxu0
        %v1200 = vpop.f32.mrf.mxu0
        %v1201 = vadd.f32 %v1120, %v1200
        %v1202 = vpop.f32.mrf.mxu0
        %1203 = vmatprep.mubr.bf16.mxu0 0
        %1204 = vmatmul.mubr.bf16.gmra.mxu0 %v887
        %v1205 = vpop.f32.mrf.mxu0
        %v1206 = vadd.f32 %v1125, %v1205
        %v1207 = vpop.f32.mrf.mxu0
        %v1208 = vpop.f32.mrf.mxu0
        %v1209 = vadd.f32 %v1128, %v1208
        %v1210 = vpop.f32.mrf.mxu0
        %1211 = vdwg.mxu0
        %v1212 = vadd.f32 %v750, %v1166
        %v1213 = vadd.f32 %v751, %v1169
        %v1214 = vadd.f32 %v752, %v1174
        %v1215 = vadd.f32 %v753, %v1177
        %v1216 = vadd.f32 %v754, %v1182
        %v1217 = vadd.f32 %v755, %v1185
        %v1218 = vadd.f32 %v756, %v1190
        %v1219 = vadd.f32 %v757, %v1193
        %v1220 = vadd.f32 %v758, %v1198
        %v1221 = vadd.f32 %v759, %v1201
        %v1222 = vadd.f32 %v760, %v1206
        %v1223 = vadd.f32 %v761, %v1209
        %1224 = vst.msk [vmem:[#allocation4] sm:$0xff] %vm713, %v1212
        %1225 = vst.msk [vmem:[#allocation4 + $0x8] sm:$0xff] %vm713, %v1213
        %1226 = vst.msk [vmem:[#allocation4 + $0x10] sm:$0xff] %vm713, %v1214
        %1227 = vst.msk [vmem:[#allocation4 + $0x18] sm:$0xff] %vm713, %v1215
        %1228 = vst.msk [vmem:[#allocation4 + $0x20] sm:$0xff] %vm713, %v1216
        %1229 = vst.msk [vmem:[#allocation4 + $0x28] sm:$0xff] %vm713, %v1217
        %1230 = vst.msk [vmem:[#allocation4 + $0x30] sm:$0xff] %vm713, %v1218
        %1231 = vst.msk [vmem:[#allocation4 + $0x38] sm:$0xff] %vm713, %v1219
        %1232 = vst.msk [vmem:[#allocation4 + $0x40] sm:$0xff] %vm713, %v1220
        %1233 = vst.msk [vmem:[#allocation4 + $0x48] sm:$0xff] %vm713, %v1221
        %1234 = vst.msk [vmem:[#allocation4 + $0x50] sm:$0xff] %vm713, %v1222
        %1235 = vst.msk [vmem:[#allocation4 + $0x58] sm:$0xff] %vm713, %v1223
        %s1236 = scalar_lea.vmem [#allocation2], 24
        %v1237 = vld [vmem:[%s1236] sm:$0xff]
        %v1238 = vld [vmem:[%s1236 + $0x8] sm:$0xf]
        %v1239 = vld [vmem:[%s1236 + $0xc] sm:$0xff]
        %v1240 = vld [vmem:[%s1236 + $0x14] sm:$0xf]
        %v1241 = vld [vmem:[%s1236 + $0x18] sm:$0xff]
        %v1242 = vld [vmem:[%s1236 + $0x20] sm:$0xf]
        %v1243 = vld [vmem:[%s1236 + $0x24] sm:$0xff]
        %v1244 = vld [vmem:[%s1236 + $0x2c] sm:$0xf]
        %v1245 = vld [vmem:[%s1236 + $0x30] sm:$0xff]
        %v1246 = vld [vmem:[%s1236 + $0x38] sm:$0xf]
        %v1247 = vld [vmem:[%s1236 + $0x3c] sm:$0xff]
        %v1248 = vld [vmem:[%s1236 + $0x44] sm:$0xf]
        %v1249 = vld [vmem:[%s1236 + $0x48] sm:$0xff]
        %v1250 = vld [vmem:[%s1236 + $0x50] sm:$0xf]
        %v1251 = vld [vmem:[%s1236 + $0x54] sm:$0xff]
        %v1252 = vld [vmem:[%s1236 + $0x5c] sm:$0xf]
        %v1253 = vld [vmem:[%s1236 + $0x60] sm:$0xff]
        %v1254 = vld [vmem:[%s1236 + $0x68] sm:$0xf]
        %v1255 = vld [vmem:[%s1236 + $0x6c] sm:$0xff]
        %v1256 = vld [vmem:[%s1236 + $0x74] sm:$0xf]
        %v1257 = vld [vmem:[%s1236 + $0x78] sm:$0xff]
        %v1258 = vld [vmem:[%s1236 + $0x80] sm:$0xf]
        %v1259 = vld [vmem:[%s1236 + $0x84] sm:$0xff]
        %v1260 = vld [vmem:[%s1236 + $0x8c] sm:$0xf]
        %v1261 = vld [vmem:[#allocation4] sm:$0xff]
        %v1262 = vld [vmem:[#allocation4 + $0x8] sm:$0xff]
        %v1263 = vld [vmem:[#allocation4 + $0x10] sm:$0xff]
        %v1264 = vld [vmem:[#allocation4 + $0x18] sm:$0xff]
        %v1265 = vld [vmem:[#allocation4 + $0x20] sm:$0xff]
        %v1266 = vld [vmem:[#allocation4 + $0x28] sm:$0xff]
        %v1267 = vld [vmem:[#allocation4 + $0x30] sm:$0xff]
        %v1268 = vld [vmem:[#allocation4 + $0x38] sm:$0xff]
        %v1269 = vld [vmem:[#allocation4 + $0x40] sm:$0xff]
        %v1270 = vld [vmem:[#allocation4 + $0x48] sm:$0xff]
        %v1271 = vld [vmem:[#allocation4 + $0x50] sm:$0xff]
        %v1272 = vld [vmem:[#allocation4 + $0x58] sm:$0xff]
        %s1273 = scalar_lea.vmem %s1, 192
        %v1274 = vld [vmem:[%s1273] sm:$0xf]
        %v1275 = vld [vmem:[%s1273 + $0x4] sm:$0xf]
        %v1276 = vld [vmem:[%s1273 + $0x8] sm:$0xf]
        %v1277 = vld [vmem:[%s1273 + $0xc] sm:$0xf]
        %v1278 = vld [vmem:[%s1273 + $0x10] sm:$0xf]
        %v1279 = vld [vmem:[%s1273 + $0x14] sm:$0xf]
        %v1280 = vld [vmem:[%s1273 + $0x18] sm:$0xf]
        %v1281 = vld [vmem:[%s1273 + $0x1c] sm:$0xf]
        %v1282 = vld [vmem:[%s1273 + $0x20] sm:$0xf]
        %v1283 = vld [vmem:[%s1273 + $0x24] sm:$0xf]
        %v1284 = vld [vmem:[%s1273 + $0x28] sm:$0xf]
        %v1285 = vld [vmem:[%s1273 + $0x2c] sm:$0xf]
        %v1286 = vld [vmem:[%s1273 + $0x30] sm:$0xf]
        %v1287 = vld [vmem:[%s1273 + $0x34] sm:$0xf]
        %v1288 = vld [vmem:[%s1273 + $0x38] sm:$0xf]
        %v1289 = vld [vmem:[%s1273 + $0x3c] sm:$0xf]
        %v1290 = vld [vmem:[%s1273 + $0x40] sm:$0xf]
        %v1291 = vld [vmem:[%s1273 + $0x44] sm:$0xf]
        %v1292 = vld [vmem:[%s1273 + $0x48] sm:$0xf]
        %v1293 = vld [vmem:[%s1273 + $0x4c] sm:$0xf]
        %v1294 = vld [vmem:[%s1273 + $0x50] sm:$0xf]
        %v1295 = vld [vmem:[%s1273 + $0x54] sm:$0xf]
        %v1296 = vld [vmem:[%s1273 + $0x58] sm:$0xf]
        %v1297 = vld [vmem:[%s1273 + $0x5c] sm:$0xf]
        %v1298 = vld [vmem:[%s1273 + $0x60] sm:$0xf]
        %v1299 = vld [vmem:[%s1273 + $0x64] sm:$0xf]
        %v1300 = vld [vmem:[%s1273 + $0x68] sm:$0xf]
        %v1301 = vld [vmem:[%s1273 + $0x6c] sm:$0xf]
        %v1302 = vld [vmem:[%s1273 + $0x70] sm:$0xf]
        %v1303 = vld [vmem:[%s1273 + $0x74] sm:$0xf]
        %v1304 = vld [vmem:[%s1273 + $0x78] sm:$0xf]
        %v1305 = vld [vmem:[%s1273 + $0x7c] sm:$0xf]
        %v1306 = vld [vmem:[%s1273 + $0x80] sm:$0xf]
        %v1307 = vld [vmem:[%s1273 + $0x84] sm:$0xf]
        %v1308 = vld [vmem:[%s1273 + $0x88] sm:$0xf]
        %v1309 = vld [vmem:[%s1273 + $0x8c] sm:$0xf]
        %v1310 = vld [vmem:[%s1273 + $0x90] sm:$0xf]
        %v1311 = vld [vmem:[%s1273 + $0x94] sm:$0xf]
        %v1312 = vld [vmem:[%s1273 + $0x98] sm:$0xf]
        %v1313 = vld [vmem:[%s1273 + $0x9c] sm:$0xf]
        %v1314 = vld [vmem:[%s1273 + $0xa0] sm:$0xf]
        %v1315 = vld [vmem:[%s1273 + $0xa4] sm:$0xf]
        %v1316 = vld [vmem:[%s1273 + $0xa8] sm:$0xf]
        %v1317 = vld [vmem:[%s1273 + $0xac] sm:$0xf]
        %v1318 = vld [vmem:[%s1273 + $0xb0] sm:$0xf]
        %v1319 = vld [vmem:[%s1273 + $0xb4] sm:$0xf]
        %v1320 = vld [vmem:[%s1273 + $0xb8] sm:$0xf]
        %v1321 = vld [vmem:[%s1273 + $0xbc] sm:$0xf]
        %v1346 = vunpack.c.l.b16 %v1237
        %v1347 = vunpack.c.h.b16 %v1237
        %v1348 = vunpack.c.l.b16 %v1238
        %v1349 = vunpack.c.l.b16 %v1239
        %v1350 = vunpack.c.h.b16 %v1239
        %v1351 = vunpack.c.l.b16 %v1240
        %v1352 = vunpack.c.l.b16 %v1241
        %v1353 = vunpack.c.h.b16 %v1241
        %v1354 = vunpack.c.l.b16 %v1242
        %v1355 = vunpack.c.l.b16 %v1243
        %v1356 = vunpack.c.h.b16 %v1243
        %v1357 = vunpack.c.l.b16 %v1244
        %v1358 = vunpack.c.l.b16 %v1245
        %v1359 = vunpack.c.h.b16 %v1245
        %v1360 = vunpack.c.l.b16 %v1246
        %v1361 = vunpack.c.l.b16 %v1247
        %v1362 = vunpack.c.h.b16 %v1247
        %v1363 = vunpack.c.l.b16 %v1248
        %v1364 = vunpack.c.l.b16 %v1249
        %v1365 = vunpack.c.h.b16 %v1249
        %v1366 = vunpack.c.l.b16 %v1250
        %v1367 = vunpack.c.l.b16 %v1251
        %v1368 = vunpack.c.h.b16 %v1251
        %v1369 = vunpack.c.l.b16 %v1252
        %v1370 = vunpack.c.l.b16 %v1253
        %v1371 = vunpack.c.h.b16 %v1253
        %v1372 = vunpack.c.l.b16 %v1254
        %v1373 = vunpack.c.l.b16 %v1255
        %v1374 = vunpack.c.h.b16 %v1255
        %v1375 = vunpack.c.l.b16 %v1256
        %v1376 = vunpack.c.l.b16 %v1257
        %v1377 = vunpack.c.h.b16 %v1257
        %v1378 = vunpack.c.l.b16 %v1258
        %v1379 = vunpack.c.l.b16 %v1259
        %v1380 = vunpack.c.h.b16 %v1259
        %v1381 = vunpack.c.l.b16 %v1260
        %v1382 = vpack.c.b16 %v1349, %v1346
        %v1383 = vpack.c.b16 %v1350, %v1347
        %v1384 = vpack.c.b16 %v1351, %v1348
        %v1385 = vpack.c.b16 %v1355, %v1352
        %v1386 = vpack.c.b16 %v1356, %v1353
        %v1387 = vpack.c.b16 %v1357, %v1354
        %v1388 = vpack.c.b16 %v1361, %v1358
        %v1389 = vpack.c.b16 %v1362, %v1359
        %v1390 = vpack.c.b16 %v1363, %v1360
        %v1391 = vpack.c.b16 %v1367, %v1364
        %v1392 = vpack.c.b16 %v1368, %v1365
        %v1393 = vpack.c.b16 %v1369, %v1366
        %v1394 = vpack.c.b16 %v1373, %v1370
        %v1395 = vpack.c.b16 %v1374, %v1371
        %v1396 = vpack.c.b16 %v1375, %v1372
        %v1397 = vpack.c.b16 %v1379, %v1376
        %v1398 = vpack.c.b16 %v1380, %v1377
        %v1399 = vpack.c.b16 %v1381, %v1378
        %v1466 = vunpack.c.l.b16 %v1274
        %v1467 = vunpack.c.l.b16 %v1275
        %v1468 = vunpack.c.l.b16 %v1276
        %v1469 = vunpack.c.l.b16 %v1277
        %v1470 = vunpack.c.l.b16 %v1278
        %v1471 = vunpack.c.l.b16 %v1279
        %v1472 = vunpack.c.l.b16 %v1280
        %v1473 = vunpack.c.l.b16 %v1281
        %v1474 = vunpack.c.l.b16 %v1282
        %v1475 = vunpack.c.l.b16 %v1283
        %v1476 = vunpack.c.l.b16 %v1284
        %v1477 = vunpack.c.l.b16 %v1285
        %v1478 = vunpack.c.l.b16 %v1286
        %v1479 = vunpack.c.l.b16 %v1287
        %v1480 = vunpack.c.l.b16 %v1288
        %v1481 = vunpack.c.l.b16 %v1289
        %v1482 = vunpack.c.l.b16 %v1290
        %v1483 = vunpack.c.l.b16 %v1291
        %v1484 = vunpack.c.l.b16 %v1292
        %v1485 = vunpack.c.l.b16 %v1293
        %v1486 = vunpack.c.l.b16 %v1294
        %v1487 = vunpack.c.l.b16 %v1295
        %v1488 = vunpack.c.l.b16 %v1296
        %v1489 = vunpack.c.l.b16 %v1297
        %v1490 = vunpack.c.l.b16 %v1298
        %v1491 = vunpack.c.l.b16 %v1299
        %v1492 = vunpack.c.l.b16 %v1300
        %v1493 = vunpack.c.l.b16 %v1301
        %v1494 = vunpack.c.l.b16 %v1302
        %v1495 = vunpack.c.l.b16 %v1303
        %v1496 = vunpack.c.l.b16 %v1304
        %v1497 = vunpack.c.l.b16 %v1305
        %v1498 = vunpack.c.l.b16 %v1306
        %v1499 = vunpack.c.l.b16 %v1307
        %v1500 = vunpack.c.l.b16 %v1308
        %v1501 = vunpack.c.l.b16 %v1309
        %v1502 = vunpack.c.l.b16 %v1310
        %v1503 = vunpack.c.l.b16 %v1311
        %v1504 = vunpack.c.l.b16 %v1312
        %v1505 = vunpack.c.l.b16 %v1313
        %v1506 = vunpack.c.l.b16 %v1314
        %v1507 = vunpack.c.l.b16 %v1315
        %v1508 = vunpack.c.l.b16 %v1316
        %v1509 = vunpack.c.l.b16 %v1317
        %v1510 = vunpack.c.l.b16 %v1318
        %v1511 = vunpack.c.l.b16 %v1319
        %v1512 = vunpack.c.l.b16 %v1320
        %v1513 = vunpack.c.l.b16 %v1321
        %v1514 = vpack.c.b16 %v1467, %v1466
        %v1515 = vpack.c.b16 %v1469, %v1468
        %v1516 = vpack.c.b16 %v1471, %v1470
        %v1517 = vpack.c.b16 %v1473, %v1472
        %v1518 = vpack.c.b16 %v1475, %v1474
        %v1519 = vpack.c.b16 %v1477, %v1476
        %v1520 = vpack.c.b16 %v1479, %v1478
        %v1521 = vpack.c.b16 %v1481, %v1480
        %v1522 = vpack.c.b16 %v1483, %v1482
        %v1523 = vpack.c.b16 %v1485, %v1484
        %v1524 = vpack.c.b16 %v1487, %v1486
        %v1525 = vpack.c.b16 %v1489, %v1488
        %v1526 = vpack.c.b16 %v1491, %v1490
        %v1527 = vpack.c.b16 %v1493, %v1492
        %v1528 = vpack.c.b16 %v1495, %v1494
        %v1529 = vpack.c.b16 %v1497, %v1496
        %v1530 = vpack.c.b16 %v1499, %v1498
        %v1531 = vpack.c.b16 %v1501, %v1500
        %v1532 = vpack.c.b16 %v1503, %v1502
        %v1533 = vpack.c.b16 %v1505, %v1504
        %v1534 = vpack.c.b16 %v1507, %v1506
        %v1535 = vpack.c.b16 %v1509, %v1508
        %v1536 = vpack.c.b16 %v1511, %v1510
        %v1537 = vpack.c.b16 %v1513, %v1512
        %1562 = vmatprep.subr.bf16.mxu0 0
        %1563 = vmatpush1.bf16.msra.mxu0 %v1521
        %1564 = vmatprep.subr.bf16.mxu0 0
        %1565 = vmatpush1.bf16.msra.mxu0 %v1520
        %1566 = vmatprep.subr.bf16.mxu0 0
        %1567 = vmatpush1.bf16.msra.mxu0 %v1519
        %1568 = vmatprep.subr.bf16.mxu0 0
        %1569 = vmatpush1.bf16.msra.mxu0 %v1518
        %1570 = vmatprep.subr.bf16.mxu0 0
        %1571 = vmatpush1.bf16.msra.mxu0 %v1517
        %1572 = vmatprep.subr.bf16.mxu0 0
        %1573 = vmatpush1.bf16.msra.mxu0 %v1516
        %1574 = vmatprep.subr.bf16.mxu0 0
        %1575 = vmatpush1.bf16.msra.mxu0 %v1515
        %1576 = vmatprep.subr.bf16.mxu0 0
        %1577 = vmatpush1.bf16.msra.mxu0 %v1514
        %1578 = vmatprep.subr.bf16.mxu0 0
        %1579 = vmatpush2.bf16.msra.mxu0 %v1529
        %1580 = vmatprep.subr.bf16.mxu0 0
        %1581 = vmatpush2.bf16.msra.mxu0 %v1528
        %1582 = vmatprep.subr.bf16.mxu0 0
        %1583 = vmatpush2.bf16.msra.mxu0 %v1527
        %1584 = vmatprep.subr.bf16.mxu0 0
        %1585 = vmatpush2.bf16.msra.mxu0 %v1526
        %1586 = vmatprep.subr.bf16.mxu0 0
        %1587 = vmatpush2.bf16.msra.mxu0 %v1525
        %1588 = vmatprep.subr.bf16.mxu0 0
        %1589 = vmatpush2.bf16.msra.mxu0 %v1524
        %1590 = vmatprep.subr.bf16.mxu0 0
        %1591 = vmatpush2.bf16.msra.mxu0 %v1523
        %1592 = vmatprep.subr.bf16.mxu0 0
        %1593 = vmatpush2.bf16.msra.mxu0 %v1522
        %1594 = vmatprep.mubr.bf16.mxu0 %v1383
        %1595 = vmatmul.mubr.bf16.gmra.mxu0 %v1382
        %v1596 = vpop.f32.mrf.mxu0
        %v1597 = vadd.f32 0.0, %v1596
        %v1598 = vpop.f32.mrf.mxu0
        %v1599 = vpop.f32.mrf.mxu0
        %v1600 = vadd.f32 0.0, %v1599
        %v1601 = vpop.f32.mrf.mxu0
        %1602 = vmatprep.mubr.bf16.mxu0 %v1386
        %1603 = vmatmul.mubr.bf16.gmra.mxu0 %v1385
        %v1604 = vpop.f32.mrf.mxu0
        %v1605 = vadd.f32 0.0, %v1604
        %v1606 = vpop.f32.mrf.mxu0
        %v1607 = vpop.f32.mrf.mxu0
        %v1608 = vadd.f32 0.0, %v1607
        %v1609 = vpop.f32.mrf.mxu0
        %1610 = vmatprep.mubr.bf16.mxu0 %v1389
        %1611 = vmatmul.mubr.bf16.gmra.mxu0 %v1388
        %v1612 = vpop.f32.mrf.mxu0
        %v1613 = vadd.f32 0.0, %v1612
        %v1614 = vpop.f32.mrf.mxu0
        %v1615 = vpop.f32.mrf.mxu0
        %v1616 = vadd.f32 0.0, %v1615
        %v1617 = vpop.f32.mrf.mxu0
        %1618 = vmatprep.mubr.bf16.mxu0 %v1392
        %1619 = vmatmul.mubr.bf16.gmra.mxu0 %v1391
        %v1620 = vpop.f32.mrf.mxu0
        %v1621 = vadd.f32 0.0, %v1620
        %v1622 = vpop.f32.mrf.mxu0
        %v1623 = vpop.f32.mrf.mxu0
        %v1624 = vadd.f32 0.0, %v1623
        %v1625 = vpop.f32.mrf.mxu0
        %1626 = vmatprep.mubr.bf16.mxu0 %v1395
        %1627 = vmatmul.mubr.bf16.gmra.mxu0 %v1394
        %v1628 = vpop.f32.mrf.mxu0
        %v1629 = vadd.f32 0.0, %v1628
        %v1630 = vpop.f32.mrf.mxu0
        %v1631 = vpop.f32.mrf.mxu0
        %v1632 = vadd.f32 0.0, %v1631
        %v1633 = vpop.f32.mrf.mxu0
        %1634 = vmatprep.mubr.bf16.mxu0 %v1398
        %1635 = vmatmul.mubr.bf16.gmra.mxu0 %v1397
        %v1636 = vpop.f32.mrf.mxu0
        %v1637 = vadd.f32 0.0, %v1636
        %v1638 = vpop.f32.mrf.mxu0
        %v1639 = vpop.f32.mrf.mxu0
        %v1640 = vadd.f32 0.0, %v1639
        %v1641 = vpop.f32.mrf.mxu0
        %1642 = vdwg.mxu0
        %1643 = vmatprep.subr.bf16.mxu0 0
        %1644 = vmatpush1.bf16.msra.mxu0 %v1537
        %1645 = vmatprep.subr.bf16.mxu0 0
        %1646 = vmatpush1.bf16.msra.mxu0 %v1536
        %1647 = vmatprep.subr.bf16.mxu0 0
        %1648 = vmatpush1.bf16.msra.mxu0 %v1535
        %1649 = vmatprep.subr.bf16.mxu0 0
        %1650 = vmatpush1.bf16.msra.mxu0 %v1534
        %1651 = vmatprep.subr.bf16.mxu0 0
        %1652 = vmatpush1.bf16.msra.mxu0 %v1533
        %1653 = vmatprep.subr.bf16.mxu0 0
        %1654 = vmatpush1.bf16.msra.mxu0 %v1532
        %1655 = vmatprep.subr.bf16.mxu0 0
        %1656 = vmatpush1.bf16.msra.mxu0 %v1531
        %1657 = vmatprep.subr.bf16.mxu0 0
        %1658 = vmatpush1.bf16.msra.mxu0 %v1530
        %1659 = vmatprep.subr.bf16.mxu0 0
        %1660 = vmatpush2.bf16.msra.mxu0 0
        %1661 = vmatprep.subr.bf16.mxu0 0
        %1662 = vmatpush2.bf16.msra.mxu0 0
        %1663 = vmatprep.subr.bf16.mxu0 0
        %1664 = vmatpush2.bf16.msra.mxu0 0
        %1665 = vmatprep.subr.bf16.mxu0 0
        %1666 = vmatpush2.bf16.msra.mxu0 0
        %1667 = vmatprep.subr.bf16.mxu0 0
        %1668 = vmatpush2.bf16.msra.mxu0 0
        %1669 = vmatprep.subr.bf16.mxu0 0
        %1670 = vmatpush2.bf16.msra.mxu0 0
        %1671 = vmatprep.subr.bf16.mxu0 0
        %1672 = vmatpush2.bf16.msra.mxu0 0
        %1673 = vmatprep.subr.bf16.mxu0 0
        %1674 = vmatpush2.bf16.msra.mxu0 0
        %1675 = vmatprep.mubr.bf16.mxu0 0
        %1676 = vmatmul.mubr.bf16.gmra.mxu0 %v1384
        %v1677 = vpop.f32.mrf.mxu0
        %v1678 = vadd.f32 %v1597, %v1677
        %v1679 = vpop.f32.mrf.mxu0
        %v1680 = vpop.f32.mrf.mxu0
        %v1681 = vadd.f32 %v1600, %v1680
        %v1682 = vpop.f32.mrf.mxu0
        %1683 = vmatprep.mubr.bf16.mxu0 0
        %1684 = vmatmul.mubr.bf16.gmra.mxu0 %v1387
        %v1685 = vpop.f32.mrf.mxu0
        %v1686 = vadd.f32 %v1605, %v1685
        %v1687 = vpop.f32.mrf.mxu0
        %v1688 = vpop.f32.mrf.mxu0
        %v1689 = vadd.f32 %v1608, %v1688
        %v1690 = vpop.f32.mrf.mxu0
        %1691 = vmatprep.mubr.bf16.mxu0 0
        %1692 = vmatmul.mubr.bf16.gmra.mxu0 %v1390
        %v1693 = vpop.f32.mrf.mxu0
        %v1694 = vadd.f32 %v1613, %v1693
        %v1695 = vpop.f32.mrf.mxu0
        %v1696 = vpop.f32.mrf.mxu0
        %v1697 = vadd.f32 %v1616, %v1696
        %v1698 = vpop.f32.mrf.mxu0
        %1699 = vmatprep.mubr.bf16.mxu0 0
        %1700 = vmatmul.mubr.bf16.gmra.mxu0 %v1393
        %v1701 = vpop.f32.mrf.mxu0
        %v1702 = vadd.f32 %v1621, %v1701
        %v1703 = vpop.f32.mrf.mxu0
        %v1704 = vpop.f32.mrf.mxu0
        %v1705 = vadd.f32 %v1624, %v1704
        %v1706 = vpop.f32.mrf.mxu0
        %1707 = vmatprep.mubr.bf16.mxu0 0
        %1708 = vmatmul.mubr.bf16.gmra.mxu0 %v1396
        %v1709 = vpop.f32.mrf.mxu0
        %v1710 = vadd.f32 %v1629, %v1709
        %v1711 = vpop.f32.mrf.mxu0
        %v1712 = vpop.f32.mrf.mxu0
        %v1713 = vadd.f32 %v1632, %v1712
        %v1714 = vpop.f32.mrf.mxu0
        %1715 = vmatprep.mubr.bf16.mxu0 0
        %1716 = vmatmul.mubr.bf16.gmra.mxu0 %v1399
        %v1717 = vpop.f32.mrf.mxu0
        %v1718 = vadd.f32 %v1637, %v1717
        %v1719 = vpop.f32.mrf.mxu0
        %v1720 = vpop.f32.mrf.mxu0
        %v1721 = vadd.f32 %v1640, %v1720
        %v1722 = vpop.f32.mrf.mxu0
        %1723 = vdwg.mxu0
        %v1724 = vadd.f32 %v1261, %v1678
        %v1725 = vadd.f32 %v1262, %v1681
        %v1726 = vadd.f32 %v1263, %v1686
        %v1727 = vadd.f32 %v1264, %v1689
        %v1728 = vadd.f32 %v1265, %v1694
        %v1729 = vadd.f32 %v1266, %v1697
        %v1730 = vadd.f32 %v1267, %v1702
        %v1731 = vadd.f32 %v1268, %v1705
        %v1732 = vadd.f32 %v1269, %v1710
        %v1733 = vadd.f32 %v1270, %v1713
        %v1734 = vadd.f32 %v1271, %v1718
        %v1735 = vadd.f32 %v1272, %v1721
        %1736 = vst.msk [vmem:[#allocation4] sm:$0xff] %vm713, %v1724
        %1737 = vst.msk [vmem:[#allocation4 + $0x8] sm:$0xff] %vm713, %v1725
        %1738 = vst.msk [vmem:[#allocation4 + $0x10] sm:$0xff] %vm713, %v1726
        %1739 = vst.msk [vmem:[#allocation4 + $0x18] sm:$0xff] %vm713, %v1727
        %1740 = vst.msk [vmem:[#allocation4 + $0x20] sm:$0xff] %vm713, %v1728
        %1741 = vst.msk [vmem:[#allocation4 + $0x28] sm:$0xff] %vm713, %v1729
        %1742 = vst.msk [vmem:[#allocation4 + $0x30] sm:$0xff] %vm713, %v1730
        %1743 = vst.msk [vmem:[#allocation4 + $0x38] sm:$0xff] %vm713, %v1731
        %1744 = vst.msk [vmem:[#allocation4 + $0x40] sm:$0xff] %vm713, %v1732
        %1745 = vst.msk [vmem:[#allocation4 + $0x48] sm:$0xff] %vm713, %v1733
        %1746 = vst.msk [vmem:[#allocation4 + $0x50] sm:$0xff] %vm713, %v1734
        %1747 = vst.msk [vmem:[#allocation4 + $0x58] sm:$0xff] %vm713, %v1735
        %s1748 = scalar_lea.vmem [#allocation2], 48
        %v1749 = vld [vmem:[%s1748] sm:$0xff]
        %v1750 = vld [vmem:[%s1748 + $0x8] sm:$0xf]
        %v1751 = vld [vmem:[%s1748 + $0xc] sm:$0xff]
        %v1752 = vld [vmem:[%s1748 + $0x14] sm:$0xf]
        %v1753 = vld [vmem:[%s1748 + $0x18] sm:$0xff]
        %v1754 = vld [vmem:[%s1748 + $0x20] sm:$0xf]
        %v1755 = vld [vmem:[%s1748 + $0x24] sm:$0xff]
        %v1756 = vld [vmem:[%s1748 + $0x2c] sm:$0xf]
        %v1757 = vld [vmem:[%s1748 + $0x30] sm:$0xff]
        %v1758 = vld [vmem:[%s1748 + $0x38] sm:$0xf]
        %v1759 = vld [vmem:[%s1748 + $0x3c] sm:$0xff]
        %v1760 = vld [vmem:[%s1748 + $0x44] sm:$0xf]
        %v1761 = vld [vmem:[%s1748 + $0x48] sm:$0xff]
        %v1762 = vld [vmem:[%s1748 + $0x50] sm:$0xf]
        %v1763 = vld [vmem:[%s1748 + $0x54] sm:$0xff]
        %v1764 = vld [vmem:[%s1748 + $0x5c] sm:$0xf]
        %v1765 = vld [vmem:[%s1748 + $0x60] sm:$0xff]
        %v1766 = vld [vmem:[%s1748 + $0x68] sm:$0xf]
        %v1767 = vld [vmem:[%s1748 + $0x6c] sm:$0xff]
        %v1768 = vld [vmem:[%s1748 + $0x74] sm:$0xf]
        %v1769 = vld [vmem:[%s1748 + $0x78] sm:$0xff]
        %v1770 = vld [vmem:[%s1748 + $0x80] sm:$0xf]
        %v1771 = vld [vmem:[%s1748 + $0x84] sm:$0xff]
        %v1772 = vld [vmem:[%s1748 + $0x8c] sm:$0xf]
        %v1773 = vld [vmem:[#allocation4] sm:$0xff]
        %v1774 = vld [vmem:[#allocation4 + $0x8] sm:$0xff]
        %v1775 = vld [vmem:[#allocation4 + $0x10] sm:$0xff]
        %v1776 = vld [vmem:[#allocation4 + $0x18] sm:$0xff]
        %v1777 = vld [vmem:[#allocation4 + $0x20] sm:$0xff]
        %v1778 = vld [vmem:[#allocation4 + $0x28] sm:$0xff]
        %v1779 = vld [vmem:[#allocation4 + $0x30] sm:$0xff]
        %v1780 = vld [vmem:[#allocation4 + $0x38] sm:$0xff]
        %v1781 = vld [vmem:[#allocation4 + $0x40] sm:$0xff]
        %v1782 = vld [vmem:[#allocation4 + $0x48] sm:$0xff]
        %v1783 = vld [vmem:[#allocation4 + $0x50] sm:$0xff]
        %v1784 = vld [vmem:[#allocation4 + $0x58] sm:$0xff]
        %s1785 = scalar_lea.vmem %s1, 384
        %v1786 = vld [vmem:[%s1785] sm:$0xf]
        %v1787 = vld [vmem:[%s1785 + $0x4] sm:$0xf]
        %v1788 = vld [vmem:[%s1785 + $0x8] sm:$0xf]
        %v1789 = vld [vmem:[%s1785 + $0xc] sm:$0xf]
        %v1790 = vld [vmem:[%s1785 + $0x10] sm:$0xf]
        %v1791 = vld [vmem:[%s1785 + $0x14] sm:$0xf]
        %v1792 = vld [vmem:[%s1785 + $0x18] sm:$0xf]
        %v1793 = vld [vmem:[%s1785 + $0x1c] sm:$0xf]
        %v1794 = vld [vmem:[%s1785 + $0x20] sm:$0xf]
        %v1795 = vld [vmem:[%s1785 + $0x24] sm:$0xf]
        %v1796 = vld [vmem:[%s1785 + $0x28] sm:$0xf]
        %v1797 = vld [vmem:[%s1785 + $0x2c] sm:$0xf]
        %v1798 = vld [vmem:[%s1785 + $0x30] sm:$0xf]
        %v1799 = vld [vmem:[%s1785 + $0x34] sm:$0xf]
        %v1800 = vld [vmem:[%s1785 + $0x38] sm:$0xf]
        %v1801 = vld [vmem:[%s1785 + $0x3c] sm:$0xf]
        %v1802 = vld [vmem:[%s1785 + $0x40] sm:$0xf]
        %v1803 = vld [vmem:[%s1785 + $0x44] sm:$0xf]
        %v1804 = vld [vmem:[%s1785 + $0x48] sm:$0xf]
        %v1805 = vld [vmem:[%s1785 + $0x4c] sm:$0xf]
        %v1806 = vld [vmem:[%s1785 + $0x50] sm:$0xf]
        %v1807 = vld [vmem:[%s1785 + $0x54] sm:$0xf]
        %v1808 = vld [vmem:[%s1785 + $0x58] sm:$0xf]
        %v1809 = vld [vmem:[%s1785 + $0x5c] sm:$0xf]
        %v1810 = vld [vmem:[%s1785 + $0x60] sm:$0xf]
        %v1811 = vld [vmem:[%s1785 + $0x64] sm:$0xf]
        %v1812 = vld [vmem:[%s1785 + $0x68] sm:$0xf]
        %v1813 = vld [vmem:[%s1785 + $0x6c] sm:$0xf]
        %v1814 = vld [vmem:[%s1785 + $0x70] sm:$0xf]
        %v1815 = vld [vmem:[%s1785 + $0x74] sm:$0xf]
        %v1816 = vld [vmem:[%s1785 + $0x78] sm:$0xf]
        %v1817 = vld [vmem:[%s1785 + $0x7c] sm:$0xf]
        %v1818 = vld [vmem:[%s1785 + $0x80] sm:$0xf]
        %v1819 = vld [vmem:[%s1785 + $0x84] sm:$0xf]
        %v1820 = vld [vmem:[%s1785 + $0x88] sm:$0xf]
        %v1821 = vld [vmem:[%s1785 + $0x8c] sm:$0xf]
        %v1822 = vld [vmem:[%s1785 + $0x90] sm:$0xf]
        %v1823 = vld [vmem:[%s1785 + $0x94] sm:$0xf]
        %v1824 = vld [vmem:[%s1785 + $0x98] sm:$0xf]
        %v1825 = vld [vmem:[%s1785 + $0x9c] sm:$0xf]
        %v1826 = vld [vmem:[%s1785 + $0xa0] sm:$0xf]
        %v1827 = vld [vmem:[%s1785 + $0xa4] sm:$0xf]
        %v1828 = vld [vmem:[%s1785 + $0xa8] sm:$0xf]
        %v1829 = vld [vmem:[%s1785 + $0xac] sm:$0xf]
        %v1830 = vld [vmem:[%s1785 + $0xb0] sm:$0xf]
        %v1831 = vld [vmem:[%s1785 + $0xb4] sm:$0xf]
        %v1832 = vld [vmem:[%s1785 + $0xb8] sm:$0xf]
        %v1833 = vld [vmem:[%s1785 + $0xbc] sm:$0xf]
        %v1858 = vunpack.c.l.b16 %v1749
        %v1859 = vunpack.c.h.b16 %v1749
        %v1860 = vunpack.c.l.b16 %v1750
        %v1861 = vunpack.c.l.b16 %v1751
        %v1862 = vunpack.c.h.b16 %v1751
        %v1863 = vunpack.c.l.b16 %v1752
        %v1864 = vunpack.c.l.b16 %v1753
        %v1865 = vunpack.c.h.b16 %v1753
        %v1866 = vunpack.c.l.b16 %v1754
        %v1867 = vunpack.c.l.b16 %v1755
        %v1868 = vunpack.c.h.b16 %v1755
        %v1869 = vunpack.c.l.b16 %v1756
        %v1870 = vunpack.c.l.b16 %v1757
        %v1871 = vunpack.c.h.b16 %v1757
        %v1872 = vunpack.c.l.b16 %v1758
        %v1873 = vunpack.c.l.b16 %v1759
        %v1874 = vunpack.c.h.b16 %v1759
        %v1875 = vunpack.c.l.b16 %v1760
        %v1876 = vunpack.c.l.b16 %v1761
        %v1877 = vunpack.c.h.b16 %v1761
        %v1878 = vunpack.c.l.b16 %v1762
        %v1879 = vunpack.c.l.b16 %v1763
        %v1880 = vunpack.c.h.b16 %v1763
        %v1881 = vunpack.c.l.b16 %v1764
        %v1882 = vunpack.c.l.b16 %v1765
        %v1883 = vunpack.c.h.b16 %v1765
        %v1884 = vunpack.c.l.b16 %v1766
        %v1885 = vunpack.c.l.b16 %v1767
        %v1886 = vunpack.c.h.b16 %v1767
        %v1887 = vunpack.c.l.b16 %v1768
        %v1888 = vunpack.c.l.b16 %v1769
        %v1889 = vunpack.c.h.b16 %v1769
        %v1890 = vunpack.c.l.b16 %v1770
        %v1891 = vunpack.c.l.b16 %v1771
        %v1892 = vunpack.c.h.b16 %v1771
        %v1893 = vunpack.c.l.b16 %v1772
        %v1894 = vpack.c.b16 %v1861, %v1858
        %v1895 = vpack.c.b16 %v1862, %v1859
        %v1896 = vpack.c.b16 %v1863, %v1860
        %v1897 = vpack.c.b16 %v1867, %v1864
        %v1898 = vpack.c.b16 %v1868, %v1865
        %v1899 = vpack.c.b16 %v1869, %v1866
        %v1900 = vpack.c.b16 %v1873, %v1870
        %v1901 = vpack.c.b16 %v1874, %v1871
        %v1902 = vpack.c.b16 %v1875, %v1872
        %v1903 = vpack.c.b16 %v1879, %v1876
        %v1904 = vpack.c.b16 %v1880, %v1877
        %v1905 = vpack.c.b16 %v1881, %v1878
        %v1906 = vpack.c.b16 %v1885, %v1882
        %v1907 = vpack.c.b16 %v1886, %v1883
        %v1908 = vpack.c.b16 %v1887, %v1884
        %v1909 = vpack.c.b16 %v1891, %v1888
        %v1910 = vpack.c.b16 %v1892, %v1889
        %v1911 = vpack.c.b16 %v1893, %v1890
        %v1978 = vunpack.c.l.b16 %v1786
        %v1979 = vunpack.c.l.b16 %v1787
        %v1980 = vunpack.c.l.b16 %v1788
        %v1981 = vunpack.c.l.b16 %v1789
        %v1982 = vunpack.c.l.b16 %v1790
        %v1983 = vunpack.c.l.b16 %v1791
        %v1984 = vunpack.c.l.b16 %v1792
        %v1985 = vunpack.c.l.b16 %v1793
        %v1986 = vunpack.c.l.b16 %v1794
        %v1987 = vunpack.c.l.b16 %v1795
        %v1988 = vunpack.c.l.b16 %v1796
        %v1989 = vunpack.c.l.b16 %v1797
        %v1990 = vunpack.c.l.b16 %v1798
        %v1991 = vunpack.c.l.b16 %v1799
        %v1992 = vunpack.c.l.b16 %v1800
        %v1993 = vunpack.c.l.b16 %v1801
        %v1994 = vunpack.c.l.b16 %v1802
        %v1995 = vunpack.c.l.b16 %v1803
        %v1996 = vunpack.c.l.b16 %v1804
        %v1997 = vunpack.c.l.b16 %v1805
        %v1998 = vunpack.c.l.b16 %v1806
        %v1999 = vunpack.c.l.b16 %v1807
        %v2000 = vunpack.c.l.b16 %v1808
        %v2001 = vunpack.c.l.b16 %v1809
        %v2002 = vunpack.c.l.b16 %v1810
        %v2003 = vunpack.c.l.b16 %v1811
        %v2004 = vunpack.c.l.b16 %v1812
        %v2005 = vunpack.c.l.b16 %v1813
        %v2006 = vunpack.c.l.b16 %v1814
        %v2007 = vunpack.c.l.b16 %v1815
        %v2008 = vunpack.c.l.b16 %v1816
        %v2009 = vunpack.c.l.b16 %v1817
        %v2010 = vunpack.c.l.b16 %v1818
        %v2011 = vunpack.c.l.b16 %v1819
        %v2012 = vunpack.c.l.b16 %v1820
        %v2013 = vunpack.c.l.b16 %v1821
        %v2014 = vunpack.c.l.b16 %v1822
        %v2015 = vunpack.c.l.b16 %v1823
        %v2016 = vunpack.c.l.b16 %v1824
        %v2017 = vunpack.c.l.b16 %v1825
        %v2018 = vunpack.c.l.b16 %v1826
        %v2019 = vunpack.c.l.b16 %v1827
        %v2020 = vunpack.c.l.b16 %v1828
        %v2021 = vunpack.c.l.b16 %v1829
        %v2022 = vunpack.c.l.b16 %v1830
        %v2023 = vunpack.c.l.b16 %v1831
        %v2024 = vunpack.c.l.b16 %v1832
        %v2025 = vunpack.c.l.b16 %v1833
        %v2026 = vpack.c.b16 %v1979, %v1978
        %v2027 = vpack.c.b16 %v1981, %v1980
        %v2028 = vpack.c.b16 %v1983, %v1982
        %v2029 = vpack.c.b16 %v1985, %v1984
        %v2030 = vpack.c.b16 %v1987, %v1986
        %v2031 = vpack.c.b16 %v1989, %v1988
        %v2032 = vpack.c.b16 %v1991, %v1990
        %v2033 = vpack.c.b16 %v1993, %v1992
        %v2034 = vpack.c.b16 %v1995, %v1994
        %v2035 = vpack.c.b16 %v1997, %v1996
        %v2036 = vpack.c.b16 %v1999, %v1998
        %v2037 = vpack.c.b16 %v2001, %v2000
        %v2038 = vpack.c.b16 %v2003, %v2002
        %v2039 = vpack.c.b16 %v2005, %v2004
        %v2040 = vpack.c.b16 %v2007, %v2006
        %v2041 = vpack.c.b16 %v2009, %v2008
        %v2042 = vpack.c.b16 %v2011, %v2010
        %v2043 = vpack.c.b16 %v2013, %v2012
        %v2044 = vpack.c.b16 %v2015, %v2014
        %v2045 = vpack.c.b16 %v2017, %v2016
        %v2046 = vpack.c.b16 %v2019, %v2018
        %v2047 = vpack.c.b16 %v2021, %v2020
        %v2048 = vpack.c.b16 %v2023, %v2022
        %v2049 = vpack.c.b16 %v2025, %v2024
        %2074 = vmatprep.subr.bf16.mxu0 0
        %2075 = vmatpush1.bf16.msra.mxu0 %v2033
        %2076 = vmatprep.subr.bf16.mxu0 0
        %2077 = vmatpush1.bf16.msra.mxu0 %v2032
        %2078 = vmatprep.subr.bf16.mxu0 0
        %2079 = vmatpush1.bf16.msra.mxu0 %v2031
        %2080 = vmatprep.subr.bf16.mxu0 0
        %2081 = vmatpush1.bf16.msra.mxu0 %v2030
        %2082 = vmatprep.subr.bf16.mxu0 0
        %2083 = vmatpush1.bf16.msra.mxu0 %v2029
        %2084 = vmatprep.subr.bf16.mxu0 0
        %2085 = vmatpush1.bf16.msra.mxu0 %v2028
        %2086 = vmatprep.subr.bf16.mxu0 0
        %2087 = vmatpush1.bf16.msra.mxu0 %v2027
        %2088 = vmatprep.subr.bf16.mxu0 0
        %2089 = vmatpush1.bf16.msra.mxu0 %v2026
        %2090 = vmatprep.subr.bf16.mxu0 0
        %2091 = vmatpush2.bf16.msra.mxu0 %v2041
        %2092 = vmatprep.subr.bf16.mxu0 0
        %2093 = vmatpush2.bf16.msra.mxu0 %v2040
        %2094 = vmatprep.subr.bf16.mxu0 0
        %2095 = vmatpush2.bf16.msra.mxu0 %v2039
        %2096 = vmatprep.subr.bf16.mxu0 0
        %2097 = vmatpush2.bf16.msra.mxu0 %v2038
        %2098 = vmatprep.subr.bf16.mxu0 0
        %2099 = vmatpush2.bf16.msra.mxu0 %v2037
        %2100 = vmatprep.subr.bf16.mxu0 0
        %2101 = vmatpush2.bf16.msra.mxu0 %v2036
        %2102 = vmatprep.subr.bf16.mxu0 0
        %2103 = vmatpush2.bf16.msra.mxu0 %v2035
        %2104 = vmatprep.subr.bf16.mxu0 0
        %2105 = vmatpush2.bf16.msra.mxu0 %v2034
        %2106 = vmatprep.mubr.bf16.mxu0 %v1895
        %2107 = vmatmul.mubr.bf16.gmra.mxu0 %v1894
        %v2108 = vpop.f32.mrf.mxu0
        %v2109 = vadd.f32 0.0, %v2108
        %v2110 = vpop.f32.mrf.mxu0
        %v2111 = vpop.f32.mrf.mxu0
        %v2112 = vadd.f32 0.0, %v2111
        %v2113 = vpop.f32.mrf.mxu0
        %2114 = vmatprep.mubr.bf16.mxu0 %v1898
        %2115 = vmatmul.mubr.bf16.gmra.mxu0 %v1897
        %v2116 = vpop.f32.mrf.mxu0
        %v2117 = vadd.f32 0.0, %v2116
        %v2118 = vpop.f32.mrf.mxu0
        %v2119 = vpop.f32.mrf.mxu0
        %v2120 = vadd.f32 0.0, %v2119
        %v2121 = vpop.f32.mrf.mxu0
        %2122 = vmatprep.mubr.bf16.mxu0 %v1901
        %2123 = vmatmul.mubr.bf16.gmra.mxu0 %v1900
        %v2124 = vpop.f32.mrf.mxu0
        %v2125 = vadd.f32 0.0, %v2124
        %v2126 = vpop.f32.mrf.mxu0
        %v2127 = vpop.f32.mrf.mxu0
        %v2128 = vadd.f32 0.0, %v2127
        %v2129 = vpop.f32.mrf.mxu0
        %2130 = vmatprep.mubr.bf16.mxu0 %v1904
        %2131 = vmatmul.mubr.bf16.gmra.mxu0 %v1903
        %v2132 = vpop.f32.mrf.mxu0
        %v2133 = vadd.f32 0.0, %v2132
        %v2134 = vpop.f32.mrf.mxu0
        %v2135 = vpop.f32.mrf.mxu0
        %v2136 = vadd.f32 0.0, %v2135
        %v2137 = vpop.f32.mrf.mxu0
        %2138 = vmatprep.mubr.bf16.mxu0 %v1907
        %2139 = vmatmul.mubr.bf16.gmra.mxu0 %v1906
        %v2140 = vpop.f32.mrf.mxu0
        %v2141 = vadd.f32 0.0, %v2140
        %v2142 = vpop.f32.mrf.mxu0
        %v2143 = vpop.f32.mrf.mxu0
        %v2144 = vadd.f32 0.0, %v2143
        %v2145 = vpop.f32.mrf.mxu0
        %2146 = vmatprep.mubr.bf16.mxu0 %v1910
        %2147 = vmatmul.mubr.bf16.gmra.mxu0 %v1909
        %v2148 = vpop.f32.mrf.mxu0
        %v2149 = vadd.f32 0.0, %v2148
        %v2150 = vpop.f32.mrf.mxu0
        %v2151 = vpop.f32.mrf.mxu0
        %v2152 = vadd.f32 0.0, %v2151
        %v2153 = vpop.f32.mrf.mxu0
        %2154 = vdwg.mxu0
        %2155 = vmatprep.subr.bf16.mxu0 0
        %2156 = vmatpush1.bf16.msra.mxu0 %v2049
        %2157 = vmatprep.subr.bf16.mxu0 0
        %2158 = vmatpush1.bf16.msra.mxu0 %v2048
        %2159 = vmatprep.subr.bf16.mxu0 0
        %2160 = vmatpush1.bf16.msra.mxu0 %v2047
        %2161 = vmatprep.subr.bf16.mxu0 0
        %2162 = vmatpush1.bf16.msra.mxu0 %v2046
        %2163 = vmatprep.subr.bf16.mxu0 0
        %2164 = vmatpush1.bf16.msra.mxu0 %v2045
        %2165 = vmatprep.subr.bf16.mxu0 0
        %2166 = vmatpush1.bf16.msra.mxu0 %v2044
        %2167 = vmatprep.subr.bf16.mxu0 0
        %2168 = vmatpush1.bf16.msra.mxu0 %v2043
        %2169 = vmatprep.subr.bf16.mxu0 0
        %2170 = vmatpush1.bf16.msra.mxu0 %v2042
        %2171 = vmatprep.subr.bf16.mxu0 0
        %2172 = vmatpush2.bf16.msra.mxu0 0
        %2173 = vmatprep.subr.bf16.mxu0 0
        %2174 = vmatpush2.bf16.msra.mxu0 0
        %2175 = vmatprep.subr.bf16.mxu0 0
        %2176 = vmatpush2.bf16.msra.mxu0 0
        %2177 = vmatprep.subr.bf16.mxu0 0
        %2178 = vmatpush2.bf16.msra.mxu0 0
        %2179 = vmatprep.subr.bf16.mxu0 0
        %2180 = vmatpush2.bf16.msra.mxu0 0
        %2181 = vmatprep.subr.bf16.mxu0 0
        %2182 = vmatpush2.bf16.msra.mxu0 0
        %2183 = vmatprep.subr.bf16.mxu0 0
        %2184 = vmatpush2.bf16.msra.mxu0 0
        %2185 = vmatprep.subr.bf16.mxu0 0
        %2186 = vmatpush2.bf16.msra.mxu0 0
        %2187 = vmatprep.mubr.bf16.mxu0 0
        %2188 = vmatmul.mubr.bf16.gmra.mxu0 %v1896
        %v2189 = vpop.f32.mrf.mxu0
        %v2190 = vadd.f32 %v2109, %v2189
        %v2191 = vpop.f32.mrf.mxu0
        %v2192 = vpop.f32.mrf.mxu0
        %v2193 = vadd.f32 %v2112, %v2192
        %v2194 = vpop.f32.mrf.mxu0
        %2195 = vmatprep.mubr.bf16.mxu0 0
        %2196 = vmatmul.mubr.bf16.gmra.mxu0 %v1899
        %v2197 = vpop.f32.mrf.mxu0
        %v2198 = vadd.f32 %v2117, %v2197
        %v2199 = vpop.f32.mrf.mxu0
        %v2200 = vpop.f32.mrf.mxu0
        %v2201 = vadd.f32 %v2120, %v2200
        %v2202 = vpop.f32.mrf.mxu0
        %2203 = vmatprep.mubr.bf16.mxu0 0
        %2204 = vmatmul.mubr.bf16.gmra.mxu0 %v1902
        %v2205 = vpop.f32.mrf.mxu0
        %v2206 = vadd.f32 %v2125, %v2205
        %v2207 = vpop.f32.mrf.mxu0
        %v2208 = vpop.f32.mrf.mxu0
        %v2209 = vadd.f32 %v2128, %v2208
        %v2210 = vpop.f32.mrf.mxu0
        %2211 = vmatprep.mubr.bf16.mxu0 0
        %2212 = vmatmul.mubr.bf16.gmra.mxu0 %v1905
        %v2213 = vpop.f32.mrf.mxu0
        %v2214 = vadd.f32 %v2133, %v2213
        %v2215 = vpop.f32.mrf.mxu0
        %v2216 = vpop.f32.mrf.mxu0
        %v2217 = vadd.f32 %v2136, %v2216
        %v2218 = vpop.f32.mrf.mxu0
        %2219 = vmatprep.mubr.bf16.mxu0 0
        %2220 = vmatmul.mubr.bf16.gmra.mxu0 %v1908
        %v2221 = vpop.f32.mrf.mxu0
        %v2222 = vadd.f32 %v2141, %v2221
        %v2223 = vpop.f32.mrf.mxu0
        %v2224 = vpop.f32.mrf.mxu0
        %v2225 = vadd.f32 %v2144, %v2224
        %v2226 = vpop.f32.mrf.mxu0
        %2227 = vmatprep.mubr.bf16.mxu0 0
        %2228 = vmatmul.mubr.bf16.gmra.mxu0 %v1911
        %v2229 = vpop.f32.mrf.mxu0
        %v2230 = vadd.f32 %v2149, %v2229
        %v2231 = vpop.f32.mrf.mxu0
        %v2232 = vpop.f32.mrf.mxu0
        %v2233 = vadd.f32 %v2152, %v2232
        %v2234 = vpop.f32.mrf.mxu0
        %2235 = vdwg.mxu0
        %v2236 = vadd.f32 %v1773, %v2190
        %v2237 = vadd.f32 %v1774, %v2193
        %v2238 = vadd.f32 %v1775, %v2198
        %v2239 = vadd.f32 %v1776, %v2201
        %v2240 = vadd.f32 %v1777, %v2206
        %v2241 = vadd.f32 %v1778, %v2209
        %v2242 = vadd.f32 %v1779, %v2214
        %v2243 = vadd.f32 %v1780, %v2217
        %v2244 = vadd.f32 %v1781, %v2222
        %v2245 = vadd.f32 %v1782, %v2225
        %v2246 = vadd.f32 %v1783, %v2230
        %v2247 = vadd.f32 %v1784, %v2233
        %2248 = vst.msk [vmem:[#allocation4] sm:$0xff] %vm713, %v2236
        %2249 = vst.msk [vmem:[#allocation4 + $0x8] sm:$0xff] %vm713, %v2237
        %2250 = vst.msk [vmem:[#allocation4 + $0x10] sm:$0xff] %vm713, %v2238
        %2251 = vst.msk [vmem:[#allocation4 + $0x18] sm:$0xff] %vm713, %v2239
        %2252 = vst.msk [vmem:[#allocation4 + $0x20] sm:$0xff] %vm713, %v2240
        %2253 = vst.msk [vmem:[#allocation4 + $0x28] sm:$0xff] %vm713, %v2241
        %2254 = vst.msk [vmem:[#allocation4 + $0x30] sm:$0xff] %vm713, %v2242
        %2255 = vst.msk [vmem:[#allocation4 + $0x38] sm:$0xff] %vm713, %v2243
        %2256 = vst.msk [vmem:[#allocation4 + $0x40] sm:$0xff] %vm713, %v2244
        %2257 = vst.msk [vmem:[#allocation4 + $0x48] sm:$0xff] %vm713, %v2245
        %2258 = vst.msk [vmem:[#allocation4 + $0x50] sm:$0xff] %vm713, %v2246
        %2259 = vst.msk [vmem:[#allocation4 + $0x58] sm:$0xff] %vm713, %v2247
        %v2260 = vld [vmem:[#allocation4] sm:$0xff]
        %v2261 = vld [vmem:[#allocation4 + $0x8] sm:$0xff]
        %v2262 = vld [vmem:[#allocation4 + $0x10] sm:$0xff]
        %v2263 = vld [vmem:[#allocation4 + $0x18] sm:$0xff]
        %v2264 = vld [vmem:[#allocation4 + $0x20] sm:$0xff]
        %v2265 = vld [vmem:[#allocation4 + $0x28] sm:$0xff]
        %v2266 = vld [vmem:[#allocation4 + $0x30] sm:$0xff]
        %v2267 = vld [vmem:[#allocation4 + $0x38] sm:$0xff]
        %v2268 = vld [vmem:[#allocation4 + $0x40] sm:$0xff]
        %v2269 = vld [vmem:[#allocation4 + $0x48] sm:$0xff]
        %v2270 = vld [vmem:[#allocation4 + $0x50] sm:$0xff]
        %v2271 = vld [vmem:[#allocation4 + $0x58] sm:$0xff]
        %v2272 = vxor.u32 %v2260, 2147483648
        %v2273 = vxor.u32 %v2261, 2147483648
        %v2274 = vxor.u32 %v2262, 2147483648
        %v2275 = vxor.u32 %v2263, 2147483648
        %v2276 = vxor.u32 %v2264, 2147483648
        %v2277 = vxor.u32 %v2265, 2147483648
        %v2278 = vxor.u32 %v2266, 2147483648
        %v2279 = vxor.u32 %v2267, 2147483648
        %v2280 = vxor.u32 %v2268, 2147483648
        %v2281 = vxor.u32 %v2269, 2147483648
        %v2282 = vxor.u32 %v2270, 2147483648
        %v2283 = vxor.u32 %v2271, 2147483648
        %v2284 = vmul.f32 %v2272, 1.442695
        %v2285 = vpow.pop %v2284
        %v2286 = vmul.f32 %v2273, 1.442695
        %v2287 = vpow.pop %v2286
        %v2288 = vmul.f32 %v2274, 1.442695
        %v2289 = vpow.pop %v2288
        %v2290 = vmul.f32 %v2275, 1.442695
        %v2291 = vpow.pop %v2290
        %v2292 = vmul.f32 %v2276, 1.442695
        %v2293 = vpow.pop %v2292
        %v2294 = vmul.f32 %v2277, 1.442695
        %v2295 = vpow.pop %v2294
        %v2296 = vmul.f32 %v2278, 1.442695
        %v2297 = vpow.pop %v2296
        %v2298 = vmul.f32 %v2279, 1.442695
        %v2299 = vpow.pop %v2298
        %v2300 = vmul.f32 %v2280, 1.442695
        %v2301 = vpow.pop %v2300
        %v2302 = vmul.f32 %v2281, 1.442695
        %v2303 = vpow.pop %v2302
        %v2304 = vmul.f32 %v2282, 1.442695
        %v2305 = vpow.pop %v2304
        %v2306 = vmul.f32 %v2283, 1.442695
        %v2307 = vpow.pop %v2306
        %v2308 = vadd.f32 %v2285, 1.0
        %v2309 = vadd.f32 %v2287, 1.0
        %v2310 = vadd.f32 %v2289, 1.0
        %v2311 = vadd.f32 %v2291, 1.0
        %v2312 = vadd.f32 %v2293, 1.0
        %v2313 = vadd.f32 %v2295, 1.0
        %v2314 = vadd.f32 %v2297, 1.0
        %v2315 = vadd.f32 %v2299, 1.0
        %v2316 = vadd.f32 %v2301, 1.0
        %v2317 = vadd.f32 %v2303, 1.0
        %v2318 = vadd.f32 %v2305, 1.0
        %v2319 = vadd.f32 %v2307, 1.0
        %v2320 = vrcp.pop %v2308
        %v2321 = vmul.f32 1.0, %v2320
        %v2322 = vrcp.pop %v2309
        %v2323 = vmul.f32 1.0, %v2322
        %v2324 = vrcp.pop %v2310
        %v2325 = vmul.f32 1.0, %v2324
        %v2326 = vrcp.pop %v2311
        %v2327 = vmul.f32 1.0, %v2326
        %v2328 = vrcp.pop %v2312
        %v2329 = vmul.f32 1.0, %v2328
        %v2330 = vrcp.pop %v2313
        %v2331 = vmul.f32 1.0, %v2330
        %v2332 = vrcp.pop %v2314
        %v2333 = vmul.f32 1.0, %v2332
        %v2334 = vrcp.pop %v2315
        %v2335 = vmul.f32 1.0, %v2334
        %v2336 = vrcp.pop %v2316
        %v2337 = vmul.f32 1.0, %v2336
        %v2338 = vrcp.pop %v2317
        %v2339 = vmul.f32 1.0, %v2338
        %v2340 = vrcp.pop %v2318
        %v2341 = vmul.f32 1.0, %v2340
        %v2342 = vrcp.pop %v2319
        %v2343 = vmul.f32 1.0, %v2342
        %v2344 = vmul.f32 %v2260, %v2321
        %v2345 = vmul.f32 %v2261, %v2323
        %v2346 = vmul.f32 %v2262, %v2325
        %v2347 = vmul.f32 %v2263, %v2327
        %v2348 = vmul.f32 %v2264, %v2329
        %v2349 = vmul.f32 %v2265, %v2331
        %v2350 = vmul.f32 %v2266, %v2333
        %v2351 = vmul.f32 %v2267, %v2335
        %v2352 = vmul.f32 %v2268, %v2337
        %v2353 = vmul.f32 %v2269, %v2339
        %v2354 = vmul.f32 %v2270, %v2341
        %v2355 = vmul.f32 %v2271, %v2343
        %s2356 = ssub.s32 %s241, 1
        %v2357 = vstv %s2356
        %v2358 = vadd.s32 %v2357, 1
        %v2359 = vadd.s32 %v2357, 2
        %v2360 = vadd.s32 %v2357, 3
        %v2361 = vadd.s32 %v2357, 4
        %v2362 = vadd.s32 %v2357, 5
        %vm2363 = vcmp.ge.s32.totalorder %v2357, 0
        %vm2364 = vcmp.ge.s32.totalorder %v2358, 0
        %vm2365 = vcmp.ge.s32.totalorder %v2359, 0
        %vm2366 = vcmp.ge.s32.totalorder %v2360, 0
        %vm2367 = vcmp.ge.s32.totalorder %v2361, 0
        %vm2368 = vcmp.ge.s32.totalorder %v2362, 0
        %vm2369 = vcmp.lt.s32.totalorder %v2357, 16
        %vm2370 = vcmp.lt.s32.totalorder %v2358, 16
        %vm2371 = vcmp.lt.s32.totalorder %v2359, 16
        %vm2372 = vcmp.lt.s32.totalorder %v2360, 16
        %vm2373 = vcmp.lt.s32.totalorder %v2361, 16
        %vm2374 = vcmp.lt.s32.totalorder %v2362, 16
        %vm2375 = vmand %vm2363, %vm2369
        %vm2376 = vmand %vm2364, %vm2370
        %vm2377 = vmand %vm2365, %vm2371
        %vm2378 = vmand %vm2366, %vm2372
        %vm2379 = vmand %vm2367, %vm2373
        %vm2380 = vmand %vm2368, %vm2374
        %v2381 = vsel %vm2375, %v2344, 0.0
        %v2382 = vsel %vm2375, %v2345, 0.0
        %v2383 = vsel %vm2376, %v2346, 0.0
        %v2384 = vsel %vm2376, %v2347, 0.0
        %v2385 = vsel %vm2377, %v2348, 0.0
        %v2386 = vsel %vm2377, %v2349, 0.0
        %v2387 = vsel %vm2378, %v2350, 0.0
        %v2388 = vsel %vm2378, %v2351, 0.0
        %v2389 = vsel %vm2379, %v2352, 0.0
        %v2390 = vsel %vm2379, %v2353, 0.0
        %v2391 = vsel %vm2380, %v2354, 0.0
        %v2392 = vsel %vm2380, %v2355, 0.0
        %v2393 = vpack.c.bf16 %v2382, %v2381
        %v2394 = vpack.c.bf16 %v2384, %v2383
        %v2395 = vpack.c.bf16 %v2386, %v2385
        %v2396 = vpack.c.bf16 %v2388, %v2387
        %v2397 = vpack.c.bf16 %v2390, %v2389
        %v2398 = vpack.c.bf16 %v2392, %v2391
        %v2400 = vshrl.u32 %v2393, 16
        %v2402 = vrot.slane %v2400, 7
        %v2404 = vshrl.u32 %v2394, 16
        %v2406 = vrot.slane %v2404, 7
        %v2408 = vshrl.u32 %v2395, 16
        %v2410 = vrot.slane %v2408, 7
        %v2412 = vshrl.u32 %v2396, 16
        %v2414 = vrot.slane %v2412, 7
        %v2416 = vshrl.u32 %v2397, 16
        %v2418 = vrot.slane %v2416, 7
        %v2420 = vshrl.u32 %v2398, 16
        %v2422 = vrot.slane %v2420, 7
        %v2429 = vshll.u32 %v2393, 16
        %v2431 = vor.u32 %v2402, %v2429
        %v2432 = vshll.u32 %v2394, 16
        %v2434 = vor.u32 %v2406, %v2432
        %v2435 = vshll.u32 %v2395, 16
        %v2437 = vor.u32 %v2410, %v2435
        %v2438 = vshll.u32 %v2396, 16
        %v2440 = vor.u32 %v2414, %v2438
        %v2441 = vshll.u32 %v2397, 16
        %v2443 = vor.u32 %v2418, %v2441
        %v2444 = vshll.u32 %v2398, 16
        %v2446 = vor.u32 %v2422, %v2444
        %v2453 = vsel %vm420, %v2402, %v2431
        %v2454 = vsel %vm420, %v2406, %v2434
        %v2455 = vsel %vm420, %v2410, %v2437
        %v2456 = vsel %vm420, %v2414, %v2440
        %v2457 = vsel %vm420, %v2418, %v2443
        %v2458 = vsel %vm420, %v2422, %v2446
        %v2459 = vsel %vm436, %v2453, 0
        %v2460 = vsel %vm436, %v2454, 0
        %v2461 = vsel %vm436, %v2455, 0
        %v2462 = vsel %vm436, %v2456, 0
        %v2463 = vsel %vm436, %v2457, 0
        %v2464 = vsel %vm436, %v2458, 0
        %v2471 = vunpack.c.l.b16 %v2459
        %v2472 = vunpack.c.h.b16 %v2459
        %v2473 = vunpack.c.l.b16 %v2460
        %v2474 = vunpack.c.h.b16 %v2460
        %v2475 = vunpack.c.l.b16 %v2461
        %v2476 = vunpack.c.h.b16 %v2461
        %v2477 = vunpack.c.l.b16 %v2462
        %v2478 = vunpack.c.h.b16 %v2462
        %v2479 = vunpack.c.l.b16 %v2463
        %v2480 = vunpack.c.h.b16 %v2463
        %v2481 = vunpack.c.l.b16 %v2464
        %v2482 = vunpack.c.h.b16 %v2464
        %v2483 = vpack.c.b16 %v2471, %v2471
        %v2484 = vpack.c.b16 %v2472, %v2472
        %v2485 = vpack.c.b16 %v2473, %v2473
        %v2486 = vpack.c.b16 %v2474, %v2474
        %v2487 = vpack.c.b16 %v2475, %v2475
        %v2488 = vpack.c.b16 %v2476, %v2476
        %v2489 = vpack.c.b16 %v2477, %v2477
        %v2490 = vpack.c.b16 %v2478, %v2478
        %v2491 = vpack.c.b16 %v2479, %v2479
        %v2492 = vpack.c.b16 %v2480, %v2480
        %v2493 = vpack.c.b16 %v2481, %v2481
        %v2494 = vpack.c.b16 %v2482, %v2482
        %vm2507 = vcmask 519168
        %2508 = vst.msk [vmem:[#allocation3] sm:$0xf] %vm2507, %v2483
        %2509 = vst.msk [vmem:[#allocation3 + $0x8] sm:$0xf] %vm2507, %v2484
        %2510 = vst.msk [vmem:[#allocation3 + $0x10] sm:$0xf] %vm2507, %v2485
        %2511 = vst.msk [vmem:[#allocation3 + $0x18] sm:$0xf] %vm2507, %v2486
        %2512 = vst.msk [vmem:[#allocation3 + $0x20] sm:$0xf] %vm2507, %v2487
        %2513 = vst.msk [vmem:[#allocation3 + $0x28] sm:$0xf] %vm2507, %v2488
        %2514 = vst.msk [vmem:[#allocation3 + $0x30] sm:$0xf] %vm2507, %v2489
        %2515 = vst.msk [vmem:[#allocation3 + $0x38] sm:$0xf] %vm2507, %v2490
        %2516 = vst.msk [vmem:[#allocation3 + $0x40] sm:$0xf] %vm2507, %v2491
        %2517 = vst.msk [vmem:[#allocation3 + $0x48] sm:$0xf] %vm2507, %v2492
        %2518 = vst.msk [vmem:[#allocation3 + $0x50] sm:$0xf] %vm2507, %v2493
        %2519 = vst.msk [vmem:[#allocation3 + $0x58] sm:$0xf] %vm2507, %v2494
        %v2526 = vunpack.c.l.b16 %v2393
        %v2527 = vunpack.c.h.b16 %v2393
        %v2528 = vunpack.c.l.b16 %v2394
        %v2529 = vunpack.c.h.b16 %v2394
        %v2530 = vunpack.c.l.b16 %v2395
        %v2531 = vunpack.c.h.b16 %v2395
        %v2532 = vunpack.c.l.b16 %v2396
        %v2533 = vunpack.c.h.b16 %v2396
        %v2534 = vunpack.c.l.b16 %v2397
        %v2535 = vunpack.c.h.b16 %v2397
        %v2536 = vunpack.c.l.b16 %v2398
        %v2537 = vunpack.c.h.b16 %v2398
        %v2538 = vpack.c.b16 %v2526, %v2526
        %v2539 = vpack.c.b16 %v2527, %v2527
        %v2540 = vpack.c.b16 %v2528, %v2528
        %v2541 = vpack.c.b16 %v2529, %v2529
        %v2542 = vpack.c.b16 %v2530, %v2530
        %v2543 = vpack.c.b16 %v2531, %v2531
        %v2544 = vpack.c.b16 %v2532, %v2532
        %v2545 = vpack.c.b16 %v2533, %v2533
        %v2546 = vpack.c.b16 %v2534, %v2534
        %v2547 = vpack.c.b16 %v2535, %v2535
        %v2548 = vpack.c.b16 %v2536, %v2536
        %v2549 = vpack.c.b16 %v2537, %v2537
        %2550 = vrot.lane.b32.xlu0 %v2538, 64
        %v2551 = vpop.permute.xlu0 %2550
        %2552 = vrot.lane.b32.xlu0 %v2539, 64
        %v2553 = vpop.permute.xlu0 %2552
        %2554 = vrot.lane.b32.xlu0 %v2540, 64
        %v2555 = vpop.permute.xlu0 %2554
        %2556 = vrot.lane.b32.xlu0 %v2541, 64
        %v2557 = vpop.permute.xlu0 %2556
        %2558 = vrot.lane.b32.xlu0 %v2542, 64
        %v2559 = vpop.permute.xlu0 %2558
        %2560 = vrot.lane.b32.xlu0 %v2543, 64
        %v2561 = vpop.permute.xlu0 %2560
        %2562 = vrot.lane.b32.xlu0 %v2544, 64
        %v2563 = vpop.permute.xlu0 %2562
        %2564 = vrot.lane.b32.xlu0 %v2545, 64
        %v2565 = vpop.permute.xlu0 %2564
        %2566 = vrot.lane.b32.xlu0 %v2546, 64
        %v2567 = vpop.permute.xlu0 %2566
        %2568 = vrot.lane.b32.xlu0 %v2547, 64
        %v2569 = vpop.permute.xlu0 %2568
        %2570 = vrot.lane.b32.xlu0 %v2548, 64
        %v2571 = vpop.permute.xlu0 %2570
        %2572 = vrot.lane.b32.xlu0 %v2549, 64
        %v2573 = vpop.permute.xlu0 %2572
        %vm2586 = vcmask 1043968
        %2587 = vst.msk [vmem:[#allocation3] sm:$0xf] %vm2586, %v2551
        %2588 = vst.msk [vmem:[#allocation3 + $0x8] sm:$0xf] %vm2586, %v2553
        %2589 = vst.msk [vmem:[#allocation3 + $0x10] sm:$0xf] %vm2586, %v2555
        %2590 = vst.msk [vmem:[#allocation3 + $0x18] sm:$0xf] %vm2586, %v2557
        %2591 = vst.msk [vmem:[#allocation3 + $0x20] sm:$0xf] %vm2586, %v2559
        %2592 = vst.msk [vmem:[#allocation3 + $0x28] sm:$0xf] %vm2586, %v2561
        %2593 = vst.msk [vmem:[#allocation3 + $0x30] sm:$0xf] %vm2586, %v2563
        %2594 = vst.msk [vmem:[#allocation3 + $0x38] sm:$0xf] %vm2586, %v2565
        %2595 = vst.msk [vmem:[#allocation3 + $0x40] sm:$0xf] %vm2586, %v2567
        %2596 = vst.msk [vmem:[#allocation3 + $0x48] sm:$0xf] %vm2586, %v2569
        %2597 = vst.msk [vmem:[#allocation3 + $0x50] sm:$0xf] %vm2586, %v2571
        %2598 = vst.msk [vmem:[#allocation3 + $0x58] sm:$0xf] %vm2586, %v2573
        %v2599 = vrot.slane %v2429, 1
        %v2600 = vor.u32 %v2400, %v2599
        %v2601 = vrot.slane %v2432, 1
        %v2602 = vor.u32 %v2404, %v2601
        %v2603 = vrot.slane %v2435, 1
        %v2604 = vor.u32 %v2408, %v2603
        %v2605 = vrot.slane %v2438, 1
        %v2606 = vor.u32 %v2412, %v2605
        %v2607 = vrot.slane %v2441, 1
        %v2608 = vor.u32 %v2416, %v2607
        %v2609 = vrot.slane %v2444, 1
        %v2610 = vor.u32 %v2420, %v2609
        %v2623 = vsel %vm609, %v2600, %v2599
        %v2624 = vsel %vm609, %v2602, %v2601
        %v2625 = vsel %vm609, %v2604, %v2603
        %v2626 = vsel %vm609, %v2606, %v2605
        %v2627 = vsel %vm609, %v2608, %v2607
        %v2628 = vsel %vm609, %v2610, %v2609
        %v2629 = vsel %vm625, %v2623, 0
        %v2630 = vsel %vm625, %v2624, 0
        %v2631 = vsel %vm625, %v2625, 0
        %v2632 = vsel %vm625, %v2626, 0
        %v2633 = vsel %vm625, %v2627, 0
        %v2634 = vsel %vm625, %v2628, 0
        %v2641 = vunpack.c.l.b16 %v2629
        %v2642 = vunpack.c.h.b16 %v2629
        %v2643 = vunpack.c.l.b16 %v2630
        %v2644 = vunpack.c.h.b16 %v2630
        %v2645 = vunpack.c.l.b16 %v2631
        %v2646 = vunpack.c.h.b16 %v2631
        %v2647 = vunpack.c.l.b16 %v2632
        %v2648 = vunpack.c.h.b16 %v2632
        %v2649 = vunpack.c.l.b16 %v2633
        %v2650 = vunpack.c.h.b16 %v2633
        %v2651 = vunpack.c.l.b16 %v2634
        %v2652 = vunpack.c.h.b16 %v2634
        %v2653 = vpack.c.b16 %v2641, %v2641
        %v2654 = vpack.c.b16 %v2642, %v2642
        %v2655 = vpack.c.b16 %v2643, %v2643
        %v2656 = vpack.c.b16 %v2644, %v2644
        %v2657 = vpack.c.b16 %v2645, %v2645
        %v2658 = vpack.c.b16 %v2646, %v2646
        %v2659 = vpack.c.b16 %v2647, %v2647
        %v2660 = vpack.c.b16 %v2648, %v2648
        %v2661 = vpack.c.b16 %v2649, %v2649
        %v2662 = vpack.c.b16 %v2650, %v2650
        %v2663 = vpack.c.b16 %v2651, %v2651
        %v2664 = vpack.c.b16 %v2652, %v2652
        %2677 = vst.msk [vmem:[#allocation3 + $0x4] sm:$0xf] %vm2507, %v2653
        %2678 = vst.msk [vmem:[#allocation3 + $0xc] sm:$0xf] %vm2507, %v2654
        %2679 = vst.msk [vmem:[#allocation3 + $0x14] sm:$0xf] %vm2507, %v2655
        %2680 = vst.msk [vmem:[#allocation3 + $0x1c] sm:$0xf] %vm2507, %v2656
        %2681 = vst.msk [vmem:[#allocation3 + $0x24] sm:$0xf] %vm2507, %v2657
        %2682 = vst.msk [vmem:[#allocation3 + $0x2c] sm:$0xf] %vm2507, %v2658
        %2683 = vst.msk [vmem:[#allocation3 + $0x34] sm:$0xf] %vm2507, %v2659
        %2684 = vst.msk [vmem:[#allocation3 + $0x3c] sm:$0xf] %vm2507, %v2660
        %2685 = vst.msk [vmem:[#allocation3 + $0x44] sm:$0xf] %vm2507, %v2661
        %2686 = vst.msk [vmem:[#allocation3 + $0x4c] sm:$0xf] %vm2507, %v2662
        %2687 = vst.msk [vmem:[#allocation3 + $0x54] sm:$0xf] %vm2507, %v2663
        %2688 = vst.msk [vmem:[#allocation3 + $0x5c] sm:$0xf] %vm2507, %v2664
        %v2689 = vld [vmem:[%s4] sm:$0x1]
        %v2691 = vlaneseq
        %v2692 = vshrl.u32 %v2691, 7
        %v2693 = vsub.s32 0, %v2692
        %v2694 = vrot.slane %v2689, %v2693
        %2696 = vst [vmem:[#allocation5] sm:$0xff] %v2694
        %2697 = vst [vmem:[#allocation5 + $0x8] sm:$0xff] %v2694
        %2698 = vst [vmem:[#allocation5 + $0x10] sm:$0xff] %v2694
        %2699 = vst [vmem:[#allocation5 + $0x18] sm:$0xff] %v2694
        %2700 = vst [vmem:[#allocation5 + $0x20] sm:$0xff] %v2694
        %2701 = vst [vmem:[#allocation5 + $0x28] sm:$0xff] %v2694
        %2702 = vst [vmem:[#allocation5 + $0x30] sm:$0xff] %v2694
        %2703 = vst [vmem:[#allocation5 + $0x38] sm:$0xff] %v2694
        %v2704 = vld [vmem:[#allocation3] sm:$0xff]
        %v2705 = vld [vmem:[#allocation3 + $0x8] sm:$0xff]
        %v2706 = vld [vmem:[#allocation3 + $0x10] sm:$0xff]
        %v2707 = vld [vmem:[#allocation3 + $0x18] sm:$0xff]
        %v2708 = vld [vmem:[#allocation3 + $0x20] sm:$0xff]
        %v2709 = vld [vmem:[#allocation3 + $0x28] sm:$0xff]
        %v2710 = vld [vmem:[#allocation3 + $0x30] sm:$0xff]
        %v2711 = vld [vmem:[#allocation3 + $0x38] sm:$0xff]
        %v2712 = vld [vmem:[#allocation5] sm:$0xff]
        %v2713 = vld [vmem:[#allocation5 + $0x8] sm:$0xff]
        %v2714 = vld [vmem:[#allocation5 + $0x10] sm:$0xff]
        %v2715 = vld [vmem:[#allocation5 + $0x18] sm:$0xff]
        %v2716 = vld [vmem:[#allocation5 + $0x20] sm:$0xff]
        %v2717 = vld [vmem:[#allocation5 + $0x28] sm:$0xff]
        %v2718 = vld [vmem:[#allocation5 + $0x30] sm:$0xff]
        %v2719 = vld [vmem:[#allocation5 + $0x38] sm:$0xff]
        %v2720 = vld [vmem:[%s3] sm:$0xf]
        %v2721 = vld [vmem:[%s3 + $0x4] sm:$0xf]
        %v2722 = vld [vmem:[%s3 + $0x8] sm:$0xf]
        %v2723 = vld [vmem:[%s3 + $0xc] sm:$0xf]
        %v2724 = vld [vmem:[%s3 + $0x10] sm:$0xf]
        %v2725 = vld [vmem:[%s3 + $0x14] sm:$0xf]
        %v2726 = vld [vmem:[%s3 + $0x18] sm:$0xf]
        %v2727 = vld [vmem:[%s3 + $0x1c] sm:$0xf]
        %v2728 = vld [vmem:[%s3 + $0x20] sm:$0xf]
        %v2729 = vld [vmem:[%s3 + $0x24] sm:$0xf]
        %v2730 = vld [vmem:[%s3 + $0x28] sm:$0xf]
        %v2731 = vld [vmem:[%s3 + $0x2c] sm:$0xf]
        %v2732 = vld [vmem:[%s3 + $0x30] sm:$0xf]
        %v2733 = vld [vmem:[%s3 + $0x34] sm:$0xf]
        %v2734 = vld [vmem:[%s3 + $0x38] sm:$0xf]
        %v2735 = vld [vmem:[%s3 + $0x3c] sm:$0xf]
        %v2736 = vld [vmem:[%s3 + $0x40] sm:$0xf]
        %v2737 = vld [vmem:[%s3 + $0x44] sm:$0xf]
        %v2738 = vld [vmem:[%s3 + $0x48] sm:$0xf]
        %v2739 = vld [vmem:[%s3 + $0x4c] sm:$0xf]
        %v2740 = vld [vmem:[%s3 + $0x50] sm:$0xf]
        %v2741 = vld [vmem:[%s3 + $0x54] sm:$0xf]
        %v2742 = vld [vmem:[%s3 + $0x58] sm:$0xf]
        %v2743 = vld [vmem:[%s3 + $0x5c] sm:$0xf]
        %v2752 = vunpack.c.l.b16 %v2704
        %v2753 = vunpack.c.h.b16 %v2704
        %v2754 = vunpack.c.l.b16 %v2705
        %v2755 = vunpack.c.h.b16 %v2705
        %v2756 = vunpack.c.l.b16 %v2706
        %v2757 = vunpack.c.h.b16 %v2706
        %v2758 = vunpack.c.l.b16 %v2707
        %v2759 = vunpack.c.h.b16 %v2707
        %v2760 = vunpack.c.l.b16 %v2708
        %v2761 = vunpack.c.h.b16 %v2708
        %v2762 = vunpack.c.l.b16 %v2709
        %v2763 = vunpack.c.h.b16 %v2709
        %v2764 = vunpack.c.l.b16 %v2710
        %v2765 = vunpack.c.h.b16 %v2710
        %v2766 = vunpack.c.l.b16 %v2711
        %v2767 = vunpack.c.h.b16 %v2711
        %v2768 = vpack.c.b16 %v2754, %v2752
        %v2769 = vpack.c.b16 %v2755, %v2753
        %v2770 = vpack.c.b16 %v2758, %v2756
        %v2771 = vpack.c.b16 %v2759, %v2757
        %v2772 = vpack.c.b16 %v2762, %v2760
        %v2773 = vpack.c.b16 %v2763, %v2761
        %v2774 = vpack.c.b16 %v2766, %v2764
        %v2775 = vpack.c.b16 %v2767, %v2765
        %v2804 = vunpack.c.l.b16 %v2720
        %v2805 = vunpack.c.l.b16 %v2721
        %v2806 = vunpack.c.l.b16 %v2722
        %v2807 = vunpack.c.l.b16 %v2723
        %v2808 = vunpack.c.l.b16 %v2724
        %v2809 = vunpack.c.l.b16 %v2725
        %v2810 = vunpack.c.l.b16 %v2726
        %v2811 = vunpack.c.l.b16 %v2727
        %v2812 = vunpack.c.l.b16 %v2728
        %v2813 = vunpack.c.l.b16 %v2729
        %v2814 = vunpack.c.l.b16 %v2730
        %v2815 = vunpack.c.l.b16 %v2731
        %v2816 = vunpack.c.l.b16 %v2732
        %v2817 = vunpack.c.l.b16 %v2733
        %v2818 = vunpack.c.l.b16 %v2734
        %v2819 = vunpack.c.l.b16 %v2735
        %v2820 = vunpack.c.l.b16 %v2736
        %v2821 = vunpack.c.l.b16 %v2737
        %v2822 = vunpack.c.l.b16 %v2738
        %v2823 = vunpack.c.l.b16 %v2739
        %v2824 = vunpack.c.l.b16 %v2740
        %v2825 = vunpack.c.l.b16 %v2741
        %v2826 = vunpack.c.l.b16 %v2742
        %v2827 = vunpack.c.l.b16 %v2743
        %v2828 = vpack.c.b16 %v2805, %v2804
        %v2829 = vpack.c.b16 %v2807, %v2806
        %v2830 = vpack.c.b16 %v2809, %v2808
        %v2831 = vpack.c.b16 %v2811, %v2810
        %v2832 = vpack.c.b16 %v2813, %v2812
        %v2833 = vpack.c.b16 %v2815, %v2814
        %v2834 = vpack.c.b16 %v2817, %v2816
        %v2835 = vpack.c.b16 %v2819, %v2818
        %v2836 = vpack.c.b16 %v2821, %v2820
        %v2837 = vpack.c.b16 %v2823, %v2822
        %v2838 = vpack.c.b16 %v2825, %v2824
        %v2839 = vpack.c.b16 %v2827, %v2826
        %v2853 = vsel %vm713, %v2769, 0
        %v2856 = vsel %vm713, %v2771, 0
        %v2859 = vsel %vm713, %v2773, 0
        %v2862 = vsel %vm713, %v2775, 0
        %2864 = vmatprep.subr.bf16.mxu0 0
        %2865 = vmatpush1.bf16.msra.mxu0 %v2835
        %2866 = vmatprep.subr.bf16.mxu0 0
        %2867 = vmatpush1.bf16.msra.mxu0 %v2834
        %2868 = vmatprep.subr.bf16.mxu0 0
        %2869 = vmatpush1.bf16.msra.mxu0 %v2833
        %2870 = vmatprep.subr.bf16.mxu0 0
        %2871 = vmatpush1.bf16.msra.mxu0 %v2832
        %2872 = vmatprep.subr.bf16.mxu0 0
        %2873 = vmatpush1.bf16.msra.mxu0 %v2831
        %2874 = vmatprep.subr.bf16.mxu0 0
        %2875 = vmatpush1.bf16.msra.mxu0 %v2830
        %2876 = vmatprep.subr.bf16.mxu0 0
        %2877 = vmatpush1.bf16.msra.mxu0 %v2829
        %2878 = vmatprep.subr.bf16.mxu0 0
        %2879 = vmatpush1.bf16.msra.mxu0 %v2828
        %2880 = vmatprep.subr.bf16.mxu0 0
        %2881 = vmatpush2.bf16.msra.mxu0 0
        %2882 = vmatprep.subr.bf16.mxu0 0
        %2883 = vmatpush2.bf16.msra.mxu0 0
        %2884 = vmatprep.subr.bf16.mxu0 0
        %2885 = vmatpush2.bf16.msra.mxu0 0
        %2886 = vmatprep.subr.bf16.mxu0 0
        %2887 = vmatpush2.bf16.msra.mxu0 0
        %2888 = vmatprep.subr.bf16.mxu0 0
        %2889 = vmatpush2.bf16.msra.mxu0 %v2839
        %2890 = vmatprep.subr.bf16.mxu0 0
        %2891 = vmatpush2.bf16.msra.mxu0 %v2838
        %2892 = vmatprep.subr.bf16.mxu0 0
        %2893 = vmatpush2.bf16.msra.mxu0 %v2837
        %2894 = vmatprep.subr.bf16.mxu0 0
        %2895 = vmatpush2.bf16.msra.mxu0 %v2836
        %2896 = vmatprep.mubr.bf16.mxu0 %v2853
        %2897 = vmatmul.mubr.bf16.gmra.mxu0 %v2768
        %v2898 = vpop.f32.mrf.mxu0
        %v2899 = vadd.f32 0.0, %v2898
        %v2900 = vpop.f32.mrf.mxu0
        %v2901 = vpop.f32.mrf.mxu0
        %v2902 = vadd.f32 0.0, %v2901
        %v2903 = vpop.f32.mrf.mxu0
        %2904 = vmatprep.mubr.bf16.mxu0 %v2856
        %2905 = vmatmul.mubr.bf16.gmra.mxu0 %v2770
        %v2906 = vpop.f32.mrf.mxu0
        %v2907 = vadd.f32 0.0, %v2906
        %v2908 = vpop.f32.mrf.mxu0
        %v2909 = vpop.f32.mrf.mxu0
        %v2910 = vadd.f32 0.0, %v2909
        %v2911 = vpop.f32.mrf.mxu0
        %2912 = vmatprep.mubr.bf16.mxu0 %v2859
        %2913 = vmatmul.mubr.bf16.gmra.mxu0 %v2772
        %v2914 = vpop.f32.mrf.mxu0
        %v2915 = vadd.f32 0.0, %v2914
        %v2916 = vpop.f32.mrf.mxu0
        %v2917 = vpop.f32.mrf.mxu0
        %v2918 = vadd.f32 0.0, %v2917
        %v2919 = vpop.f32.mrf.mxu0
        %2920 = vmatprep.mubr.bf16.mxu0 %v2862
        %2921 = vmatmul.mubr.bf16.gmra.mxu0 %v2774
        %v2922 = vpop.f32.mrf.mxu0
        %v2923 = vadd.f32 0.0, %v2922
        %v2924 = vpop.f32.mrf.mxu0
        %v2925 = vpop.f32.mrf.mxu0
        %v2926 = vadd.f32 0.0, %v2925
        %v2927 = vpop.f32.mrf.mxu0
        %2928 = vdwg.mxu0
        %v2929 = vadd.f32 %v2712, %v2899
        %v2930 = vadd.f32 %v2713, %v2902
        %v2931 = vadd.f32 %v2714, %v2907
        %v2932 = vadd.f32 %v2715, %v2910
        %v2933 = vadd.f32 %v2716, %v2915
        %v2934 = vadd.f32 %v2717, %v2918
        %v2935 = vadd.f32 %v2718, %v2923
        %v2936 = vadd.f32 %v2719, %v2926
        %2937 = vst [vmem:[#allocation5] sm:$0xff] %v2929
        %2938 = vst [vmem:[#allocation5 + $0x8] sm:$0xff] %v2930
        %2939 = vst [vmem:[#allocation5 + $0x10] sm:$0xff] %v2931
        %2940 = vst [vmem:[#allocation5 + $0x18] sm:$0xff] %v2932
        %2941 = vst [vmem:[#allocation5 + $0x20] sm:$0xff] %v2933
        %2942 = vst [vmem:[#allocation5 + $0x28] sm:$0xff] %v2934
        %2943 = vst [vmem:[#allocation5 + $0x30] sm:$0xff] %v2935
        %2944 = vst [vmem:[#allocation5 + $0x38] sm:$0xff] %v2936
        %s2945 = scalar_lea.vmem [#allocation3], 16
        %v2946 = vld [vmem:[%s2945] sm:$0xff]
        %v2947 = vld [vmem:[%s2945 + $0x8] sm:$0xff]
        %v2948 = vld [vmem:[%s2945 + $0x10] sm:$0xff]
        %v2949 = vld [vmem:[%s2945 + $0x18] sm:$0xff]
        %v2950 = vld [vmem:[%s2945 + $0x20] sm:$0xff]
        %v2951 = vld [vmem:[%s2945 + $0x28] sm:$0xff]
        %v2952 = vld [vmem:[%s2945 + $0x30] sm:$0xff]
        %v2953 = vld [vmem:[%s2945 + $0x38] sm:$0xff]
        %v2954 = vld [vmem:[#allocation5] sm:$0xff]
        %v2955 = vld [vmem:[#allocation5 + $0x8] sm:$0xff]
        %v2956 = vld [vmem:[#allocation5 + $0x10] sm:$0xff]
        %v2957 = vld [vmem:[#allocation5 + $0x18] sm:$0xff]
        %v2958 = vld [vmem:[#allocation5 + $0x20] sm:$0xff]
        %v2959 = vld [vmem:[#allocation5 + $0x28] sm:$0xff]
        %v2960 = vld [vmem:[#allocation5 + $0x30] sm:$0xff]
        %v2961 = vld [vmem:[#allocation5 + $0x38] sm:$0xff]
        %s2962 = scalar_lea.vmem %s3, 96
        %v2963 = vld [vmem:[%s2962] sm:$0xf]
        %v2964 = vld [vmem:[%s2962 + $0x4] sm:$0xf]
        %v2965 = vld [vmem:[%s2962 + $0x8] sm:$0xf]
        %v2966 = vld [vmem:[%s2962 + $0xc] sm:$0xf]
        %v2967 = vld [vmem:[%s2962 + $0x10] sm:$0xf]
        %v2968 = vld [vmem:[%s2962 + $0x14] sm:$0xf]
        %v2969 = vld [vmem:[%s2962 + $0x18] sm:$0xf]
        %v2970 = vld [vmem:[%s2962 + $0x1c] sm:$0xf]
        %v2971 = vld [vmem:[%s2962 + $0x20] sm:$0xf]
        %v2972 = vld [vmem:[%s2962 + $0x24] sm:$0xf]
        %v2973 = vld [vmem:[%s2962 + $0x28] sm:$0xf]
        %v2974 = vld [vmem:[%s2962 + $0x2c] sm:$0xf]
        %v2975 = vld [vmem:[%s2962 + $0x30] sm:$0xf]
        %v2976 = vld [vmem:[%s2962 + $0x34] sm:$0xf]
        %v2977 = vld [vmem:[%s2962 + $0x38] sm:$0xf]
        %v2978 = vld [vmem:[%s2962 + $0x3c] sm:$0xf]
        %v2979 = vld [vmem:[%s2962 + $0x40] sm:$0xf]
        %v2980 = vld [vmem:[%s2962 + $0x44] sm:$0xf]
        %v2981 = vld [vmem:[%s2962 + $0x48] sm:$0xf]
        %v2982 = vld [vmem:[%s2962 + $0x4c] sm:$0xf]
        %v2983 = vld [vmem:[%s2962 + $0x50] sm:$0xf]
        %v2984 = vld [vmem:[%s2962 + $0x54] sm:$0xf]
        %v2985 = vld [vmem:[%s2962 + $0x58] sm:$0xf]
        %v2986 = vld [vmem:[%s2962 + $0x5c] sm:$0xf]
        %v2995 = vunpack.c.l.b16 %v2946
        %v2996 = vunpack.c.h.b16 %v2946
        %v2997 = vunpack.c.l.b16 %v2947
        %v2998 = vunpack.c.h.b16 %v2947
        %v2999 = vunpack.c.l.b16 %v2948
        %v3000 = vunpack.c.h.b16 %v2948
        %v3001 = vunpack.c.l.b16 %v2949
        %v3002 = vunpack.c.h.b16 %v2949
        %v3003 = vunpack.c.l.b16 %v2950
        %v3004 = vunpack.c.h.b16 %v2950
        %v3005 = vunpack.c.l.b16 %v2951
        %v3006 = vunpack.c.h.b16 %v2951
        %v3007 = vunpack.c.l.b16 %v2952
        %v3008 = vunpack.c.h.b16 %v2952
        %v3009 = vunpack.c.l.b16 %v2953
        %v3010 = vunpack.c.h.b16 %v2953
        %v3011 = vpack.c.b16 %v2997, %v2995
        %v3012 = vpack.c.b16 %v2998, %v2996
        %v3013 = vpack.c.b16 %v3001, %v2999
        %v3014 = vpack.c.b16 %v3002, %v3000
        %v3015 = vpack.c.b16 %v3005, %v3003
        %v3016 = vpack.c.b16 %v3006, %v3004
        %v3017 = vpack.c.b16 %v3009, %v3007
        %v3018 = vpack.c.b16 %v3010, %v3008
        %v3047 = vunpack.c.l.b16 %v2963
        %v3048 = vunpack.c.l.b16 %v2964
        %v3049 = vunpack.c.l.b16 %v2965
        %v3050 = vunpack.c.l.b16 %v2966
        %v3051 = vunpack.c.l.b16 %v2967
        %v3052 = vunpack.c.l.b16 %v2968
        %v3053 = vunpack.c.l.b16 %v2969
        %v3054 = vunpack.c.l.b16 %v2970
        %v3055 = vunpack.c.l.b16 %v2971
        %v3056 = vunpack.c.l.b16 %v2972
        %v3057 = vunpack.c.l.b16 %v2973
        %v3058 = vunpack.c.l.b16 %v2974
        %v3059 = vunpack.c.l.b16 %v2975
        %v3060 = vunpack.c.l.b16 %v2976
        %v3061 = vunpack.c.l.b16 %v2977
        %v3062 = vunpack.c.l.b16 %v2978
        %v3063 = vunpack.c.l.b16 %v2979
        %v3064 = vunpack.c.l.b16 %v2980
        %v3065 = vunpack.c.l.b16 %v2981
        %v3066 = vunpack.c.l.b16 %v2982
        %v3067 = vunpack.c.l.b16 %v2983
        %v3068 = vunpack.c.l.b16 %v2984
        %v3069 = vunpack.c.l.b16 %v2985
        %v3070 = vunpack.c.l.b16 %v2986
        %v3071 = vpack.c.b16 %v3048, %v3047
        %v3072 = vpack.c.b16 %v3050, %v3049
        %v3073 = vpack.c.b16 %v3052, %v3051
        %v3074 = vpack.c.b16 %v3054, %v3053
        %v3075 = vpack.c.b16 %v3056, %v3055
        %v3076 = vpack.c.b16 %v3058, %v3057
        %v3077 = vpack.c.b16 %v3060, %v3059
        %v3078 = vpack.c.b16 %v3062, %v3061
        %v3079 = vpack.c.b16 %v3064, %v3063
        %v3080 = vpack.c.b16 %v3066, %v3065
        %v3081 = vpack.c.b16 %v3068, %v3067
        %v3082 = vpack.c.b16 %v3070, %v3069
        %v3096 = vsel %vm713, %v3012, 0
        %v3099 = vsel %vm713, %v3014, 0
        %v3102 = vsel %vm713, %v3016, 0
        %v3105 = vsel %vm713, %v3018, 0
        %3107 = vmatprep.subr.bf16.mxu0 0
        %3108 = vmatpush1.bf16.msra.mxu0 %v3078
        %3109 = vmatprep.subr.bf16.mxu0 0
        %3110 = vmatpush1.bf16.msra.mxu0 %v3077
        %3111 = vmatprep.subr.bf16.mxu0 0
        %3112 = vmatpush1.bf16.msra.mxu0 %v3076
        %3113 = vmatprep.subr.bf16.mxu0 0
        %3114 = vmatpush1.bf16.msra.mxu0 %v3075
        %3115 = vmatprep.subr.bf16.mxu0 0
        %3116 = vmatpush1.bf16.msra.mxu0 %v3074
        %3117 = vmatprep.subr.bf16.mxu0 0
        %3118 = vmatpush1.bf16.msra.mxu0 %v3073
        %3119 = vmatprep.subr.bf16.mxu0 0
        %3120 = vmatpush1.bf16.msra.mxu0 %v3072
        %3121 = vmatprep.subr.bf16.mxu0 0
        %3122 = vmatpush1.bf16.msra.mxu0 %v3071
        %3123 = vmatprep.subr.bf16.mxu0 0
        %3124 = vmatpush2.bf16.msra.mxu0 0
        %3125 = vmatprep.subr.bf16.mxu0 0
        %3126 = vmatpush2.bf16.msra.mxu0 0
        %3127 = vmatprep.subr.bf16.mxu0 0
        %3128 = vmatpush2.bf16.msra.mxu0 0
        %3129 = vmatprep.subr.bf16.mxu0 0
        %3130 = vmatpush2.bf16.msra.mxu0 0
        %3131 = vmatprep.subr.bf16.mxu0 0
        %3132 = vmatpush2.bf16.msra.mxu0 %v3082
        %3133 = vmatprep.subr.bf16.mxu0 0
        %3134 = vmatpush2.bf16.msra.mxu0 %v3081
        %3135 = vmatprep.subr.bf16.mxu0 0
        %3136 = vmatpush2.bf16.msra.mxu0 %v3080
        %3137 = vmatprep.subr.bf16.mxu0 0
        %3138 = vmatpush2.bf16.msra.mxu0 %v3079
        %3139 = vmatprep.mubr.bf16.mxu0 %v3096
        %3140 = vmatmul.mubr.bf16.gmra.mxu0 %v3011
        %v3141 = vpop.f32.mrf.mxu0
        %v3142 = vadd.f32 0.0, %v3141
        %v3143 = vpop.f32.mrf.mxu0
        %v3144 = vpop.f32.mrf.mxu0
        %v3145 = vadd.f32 0.0, %v3144
        %v3146 = vpop.f32.mrf.mxu0
        %3147 = vmatprep.mubr.bf16.mxu0 %v3099
        %3148 = vmatmul.mubr.bf16.gmra.mxu0 %v3013
        %v3149 = vpop.f32.mrf.mxu0
        %v3150 = vadd.f32 0.0, %v3149
        %v3151 = vpop.f32.mrf.mxu0
        %v3152 = vpop.f32.mrf.mxu0
        %v3153 = vadd.f32 0.0, %v3152
        %v3154 = vpop.f32.mrf.mxu0
        %3155 = vmatprep.mubr.bf16.mxu0 %v3102
        %3156 = vmatmul.mubr.bf16.gmra.mxu0 %v3015
        %v3157 = vpop.f32.mrf.mxu0
        %v3158 = vadd.f32 0.0, %v3157
        %v3159 = vpop.f32.mrf.mxu0
        %v3160 = vpop.f32.mrf.mxu0
        %v3161 = vadd.f32 0.0, %v3160
        %v3162 = vpop.f32.mrf.mxu0
        %3163 = vmatprep.mubr.bf16.mxu0 %v3105
        %3164 = vmatmul.mubr.bf16.gmra.mxu0 %v3017
        %v3165 = vpop.f32.mrf.mxu0
        %v3166 = vadd.f32 0.0, %v3165
        %v3167 = vpop.f32.mrf.mxu0
        %v3168 = vpop.f32.mrf.mxu0
        %v3169 = vadd.f32 0.0, %v3168
        %v3170 = vpop.f32.mrf.mxu0
        %3171 = vdwg.mxu0
        %v3172 = vadd.f32 %v2954, %v3142
        %v3173 = vadd.f32 %v2955, %v3145
        %v3174 = vadd.f32 %v2956, %v3150
        %v3175 = vadd.f32 %v2957, %v3153
        %v3176 = vadd.f32 %v2958, %v3158
        %v3177 = vadd.f32 %v2959, %v3161
        %v3178 = vadd.f32 %v2960, %v3166
        %v3179 = vadd.f32 %v2961, %v3169
        %3180 = vst [vmem:[#allocation5] sm:$0xff] %v3172
        %3181 = vst [vmem:[#allocation5 + $0x8] sm:$0xff] %v3173
        %3182 = vst [vmem:[#allocation5 + $0x10] sm:$0xff] %v3174
        %3183 = vst [vmem:[#allocation5 + $0x18] sm:$0xff] %v3175
        %3184 = vst [vmem:[#allocation5 + $0x20] sm:$0xff] %v3176
        %3185 = vst [vmem:[#allocation5 + $0x28] sm:$0xff] %v3177
        %3186 = vst [vmem:[#allocation5 + $0x30] sm:$0xff] %v3178
        %3187 = vst [vmem:[#allocation5 + $0x38] sm:$0xff] %v3179
        %s3188 = scalar_lea.vmem [#allocation3], 32
        %v3189 = vld [vmem:[%s3188] sm:$0xff]
        %v3190 = vld [vmem:[%s3188 + $0x8] sm:$0xff]
        %v3191 = vld [vmem:[%s3188 + $0x10] sm:$0xff]
        %v3192 = vld [vmem:[%s3188 + $0x18] sm:$0xff]
        %v3193 = vld [vmem:[%s3188 + $0x20] sm:$0xff]
        %v3194 = vld [vmem:[%s3188 + $0x28] sm:$0xff]
        %v3195 = vld [vmem:[%s3188 + $0x30] sm:$0xff]
        %v3196 = vld [vmem:[%s3188 + $0x38] sm:$0xff]
        %v3197 = vld [vmem:[#allocation5] sm:$0xff]
        %v3198 = vld [vmem:[#allocation5 + $0x8] sm:$0xff]
        %v3199 = vld [vmem:[#allocation5 + $0x10] sm:$0xff]
        %v3200 = vld [vmem:[#allocation5 + $0x18] sm:$0xff]
        %v3201 = vld [vmem:[#allocation5 + $0x20] sm:$0xff]
        %v3202 = vld [vmem:[#allocation5 + $0x28] sm:$0xff]
        %v3203 = vld [vmem:[#allocation5 + $0x30] sm:$0xff]
        %v3204 = vld [vmem:[#allocation5 + $0x38] sm:$0xff]
        %s3205 = scalar_lea.vmem %s3, 192
        %v3206 = vld [vmem:[%s3205] sm:$0xf]
        %v3207 = vld [vmem:[%s3205 + $0x4] sm:$0xf]
        %v3208 = vld [vmem:[%s3205 + $0x8] sm:$0xf]
        %v3209 = vld [vmem:[%s3205 + $0xc] sm:$0xf]
        %v3210 = vld [vmem:[%s3205 + $0x10] sm:$0xf]
        %v3211 = vld [vmem:[%s3205 + $0x14] sm:$0xf]
        %v3212 = vld [vmem:[%s3205 + $0x18] sm:$0xf]
        %v3213 = vld [vmem:[%s3205 + $0x1c] sm:$0xf]
        %v3214 = vld [vmem:[%s3205 + $0x20] sm:$0xf]
        %v3215 = vld [vmem:[%s3205 + $0x24] sm:$0xf]
        %v3216 = vld [vmem:[%s3205 + $0x28] sm:$0xf]
        %v3217 = vld [vmem:[%s3205 + $0x2c] sm:$0xf]
        %v3218 = vld [vmem:[%s3205 + $0x30] sm:$0xf]
        %v3219 = vld [vmem:[%s3205 + $0x34] sm:$0xf]
        %v3220 = vld [vmem:[%s3205 + $0x38] sm:$0xf]
        %v3221 = vld [vmem:[%s3205 + $0x3c] sm:$0xf]
        %v3222 = vld [vmem:[%s3205 + $0x40] sm:$0xf]
        %v3223 = vld [vmem:[%s3205 + $0x44] sm:$0xf]
        %v3224 = vld [vmem:[%s3205 + $0x48] sm:$0xf]
        %v3225 = vld [vmem:[%s3205 + $0x4c] sm:$0xf]
        %v3226 = vld [vmem:[%s3205 + $0x50] sm:$0xf]
        %v3227 = vld [vmem:[%s3205 + $0x54] sm:$0xf]
        %v3228 = vld [vmem:[%s3205 + $0x58] sm:$0xf]
        %v3229 = vld [vmem:[%s3205 + $0x5c] sm:$0xf]
        %v3238 = vunpack.c.l.b16 %v3189
        %v3239 = vunpack.c.h.b16 %v3189
        %v3240 = vunpack.c.l.b16 %v3190
        %v3241 = vunpack.c.h.b16 %v3190
        %v3242 = vunpack.c.l.b16 %v3191
        %v3243 = vunpack.c.h.b16 %v3191
        %v3244 = vunpack.c.l.b16 %v3192
        %v3245 = vunpack.c.h.b16 %v3192
        %v3246 = vunpack.c.l.b16 %v3193
        %v3247 = vunpack.c.h.b16 %v3193
        %v3248 = vunpack.c.l.b16 %v3194
        %v3249 = vunpack.c.h.b16 %v3194
        %v3250 = vunpack.c.l.b16 %v3195
        %v3251 = vunpack.c.h.b16 %v3195
        %v3252 = vunpack.c.l.b16 %v3196
        %v3253 = vunpack.c.h.b16 %v3196
        %v3254 = vpack.c.b16 %v3240, %v3238
        %v3255 = vpack.c.b16 %v3241, %v3239
        %v3256 = vpack.c.b16 %v3244, %v3242
        %v3257 = vpack.c.b16 %v3245, %v3243
        %v3258 = vpack.c.b16 %v3248, %v3246
        %v3259 = vpack.c.b16 %v3249, %v3247
        %v3260 = vpack.c.b16 %v3252, %v3250
        %v3261 = vpack.c.b16 %v3253, %v3251
        %v3290 = vunpack.c.l.b16 %v3206
        %v3291 = vunpack.c.l.b16 %v3207
        %v3292 = vunpack.c.l.b16 %v3208
        %v3293 = vunpack.c.l.b16 %v3209
        %v3294 = vunpack.c.l.b16 %v3210
        %v3295 = vunpack.c.l.b16 %v3211
        %v3296 = vunpack.c.l.b16 %v3212
        %v3297 = vunpack.c.l.b16 %v3213
        %v3298 = vunpack.c.l.b16 %v3214
        %v3299 = vunpack.c.l.b16 %v3215
        %v3300 = vunpack.c.l.b16 %v3216
        %v3301 = vunpack.c.l.b16 %v3217
        %v3302 = vunpack.c.l.b16 %v3218
        %v3303 = vunpack.c.l.b16 %v3219
        %v3304 = vunpack.c.l.b16 %v3220
        %v3305 = vunpack.c.l.b16 %v3221
        %v3306 = vunpack.c.l.b16 %v3222
        %v3307 = vunpack.c.l.b16 %v3223
        %v3308 = vunpack.c.l.b16 %v3224
        %v3309 = vunpack.c.l.b16 %v3225
        %v3310 = vunpack.c.l.b16 %v3226
        %v3311 = vunpack.c.l.b16 %v3227
        %v3312 = vunpack.c.l.b16 %v3228
        %v3313 = vunpack.c.l.b16 %v3229
        %v3314 = vpack.c.b16 %v3291, %v3290
        %v3315 = vpack.c.b16 %v3293, %v3292
        %v3316 = vpack.c.b16 %v3295, %v3294
        %v3317 = vpack.c.b16 %v3297, %v3296
        %v3318 = vpack.c.b16 %v3299, %v3298
        %v3319 = vpack.c.b16 %v3301, %v3300
        %v3320 = vpack.c.b16 %v3303, %v3302
        %v3321 = vpack.c.b16 %v3305, %v3304
        %v3322 = vpack.c.b16 %v3307, %v3306
        %v3323 = vpack.c.b16 %v3309, %v3308
        %v3324 = vpack.c.b16 %v3311, %v3310
        %v3325 = vpack.c.b16 %v3313, %v3312
        %v3339 = vsel %vm713, %v3255, 0
        %v3342 = vsel %vm713, %v3257, 0
        %v3345 = vsel %vm713, %v3259, 0
        %v3348 = vsel %vm713, %v3261, 0
        %3350 = vmatprep.subr.bf16.mxu0 0
        %3351 = vmatpush1.bf16.msra.mxu0 %v3321
        %3352 = vmatprep.subr.bf16.mxu0 0
        %3353 = vmatpush1.bf16.msra.mxu0 %v3320
        %3354 = vmatprep.subr.bf16.mxu0 0
        %3355 = vmatpush1.bf16.msra.mxu0 %v3319
        %3356 = vmatprep.subr.bf16.mxu0 0
        %3357 = vmatpush1.bf16.msra.mxu0 %v3318
        %3358 = vmatprep.subr.bf16.mxu0 0
        %3359 = vmatpush1.bf16.msra.mxu0 %v3317
        %3360 = vmatprep.subr.bf16.mxu0 0
        %3361 = vmatpush1.bf16.msra.mxu0 %v3316
        %3362 = vmatprep.subr.bf16.mxu0 0
        %3363 = vmatpush1.bf16.msra.mxu0 %v3315
        %3364 = vmatprep.subr.bf16.mxu0 0
        %3365 = vmatpush1.bf16.msra.mxu0 %v3314
        %3366 = vmatprep.subr.bf16.mxu0 0
        %3367 = vmatpush2.bf16.msra.mxu0 0
        %3368 = vmatprep.subr.bf16.mxu0 0
        %3369 = vmatpush2.bf16.msra.mxu0 0
        %3370 = vmatprep.subr.bf16.mxu0 0
        %3371 = vmatpush2.bf16.msra.mxu0 0
        %3372 = vmatprep.subr.bf16.mxu0 0
        %3373 = vmatpush2.bf16.msra.mxu0 0
        %3374 = vmatprep.subr.bf16.mxu0 0
        %3375 = vmatpush2.bf16.msra.mxu0 %v3325
        %3376 = vmatprep.subr.bf16.mxu0 0
        %3377 = vmatpush2.bf16.msra.mxu0 %v3324
        %3378 = vmatprep.subr.bf16.mxu0 0
        %3379 = vmatpush2.bf16.msra.mxu0 %v3323
        %3380 = vmatprep.subr.bf16.mxu0 0
        %3381 = vmatpush2.bf16.msra.mxu0 %v3322
        %3382 = vmatprep.mubr.bf16.mxu0 %v3339
        %3383 = vmatmul.mubr.bf16.gmra.mxu0 %v3254
        %v3384 = vpop.f32.mrf.mxu0
        %v3385 = vadd.f32 0.0, %v3384
        %v3386 = vpop.f32.mrf.mxu0
        %v3387 = vpop.f32.mrf.mxu0
        %v3388 = vadd.f32 0.0, %v3387
        %v3389 = vpop.f32.mrf.mxu0
        %3390 = vmatprep.mubr.bf16.mxu0 %v3342
        %3391 = vmatmul.mubr.bf16.gmra.mxu0 %v3256
        %v3392 = vpop.f32.mrf.mxu0
        %v3393 = vadd.f32 0.0, %v3392
        %v3394 = vpop.f32.mrf.mxu0
        %v3395 = vpop.f32.mrf.mxu0
        %v3396 = vadd.f32 0.0, %v3395
        %v3397 = vpop.f32.mrf.mxu0
        %3398 = vmatprep.mubr.bf16.mxu0 %v3345
        %3399 = vmatmul.mubr.bf16.gmra.mxu0 %v3258
        %v3400 = vpop.f32.mrf.mxu0
        %v3401 = vadd.f32 0.0, %v3400
        %v3402 = vpop.f32.mrf.mxu0
        %v3403 = vpop.f32.mrf.mxu0
        %v3404 = vadd.f32 0.0, %v3403
        %v3405 = vpop.f32.mrf.mxu0
        %3406 = vmatprep.mubr.bf16.mxu0 %v3348
        %3407 = vmatmul.mubr.bf16.gmra.mxu0 %v3260
        %v3408 = vpop.f32.mrf.mxu0
        %v3409 = vadd.f32 0.0, %v3408
        %v3410 = vpop.f32.mrf.mxu0
        %v3411 = vpop.f32.mrf.mxu0
        %v3412 = vadd.f32 0.0, %v3411
        %v3413 = vpop.f32.mrf.mxu0
        %3414 = vdwg.mxu0
        %v3415 = vadd.f32 %v3197, %v3385
        %v3416 = vadd.f32 %v3198, %v3388
        %v3417 = vadd.f32 %v3199, %v3393
        %v3418 = vadd.f32 %v3200, %v3396
        %v3419 = vadd.f32 %v3201, %v3401
        %v3420 = vadd.f32 %v3202, %v3404
        %v3421 = vadd.f32 %v3203, %v3409
        %v3422 = vadd.f32 %v3204, %v3412
        %3423 = vst [vmem:[#allocation5] sm:$0xff] %v3415
        %3424 = vst [vmem:[#allocation5 + $0x8] sm:$0xff] %v3416
        %3425 = vst [vmem:[#allocation5 + $0x10] sm:$0xff] %v3417
        %3426 = vst [vmem:[#allocation5 + $0x18] sm:$0xff] %v3418
        %3427 = vst [vmem:[#allocation5 + $0x20] sm:$0xff] %v3419
        %3428 = vst [vmem:[#allocation5 + $0x28] sm:$0xff] %v3420
        %3429 = vst [vmem:[#allocation5 + $0x30] sm:$0xff] %v3421
        %3430 = vst [vmem:[#allocation5 + $0x38] sm:$0xff] %v3422
        %v3431 = vld [vmem:[#allocation5] sm:$0xff]
        %v3432 = vld [vmem:[#allocation5 + $0x8] sm:$0xff]
        %v3433 = vld [vmem:[#allocation5 + $0x10] sm:$0xff]
        %v3434 = vld [vmem:[#allocation5 + $0x18] sm:$0xff]
        %v3435 = vld [vmem:[#allocation5 + $0x20] sm:$0xff]
        %v3436 = vld [vmem:[#allocation5 + $0x28] sm:$0xff]
        %v3437 = vld [vmem:[#allocation5 + $0x30] sm:$0xff]
        %v3438 = vld [vmem:[#allocation5 + $0x38] sm:$0xff]
        %v3439 = vxor.u32 %v3431, 2147483648
        %v3440 = vxor.u32 %v3432, 2147483648
        %v3441 = vxor.u32 %v3433, 2147483648
        %v3442 = vxor.u32 %v3434, 2147483648
        %v3443 = vxor.u32 %v3435, 2147483648
        %v3444 = vxor.u32 %v3436, 2147483648
        %v3445 = vxor.u32 %v3437, 2147483648
        %v3446 = vxor.u32 %v3438, 2147483648
        %v3447 = vmul.f32 %v3439, 1.442695
        %v3448 = vpow.pop %v3447
        %v3449 = vmul.f32 %v3440, 1.442695
        %v3450 = vpow.pop %v3449
        %v3451 = vmul.f32 %v3441, 1.442695
        %v3452 = vpow.pop %v3451
        %v3453 = vmul.f32 %v3442, 1.442695
        %v3454 = vpow.pop %v3453
        %v3455 = vmul.f32 %v3443, 1.442695
        %v3456 = vpow.pop %v3455
        %v3457 = vmul.f32 %v3444, 1.442695
        %v3458 = vpow.pop %v3457
        %v3459 = vmul.f32 %v3445, 1.442695
        %v3460 = vpow.pop %v3459
        %v3461 = vmul.f32 %v3446, 1.442695
        %v3462 = vpow.pop %v3461
        %v3463 = vadd.f32 %v3448, 1.0
        %v3464 = vadd.f32 %v3450, 1.0
        %v3465 = vadd.f32 %v3452, 1.0
        %v3466 = vadd.f32 %v3454, 1.0
        %v3467 = vadd.f32 %v3456, 1.0
        %v3468 = vadd.f32 %v3458, 1.0
        %v3469 = vadd.f32 %v3460, 1.0
        %v3470 = vadd.f32 %v3462, 1.0
        %v3471 = vrcp.pop %v3463
        %v3472 = vmul.f32 1.0, %v3471
        %v3473 = vrcp.pop %v3464
        %v3474 = vmul.f32 1.0, %v3473
        %v3475 = vrcp.pop %v3465
        %v3476 = vmul.f32 1.0, %v3475
        %v3477 = vrcp.pop %v3466
        %v3478 = vmul.f32 1.0, %v3477
        %v3479 = vrcp.pop %v3467
        %v3480 = vmul.f32 1.0, %v3479
        %v3481 = vrcp.pop %v3468
        %v3482 = vmul.f32 1.0, %v3481
        %v3483 = vrcp.pop %v3469
        %v3484 = vmul.f32 1.0, %v3483
        %v3485 = vrcp.pop %v3470
        %v3486 = vmul.f32 1.0, %v3485
        %v3487 = vmul.f32 %v3431, %v3472
        %v3488 = vmul.f32 %v3432, %v3474
        %v3489 = vmul.f32 %v3433, %v3476
        %v3490 = vmul.f32 %v3434, %v3478
        %v3491 = vmul.f32 %v3435, %v3480
        %v3492 = vmul.f32 %v3436, %v3482
        %v3493 = vmul.f32 %v3437, %v3484
        %v3494 = vmul.f32 %v3438, %v3486
        %s3495 = sadd.s32 %s241, 2
        %s3496 = smul.u32 %s3495, 2
        %s3497 = smul.addr %s3496, 4
        %s3498 = scalar_lea.vmem %s236, %s3497
        %v3499 = vld [vmem:[%s3498] sm:$0xf]
        %v3500 = vld [vmem:[%s3498 + $0x4] sm:$0xf]
        %v3501 = vld [vmem:[%s3498 + $0x8] sm:$0xf]
        %v3502 = vld [vmem:[%s3498 + $0xc] sm:$0xf]
        %v3503 = vld [vmem:[%s3498 + $0x10] sm:$0xf]
        %v3504 = vld [vmem:[%s3498 + $0x14] sm:$0xf]
        %v3505 = vld [vmem:[%s3498 + $0x18] sm:$0xf]
        %v3506 = vld [vmem:[%s3498 + $0x1c] sm:$0xf]
        %v3507 = vunpack.c.l.bf16 %v3499
        %v3508 = vunpack.c.l.bf16 %v3500
        %v3509 = vunpack.c.l.bf16 %v3501
        %v3510 = vunpack.c.l.bf16 %v3502
        %v3511 = vunpack.c.l.bf16 %v3503
        %v3512 = vunpack.c.l.bf16 %v3504
        %v3513 = vunpack.c.l.bf16 %v3505
        %v3514 = vunpack.c.l.bf16 %v3506
        %v3515 = vadd.f32 %v3487, %v3507
        %v3516 = vadd.f32 %v3488, %v3508
        %v3517 = vadd.f32 %v3489, %v3509
        %v3518 = vadd.f32 %v3490, %v3510
        %v3519 = vadd.f32 %v3491, %v3511
        %v3520 = vadd.f32 %v3492, %v3512
        %v3521 = vadd.f32 %v3493, %v3513
        %v3522 = vadd.f32 %v3494, %v3514
        %v3523 = vpack.c.bf16 %v3516, %v3515
        %v3524 = vpack.c.bf16 %v3518, %v3517
        %v3525 = vpack.c.bf16 %v3520, %v3519
        %v3526 = vpack.c.bf16 %v3522, %v3521
        %v3531 = vunpack.c.l.b16 %v3523
        %v3532 = vunpack.c.h.b16 %v3523
        %v3533 = vunpack.c.l.b16 %v3524
        %v3534 = vunpack.c.h.b16 %v3524
        %v3535 = vunpack.c.l.b16 %v3525
        %v3536 = vunpack.c.h.b16 %v3525
        %v3537 = vunpack.c.l.b16 %v3526
        %v3538 = vunpack.c.h.b16 %v3526
        %v3539 = vpack.c.b16 %v3531, %v3531
        %v3540 = vpack.c.b16 %v3532, %v3532
        %v3541 = vpack.c.b16 %v3533, %v3533
        %v3542 = vpack.c.b16 %v3534, %v3534
        %v3543 = vpack.c.b16 %v3535, %v3535
        %v3544 = vpack.c.b16 %v3536, %v3536
        %v3545 = vpack.c.b16 %v3537, %v3537
        %v3546 = vpack.c.b16 %v3538, %v3538
        %3555 = vst [vmem:[%s231] sm:$0xf] %v3539
        %3556 = vst [vmem:[%s231 + $0x4] sm:$0xf] %v3540
        %3557 = vst [vmem:[%s231 + $0x8] sm:$0xf] %v3541
        %3558 = vst [vmem:[%s231 + $0xc] sm:$0xf] %v3542
        %3559 = vst [vmem:[%s231 + $0x10] sm:$0xf] %v3543
        %3560 = vst [vmem:[%s231 + $0x14] sm:$0xf] %v3544
        %3561 = vst [vmem:[%s231 + $0x18] sm:$0xf] %v3545
        %3562 = vst [vmem:[%s231 + $0x1c] sm:$0xf] %v3546
        %s3563 = sand.u32 %s151, 1
        %s3564 = scalar_lea.sflag [#allocation7], %s3563
        %s3565 = sand.u32 %s151, 1
        %s3566 = smul.addr %s3565, 32
        %s3567 = scalar_lea.vmem [#allocation6], %s3566
        // Predicated region
        $region41: #{bottleneck_forward.1} parent=39 // pred_check
          %p3568 = pneg %p161
        $region42: #{bottleneck_forward.1} parent=39 // pred_check_branch
          %3570 = sbr.rel (%p3568) target = $region44
        $region43: #{bottleneck_forward.1} parent=39 // pred_region
          %s3571 = smul.u32 4, %s24
          %s3573 = ssub.s32 512, 512
          %3574 = vsyncadd %s3564, %s3573
          %s3575 = smul.addr %s3571, 2
          %s3576 = smul.addr %s23, 32
          %s3577 = sadd.s32 %s3575, %s3576
          %s3578 = smul.addr %s3577, 64
          %s3579 = scalar_lea.hbm %s5, %s3578
          %s3580 = sshll.u32 %s3567, 4
          %s3581 = int_to_ptr.vmem [resolvable:$true] %s3580
          %3586 = dma.vmem_to_hbm [thread:$0]  %s3581, 512, %s3579, %s3564, 64, 64, 4
        $region44: #{bottleneck_forward.1} parent=39 // pred_fallthru
          _
      $region40: #{bottleneck_forward.1} parent=5 // pred_fallthru
        _
      %p3587 = scmp.le.s32.totalorder 2, %s14
      // Predicated region
      $region45: #{bottleneck_forward.1} parent=5 // pred_check
        %p3588 = pneg %p3587
      $region46: #{bottleneck_forward.1} parent=5 // pred_check_branch
        %3590 = sbr.rel (%p3588) target = $region48
      $region47: #{bottleneck_forward.1} parent=5 // pred_region
        %s3591 = ssub.s32 %s14, 2
        // Predicated region
        $region49: #{bottleneck_forward.1} parent=47 // pred_check
          %p3592 = pneg %p167
        $region50: #{bottleneck_forward.1} parent=47 // pred_check_branch
          %3594 = sbr.rel (%p3592) target = $region52
        $region51: #{bottleneck_forward.1} parent=47 // pred_region
          %s3595 = sand.u32 %s152, 1
          %s3596 = scalar_lea.sflag [#allocation7], %s3595
          %s3597 = sand.u32 %s152, 1
          %s3598 = smul.addr %s3597, 32
          %s3599 = scalar_lea.vmem [#allocation6], %s3598
          %3600 = dma.done %s3596, 512
        $region52: #{bottleneck_forward.1} parent=47 // pred_fallthru
          _
      $region48: #{bottleneck_forward.1} parent=5 // pred_fallthru
        _
    $region6: #{bottleneck_forward.1} parent=1 // loop_footer
      %s18 = sadd.s32 1, %s14
    $region7: #{bottleneck_forward.1} parent=1 // loop_footer_branch
      %13 = sbr.rel target = $region3
    $region8: #{bottleneck_forward.1} parent=1 // loop_exit
      _
    %3601 = vsyncpa [#allocation7], 1
    %s3602 = scalar_lea.sflag [#allocation7], 1
    %3603 = vsyncpa %s3602, 1

</llo_original>
